<compile_context>
chip_gen: v5e
topology: v5e:2x2
jax: 0.10.0
libtpu: 0.0.40
codegen_flags: <defaults>
</compile_context>

<pallas_src>
import functools
import math

import jax
import jax.numpy as jnp
from jax.experimental import pallas as pl
from jax.experimental.pallas import tpu as pltpu


def _round_up(x, m):
    return (x + m - 1) // m * m


# ----------------------------------------------------------------------------
# Kernel 1: reoriented conv matmul     out[n, :, ltile] = act(W @ patches + b)
#   patches : (N, CKK, L)   L = OH*OW (lane-dense output dim, padded to 128k)
#   W       : (OC, CKK)     stays VMEM-resident across the grid
# ----------------------------------------------------------------------------
def _conv_mm_kernel(p_ref, w_ref, b_ref, o_ref, *, act):
    acc = jax.lax.dot_general(
        w_ref[...], p_ref[0],
        dimension_numbers=(((1,), (0,)), ((), ())),
        preferred_element_type=jnp.float32)
    acc = acc + b_ref[...]                         # (OC, 1) broadcast over lanes
    if act == "leaky_relu":
        acc = jnp.where(acc >= 0, acc, 0.01 * acc)  # F.leaky_relu default slope
    elif act == "sigmoid":
        acc = jax.nn.sigmoid(acc)
    o_ref[0] = acc.astype(o_ref.dtype)


def conv_matmul(patches, w_mat, b, act, out_dtype, max_tile_l=1024):
    """patches: (N, CKK, L) bf16; w_mat: (OC, CKK) bf16; b: (OC,) f32."""
    N, CKK, L = patches.shape
    OC = w_mat.shape[0]

    # Lane-dense output: pad L to a multiple of 128 (masked vst -> full vst).
    L_pad = _round_up(L, 128)
    if L_pad != L:
        patches = jnp.pad(patches, ((0, 0), (0, 0), (0, L_pad - L)))

    # L-tile (multiple of 128) for pipeline depth / v7x core balance.
    TL = L_pad
    if L_pad > max_tile_l:
        TL = max_tile_l
        while L_pad % TL:
            TL -= 128
    nl = L_pad // TL

    out = pl.pallas_call(
        functools.partial(_conv_mm_kernel, act=act),
        out_shape=jax.ShapeDtypeStruct((N, OC, L_pad), out_dtype),
        grid=(N, nl),
        in_specs=[
            pl.BlockSpec((1, CKK, TL), lambda n, l: (n, 0, l)),
            pl.BlockSpec((OC, CKK), lambda n, l: (0, 0)),   # weight resident
            pl.BlockSpec((OC, 1), lambda n, l: (0, 0)),
        ],
        out_specs=pl.BlockSpec((1, OC, TL), lambda n, l: (n, 0, l)),
        compiler_params=pltpu.CompilerParams(
            dimension_semantics=("parallel", "parallel")),
    )(patches, w_mat, b.reshape(OC, 1).astype(jnp.float32))

    return out[:, :, :L] if L_pad != L else out


# ----------------------------------------------------------------------------
# Forward conv wrapper (im2col glue in XLA, matmul in Pallas).
# conv_general_dilated_patches feature order is (C, KH, KW) row-major, which
# matches PyTorch's weight.view(OC, C*KH*KW).
# ----------------------------------------------------------------------------
def conv2d(x, w, b, stride, padding, dilation, act, out_dtype=jnp.bfloat16):
    # x: (N, IC, H, W);  w: (OC, IC, KH, KW)  [PyTorch Conv2d layout]
    OC, IC, KH, KW = w.shape
    patches = jax.lax.conv_general_dilated_patches(
        x.astype(jnp.bfloat16), filter_shape=(KH, KW),
        window_strides=(stride, stride),
        padding=((padding, padding), (padding, padding)),
        rhs_dilation=(dilation, dilation),
        dimension_numbers=("NCHW", "OIHW", "NCHW"))
    N, CKK, OH, OW = patches.shape
    pm = patches.reshape(N, CKK, OH * OW)
    out = conv_matmul(pm, w.reshape(OC, CKK).astype(jnp.bfloat16), b,
                      act, out_dtype)
    return out.reshape(N, OC, OH, OW)


# ----------------------------------------------------------------------------
# Phase-decomposed ConvTranspose2d (padding must be 0, as in dec2/dec3).
#
#   out[oc, i*s + d*kh, j*s + d*kw] += x[ic, i, j] * W[ic, oc, kh, kw]
#
# For output phase r = (d*kh) % s and tap t = (d*kh) // s, each phase is a
# stride-1 correlation with a tiny (nTh x nTw) kernel on the un-dilated input.
# All s*s phases share one patch tensor; phase kernels are stacked along the
# matmul M dim (s*s*OC rows) and interleaved back afterwards.
# ----------------------------------------------------------------------------
def conv_transpose2d_phase(x, w, b, stride, dilation, output_padding, act,
                           out_dtype=jnp.bfloat16):
    # x: (N, IC, H, W);  w: (IC, OC, KH, KW)  [PyTorch ConvTranspose2d layout]
    N, IC, H, W = x.shape
    _, OC, KH, KW = w.shape
    s, d = stride, dilation
    OH = (H - 1) * s + d * (KH - 1) + output_padding + 1
    OW = (W - 1) * s + d * (KW - 1) + output_padding + 1
    assert OH % s == 0 and OW % s == 0, "phase decomposition needs OH,OW % s == 0"
    Mh, Mw = OH // s, OW // s
    Th, Tw = (d * (KH - 1)) // s, (d * (KW - 1)) // s
    nTh, nTw = Th + 1, Tw + 1

    # Per-phase correlation kernels (pre-flipped): pk[rh, rw, oc, ic, th, tw].
    pk = jnp.zeros((s, s, OC, IC, nTh, nTw), w.dtype)
    for kh in range(KH):
        rh, th = (d * kh) % s, (d * kh) // s
        for kw in range(KW):
            rw, tw = (d * kw) % s, (d * kw) // s
            pk = pk.at[rh, rw, :, :, Th - th, Tw - tw].set(w[:, :, kh, kw].T)
    w_mat = pk.reshape(s * s * OC, IC * nTh * nTw).astype(jnp.bfloat16)
    bias = jnp.tile(b, s * s)                       # row (rh,rw,oc) gets b[oc]

    # Pad so every phase is a VALID stride-1 correlation of size (Mh, Mw).
    x_pad = jnp.pad(x.astype(jnp.bfloat16),
                    ((0, 0), (0, 0), (Th, Mh - H), (Tw, Mw - W)))
    patches = jax.lax.conv_general_dilated_patches(
        x_pad, filter_shape=(nTh, nTw), window_strides=(1, 1),
        padding=((0, 0), (0, 0)),
        dimension_numbers=("NCHW", "OIHW", "NCHW"))
    CKK = IC * nTh * nTw
    pm = patches.reshape(N, CKK, Mh * Mw)

    out = conv_matmul(pm, w_mat, bias, act, out_dtype)      # (N, s*s*OC, Mh*Mw)
    out = out.reshape(N, s, s, OC, Mh, Mw)
    # out_final[n, oc, mh*s + rh, mw*s + rw] = out[n, rh, rw, oc, mh, mw]
    out = out.transpose(0, 3, 4, 1, 5, 2).reshape(N, OC, OH, OW)
    return out


# ----------------------------------------------------------------------------
# Kernel 2: fused "head":
#   enc4 (7x7 -> 1x1) + leaky_relu + adaptive_avg_pool(1x1)==identity
#   + fc1 + [fc_mu|fc_log_var] (merged matmul) + reparameterize + fc2
#   + dec1 (ConvTranspose on a 1x1 map == pure matmul) + leaky_relu
# ----------------------------------------------------------------------------
def _head_kernel(x_ref, eps_ref,
                 w4_ref, b4_ref, w1_ref, b1_ref,
                 wmv_ref, bmv_ref,
                 w2_ref, b2_ref, wd_ref, bd_ref,
                 mu_ref, lv_ref, d1_ref, *, latent):
    f32 = jnp.float32
    h4 = jnp.dot(x_ref[...], w4_ref[...], preferred_element_type=f32) + b4_ref[...]
    h4 = jnp.where(h4 >= 0, h4, 0.01 * h4)                   # leaky_relu(enc4)
    # adaptive_avg_pool2d over a 1x1 feature map is the identity.
    h = jnp.dot(h4, w1_ref[...], preferred_element_type=f32) + b1_ref[...]
    mulv = jnp.dot(h, wmv_ref[...], preferred_element_type=f32) + bmv_ref[...]
    mu = mulv[:, :latent]
    lv = mulv[:, latent:]
    std = jnp.exp(0.5 * lv)
    z = mu + eps_ref[...] * std                              # reparameterize
    z2 = jnp.dot(z, w2_ref[...], preferred_element_type=f32) + b2_ref[...]
    d1 = jnp.dot(z2.astype(jnp.bfloat16), wd_ref[...],
                 preferred_element_type=f32) + bd_ref[...]
    d1 = jnp.where(d1 >= 0, d1, 0.01 * d1)                   # leaky_relu(dec1)
    mu_ref[...] = mu
    lv_ref[...] = lv
    d1_ref[...] = d1.astype(d1_ref.dtype)


def fused_head(x3, eps, p):
    """x3: (B, 4c, 7, 7) bf16 output of enc3 -> (mu, log_var, dec1_out)."""
    B, C, H, W = x3.shape
    OC4, IC4, KH4, KW4 = p["enc4_w"].shape                   # (64, 4c, 7, 7)
    assert (C, H, W) == (IC4, KH4, KW4), (
        "fused head assumes enc4 reduces the feature map to 1x1 "
        "(i.e. a 256x256 network input as the architecture implies)")
    latent = p["fc_mu_w"].shape[1]
    ICd, OCd, KHd, KWd = p["dec1_w"].shape                   # (64, 4c, 7, 7)

    x_flat = x3.reshape(B, C * H * W).astype(jnp.bfloat16)
    w4 = p["enc4_w"].reshape(OC4, C * H * W).T.astype(jnp.bfloat16)
    wd = p["dec1_w"].reshape(ICd, OCd * KHd * KWd).astype(jnp.bfloat16)
    bd = jnp.repeat(p["dec1_b"], KHd * KWd).reshape(1, OCd * KHd * KWd)
    wmv = jnp.concatenate([p["fc_mu_w"], p["fc_lv_w"]], axis=1)   # (128, 2*lat)
    bmv = jnp.concatenate([p["fc_mu_b"], p["fc_lv_b"]]).reshape(1, -1)

    f32 = jnp.float32
    mu, lv, d1 = pl.pallas_call(
        functools.partial(_head_kernel, latent=latent),
        out_shape=(
            jax.ShapeDtypeStruct((B, latent), f32),
            jax.ShapeDtypeStruct((B, latent), f32),
            jax.ShapeDtypeStruct((B, OCd * KHd * KWd), jnp.bfloat16),
        ),
    )(x_flat, eps.astype(f32),
      w4, p["enc4_b"].reshape(1, -1).astype(f32),
      p["fc1_w"].astype(f32), p["fc1_b"].reshape(1, -1).astype(f32),
      wmv.astype(f32), bmv.astype(f32),
      p["fc2_w"].astype(f32), p["fc2_b"].reshape(1, -1).astype(f32),
      wd, bd.astype(f32))
    return mu, lv, d1.reshape(B, OCd, KHd, KWd)


# ----------------------------------------------------------------------------
# Parameters (deterministic synthetic init, PyTorch-like shapes)
# ----------------------------------------------------------------------------
def init_params(key, latent_dim=64, init_channels=8, kernel_size=4,
                image_in_channels=3, image_out_channels=3):
    keys = iter(jax.random.split(key, 32))

    def u(shape, fan_in):
        bound = 1.0 / math.sqrt(fan_in)
        return jax.random.uniform(next(keys), shape, jnp.float32, -bound, bound)

    c, k = init_channels, kernel_size
    p = {}
    p["enc1_w"] = u((c, image_in_channels, k, k), image_in_channels * k * k)
    p["enc1_b"] = u((c,), image_in_channels * k * k)
    p["enc2_w"] = u((2 * c, c, k, k), c * k * k)
    p["enc2_b"] = u((2 * c,), c * k * k)
    p["enc3_w"] = u((4 * c, 2 * c, k, k), 2 * c * k * k)
    p["enc3_b"] = u((4 * c,), 2 * c * k * k)
    p["enc4_w"] = u((64, 4 * c, 7, 7), 4 * c * 7 * 7)
    p["enc4_b"] = u((64,), 4 * c * 7 * 7)
    # Linear layers stored as (in, out) == PyTorch weight.T
    p["fc1_w"] = u((64, 128), 64)
    p["fc1_b"] = u((128,), 64)
    p["fc_mu_w"] = u((128, latent_dim), 128)
    p["fc_mu_b"] = u((latent_dim,), 128)
    p["fc_lv_w"] = u((128, latent_dim), 128)
    p["fc_lv_b"] = u((latent_dim,), 128)
    p["fc2_w"] = u((latent_dim, 64), latent_dim)
    p["fc2_b"] = u((64,), latent_dim)
    # ConvTranspose weights: (IC, OC, KH, KW)
    p["dec1_w"] = u((64, 4 * c, 7, 7), 64 * 7 * 7)
    p["dec1_b"] = u((4 * c,), 64 * 7 * 7)
    p["dec2_w"] = u((4 * c, 2 * c, k, k), 4 * c * k * k)
    p["dec2_b"] = u((2 * c,), 4 * c * k * k)
    p["dec3_w"] = u((2 * c, image_out_channels, k + 1, k + 1), 2 * c * (k + 1) ** 2)
    p["dec3_b"] = u((image_out_channels,), 2 * c * (k + 1) ** 2)
    # self.dec4 is defined in the PyTorch module but never used in forward().
    return p


# ----------------------------------------------------------------------------
# Forward pass (matches LandsatCvaeNet.forward)
# ----------------------------------------------------------------------------
def landsat_cvae_forward(params, x, eps):
    p = params
    x = conv2d(x, p["enc1_w"], p["enc1_b"], stride=4, padding=1, dilation=2,
               act="leaky_relu")
    x = conv2d(x, p["enc2_w"], p["enc2_b"], stride=3, padding=1, dilation=1,
               act="leaky_relu")
    x = conv2d(x, p["enc3_w"], p["enc3_b"], stride=3, padding=1, dilation=1,
               act="leaky_relu")
    # enc4 + pool + fc1 + fc_mu/fc_log_var + reparameterize + fc2 + dec1.
    mu, log_var, x = fused_head(x, eps, p)
    # dec2 / dec3 as phase-decomposed transposed convs (no zero-stuffed im2col).
    x = conv_transpose2d_phase(x, p["dec2_w"], p["dec2_b"], stride=2,
                               dilation=1, output_padding=0, act="leaky_relu")
    recon = conv_transpose2d_phase(x, p["dec3_w"], p["dec3_b"], stride=3,
                                   dilation=2, output_padding=3, act="sigmoid",
                                   out_dtype=jnp.float32)
    return recon, mu, log_var


if __name__ == "__main__":
    key = jax.random.PRNGKey(0)
    pkey, xkey, ekey = jax.random.split(key, 3)
    params = init_params(pkey)

    B = 2
    # The encoder strides + enc4's 7x7 kernel imply a 256x256 input tile
    # (the encoder bottlenecks to exactly 1x1).
    x = jax.random.normal(xkey, (B, 3, 256, 256), jnp.float32)
    # TODO(synk): torch.randn_like(std) has no in-kernel torch-RNG equivalent;
    # the noise is passed in as a deterministic `eps` input instead.
    eps = jax.random.normal(ekey, (B, 64), jnp.float32)

    recon, mu, log_var = jax.jit(landsat_cvae_forward)(params, x, eps)
    jax.block_until_ready((recon, mu, log_var))

    assert recon.shape == (B, 3, 57, 57), recon.shape
    assert mu.shape == (B, 64) and log_var.shape == (B, 64)
    assert bool(jnp.all(jnp.isfinite(recon)))
    print("KERNEL_OK")
</pallas_src>

<mosaic_0001>
module attributes {stable_mosaic.version = 11 : i64} {
  func.func @_conv_mm_kernel(%arg0: i32, %arg1: i32, %arg2: memref<1x48x1024xbf16, #tpu.memory_space<vmem>>, %arg3: memref<8x48xbf16, #tpu.memory_space<vmem>>, %arg4: memref<8x1xf32, #tpu.memory_space<vmem>>, %arg5: memref<1x8x1024xbf16, #tpu.memory_space<vmem>>) attributes {dimension_semantics = [#tpu.dimension_semantics<parallel>, #tpu.dimension_semantics<parallel>], iteration_bounds = array<i64: 2, 4>, scalar_prefetch = 0 : i64, scratch_operands = 0 : i64, tpu.core_type = #tpu.core_type<tc>, window_params = [{transform_indices = @transform_0, window_bounds = array<i64: 1, 48, 1024>}, {pipeline_mode = #tpu.pipeline_mode<synchronous>, transform_indices = @transform_1, window_bounds = array<i64: 8, 48>}, {pipeline_mode = #tpu.pipeline_mode<synchronous>, transform_indices = @transform_2, window_bounds = array<i64: 8, 1>}, {transform_indices = @transform_3, window_bounds = array<i64: 1, 8, 1024>}]} {
    %c0 = arith.constant 0 : index
    %c0_0 = arith.constant 0 : index
    %0 = vector.load %arg3[%c0, %c0_0] : memref<8x48xbf16, #tpu.memory_space<vmem>>, vector<8x48xbf16>
    %c0_1 = arith.constant 0 : index
    %c0_2 = arith.constant 0 : index
    %c0_3 = arith.constant 0 : index
    %1 = vector.load %arg2[%c0_1, %c0_2, %c0_3] : memref<1x48x1024xbf16, #tpu.memory_space<vmem>>, vector<1x48x1024xbf16>
    %2 = vector.shape_cast %1 : vector<1x48x1024xbf16> to vector<48x1024xbf16>
    %cst = arith.constant dense<0.000000e+00> : vector<8x1024xf32>
    %3 = tpu.matmul %0, %2, %cst {dimension_numbers = #tpu.dot_dimension_numbers<[1], [0], [0], [1], [0, 0, 1, 1], [], []>} : vector<8x48xbf16>, vector<48x1024xbf16>, vector<8x1024xf32> -> vector<8x1024xf32>
    %c0_4 = arith.constant 0 : index
    %c0_5 = arith.constant 0 : index
    %4 = vector.load %arg4[%c0_4, %c0_5] : memref<8x1xf32, #tpu.memory_space<vmem>>, vector<8x1xf32>
    %5 = vector.broadcast %4 : vector<8x1xf32> to vector<8x1024xf32>
    %6 = arith.addf %3, %5 : vector<8x1024xf32>
    %cst_6 = arith.constant 0.000000e+00 : f32
    %7 = vector.broadcast %cst_6 : f32 to vector<8x1024xf32>
    %8 = arith.cmpf oge, %6, %7 : vector<8x1024xf32>
    %cst_7 = arith.constant 0.00999999977 : f32
    %9 = vector.broadcast %cst_7 : f32 to vector<8x1024xf32>
    %10 = arith.mulf %9, %6 : vector<8x1024xf32>
    %11 = arith.select %8, %6, %10 : vector<8x1024xi1>, vector<8x1024xf32>
    %12 = arith.truncf %11 : vector<8x1024xf32> to vector<8x1024xbf16>
    %c0_8 = arith.constant 0 : index
    %c0_9 = arith.constant 0 : index
    %c0_10 = arith.constant 0 : index
    %13 = vector.load %arg5[%c0_8, %c0_9, %c0_10] : memref<1x8x1024xbf16, #tpu.memory_space<vmem>>, vector<1x8x1024xbf16>
    %14 = vector.shape_cast %13 : vector<1x8x1024xbf16> to vector<8x1024xbf16>
    %15 = vector.shape_cast %12 : vector<8x1024xbf16> to vector<1x8x1024xbf16>
    tpu.vector_store %arg5[%c0_8, %c0_9, %c0_10], %15 {strides = array<i32>} : memref<1x8x1024xbf16, #tpu.memory_space<vmem>>, vector<1x8x1024xbf16>,
    return
  }
  func.func @transform_0(%arg0: i32, %arg1: i32) -> (i32, i32, i32) {
    %c0_i32 = arith.constant 0 : i32
    %c0_i32_0 = arith.constant 0 : i32
    return %arg0, %c0_i32, %arg1 : i32, i32, i32
  }
  func.func @transform_1(%arg0: i32, %arg1: i32) -> (i32, i32) {
    %c0_i32 = arith.constant 0 : i32
    %c0_i32_0 = arith.constant 0 : i32
    %c0_i32_1 = arith.constant 0 : i32
    return %c0_i32, %c0_i32_0 : i32, i32
  }
  func.func @transform_2(%arg0: i32, %arg1: i32) -> (i32, i32) {
    %c0_i32 = arith.constant 0 : i32
    %c0_i32_0 = arith.constant 0 : i32
    %c0_i32_1 = arith.constant 0 : i32
    return %c0_i32, %c0_i32_0 : i32, i32
  }
  func.func @transform_3(%arg0: i32, %arg1: i32) -> (i32, i32, i32) {
    %c0_i32 = arith.constant 0 : i32
    %c0_i32_0 = arith.constant 0 : i32
    return %arg0, %c0_i32, %arg1 : i32, i32, i32
  }
}

module attributes {stable_mosaic.version = 11 : i64} {
  func.func @_conv_mm_kernel(%arg0: i32, %arg1: i32, %arg2: memref<1x128x512xbf16, #tpu.memory_space<vmem>>, %arg3: memref<16x128xbf16, #tpu.memory_space<vmem>>, %arg4: memref<16x1xf32, #tpu.memory_space<vmem>>, %arg5: memref<1x16x512xbf16, #tpu.memory_space<vmem>>) attributes {dimension_semantics = [#tpu.dimension_semantics<parallel>, #tpu.dimension_semantics<parallel>], iteration_bounds = array<i64: 2, 1>, scalar_prefetch = 0 : i64, scratch_operands = 0 : i64, tpu.core_type = #tpu.core_type<tc>, window_params = [{transform_indices = @transform_0, window_bounds = array<i64: 1, 128, 512>}, {pipeline_mode = #tpu.pipeline_mode<synchronous>, transform_indices = @transform_1, window_bounds = array<i64: 16, 128>}, {pipeline_mode = #tpu.pipeline_mode<synchronous>, transform_indices = @transform_2, window_bounds = array<i64: 16, 1>}, {transform_indices = @transform_3, window_bounds = array<i64: 1, 16, 512>}]} {
    %c0 = arith.constant 0 : index
    %c0_0 = arith.constant 0 : index
    %0 = vector.load %arg3[%c0, %c0_0] : memref<16x128xbf16, #tpu.memory_space<vmem>>, vector<16x128xbf16>
    %c0_1 = arith.constant 0 : index
    %c0_2 = arith.constant 0 : index
    %c0_3 = arith.constant 0 : index
    %1 = vector.load %arg2[%c0_1, %c0_2, %c0_3] : memref<1x128x512xbf16, #tpu.memory_space<vmem>>, vector<1x128x512xbf16>
    %2 = vector.shape_cast %1 : vector<1x128x512xbf16> to vector<128x512xbf16>
    %cst = arith.constant dense<0.000000e+00> : vector<16x512xf32>
    %3 = tpu.matmul %0, %2, %cst {dimension_numbers = #tpu.dot_dimension_numbers<[1], [0], [0], [1], [0, 0, 1, 1], [], []>} : vector<16x128xbf16>, vector<128x512xbf16>, vector<16x512xf32> -> vector<16x512xf32>
    %c0_4 = arith.constant 0 : index
    %c0_5 = arith.constant 0 : index
    %4 = vector.load %arg4[%c0_4, %c0_5] : memref<16x1xf32, #tpu.memory_space<vmem>>, vector<16x1xf32>
    %5 = vector.broadcast %4 : vector<16x1xf32> to vector<16x512xf32>
    %6 = arith.addf %3, %5 : vector<16x512xf32>
    %cst_6 = arith.constant 0.000000e+00 : f32
    %7 = vector.broadcast %cst_6 : f32 to vector<16x512xf32>
    %8 = arith.cmpf oge, %6, %7 : vector<16x512xf32>
    %cst_7 = arith.constant 0.00999999977 : f32
    %9 = vector.broadcast %cst_7 : f32 to vector<16x512xf32>
    %10 = arith.mulf %9, %6 : vector<16x512xf32>
    %11 = arith.select %8, %6, %10 : vector<16x512xi1>, vector<16x512xf32>
    %12 = arith.truncf %11 : vector<16x512xf32> to vector<16x512xbf16>
    %c0_8 = arith.constant 0 : index
    %c0_9 = arith.constant 0 : index
    %c0_10 = arith.constant 0 : index
    %13 = vector.load %arg5[%c0_8, %c0_9, %c0_10] : memref<1x16x512xbf16, #tpu.memory_space<vmem>>, vector<1x16x512xbf16>
    %14 = vector.shape_cast %13 : vector<1x16x512xbf16> to vector<16x512xbf16>
    %15 = vector.shape_cast %12 : vector<16x512xbf16> to vector<1x16x512xbf16>
    tpu.vector_store %arg5[%c0_8, %c0_9, %c0_10], %15 {strides = array<i32>} : memref<1x16x512xbf16, #tpu.memory_space<vmem>>, vector<1x16x512xbf16>,
    return
  }
  func.func @transform_0(%arg0: i32, %arg1: i32) -> (i32, i32, i32) {
    %c0_i32 = arith.constant 0 : i32
    %c0_i32_0 = arith.constant 0 : i32
    return %arg0, %c0_i32, %arg1 : i32, i32, i32
  }
  func.func @transform_1(%arg0: i32, %arg1: i32) -> (i32, i32) {
    %c0_i32 = arith.constant 0 : i32
    %c0_i32_0 = arith.constant 0 : i32
    %c0_i32_1 = arith.constant 0 : i32
    return %c0_i32, %c0_i32_0 : i32, i32
  }
  func.func @transform_2(%arg0: i32, %arg1: i32) -> (i32, i32) {
    %c0_i32 = arith.constant 0 : i32
    %c0_i32_0 = arith.constant 0 : i32
    %c0_i32_1 = arith.constant 0 : i32
    return %c0_i32, %c0_i32_0 : i32, i32
  }
  func.func @transform_3(%arg0: i32, %arg1: i32) -> (i32, i32, i32) {
    %c0_i32 = arith.constant 0 : i32
    %c0_i32_0 = arith.constant 0 : i32
    return %arg0, %c0_i32, %arg1 : i32, i32, i32
  }
}

module attributes {stable_mosaic.version = 11 : i64} {
  func.func @_conv_mm_kernel(%arg0: i32, %arg1: i32, %arg2: memref<1x256x128xbf16, #tpu.memory_space<vmem>>, %arg3: memref<32x256xbf16, #tpu.memory_space<vmem>>, %arg4: memref<32x1xf32, #tpu.memory_space<vmem>>, %arg5: memref<1x32x128xbf16, #tpu.memory_space<vmem>>) attributes {dimension_semantics = [#tpu.dimension_semantics<parallel>, #tpu.dimension_semantics<parallel>], iteration_bounds = array<i64: 2, 1>, scalar_prefetch = 0 : i64, scratch_operands = 0 : i64, tpu.core_type = #tpu.core_type<tc>, window_params = [{transform_indices = @transform_0, window_bounds = array<i64: 1, 256, 128>}, {pipeline_mode = #tpu.pipeline_mode<synchronous>, transform_indices = @transform_1, window_bounds = array<i64: 32, 256>}, {pipeline_mode = #tpu.pipeline_mode<synchronous>, transform_indices = @transform_2, window_bounds = array<i64: 32, 1>}, {transform_indices = @transform_3, window_bounds = array<i64: 1, 32, 128>}]} {
    %c0 = arith.constant 0 : index
    %c0_0 = arith.constant 0 : index
    %0 = vector.load %arg3[%c0, %c0_0] : memref<32x256xbf16, #tpu.memory_space<vmem>>, vector<32x256xbf16>
    %c0_1 = arith.constant 0 : index
    %c0_2 = arith.constant 0 : index
    %c0_3 = arith.constant 0 : index
    %1 = vector.load %arg2[%c0_1, %c0_2, %c0_3] : memref<1x256x128xbf16, #tpu.memory_space<vmem>>, vector<1x256x128xbf16>
    %2 = vector.shape_cast %1 : vector<1x256x128xbf16> to vector<256x128xbf16>
    %cst = arith.constant dense<0.000000e+00> : vector<32x128xf32>
    %3 = tpu.matmul %0, %2, %cst {dimension_numbers = #tpu.dot_dimension_numbers<[1], [0], [0], [1], [0, 0, 1, 1], [], []>} : vector<32x256xbf16>, vector<256x128xbf16>, vector<32x128xf32> -> vector<32x128xf32>
    %c0_4 = arith.constant 0 : index
    %c0_5 = arith.constant 0 : index
    %4 = vector.load %arg4[%c0_4, %c0_5] : memref<32x1xf32, #tpu.memory_space<vmem>>, vector<32x1xf32>
    %5 = vector.broadcast %4 : vector<32x1xf32> to vector<32x128xf32>
    %6 = arith.addf %3, %5 : vector<32x128xf32>
    %cst_6 = arith.constant 0.000000e+00 : f32
    %7 = vector.broadcast %cst_6 : f32 to vector<32x128xf32>
    %8 = arith.cmpf oge, %6, %7 : vector<32x128xf32>
    %cst_7 = arith.constant 0.00999999977 : f32
    %9 = vector.broadcast %cst_7 : f32 to vector<32x128xf32>
    %10 = arith.mulf %9, %6 : vector<32x128xf32>
    %11 = arith.select %8, %6, %10 : vector<32x128xi1>, vector<32x128xf32>
    %12 = arith.truncf %11 : vector<32x128xf32> to vector<32x128xbf16>
    %c0_8 = arith.constant 0 : index
    %c0_9 = arith.constant 0 : index
    %c0_10 = arith.constant 0 : index
    %13 = vector.load %arg5[%c0_8, %c0_9, %c0_10] : memref<1x32x128xbf16, #tpu.memory_space<vmem>>, vector<1x32x128xbf16>
    %14 = vector.shape_cast %13 : vector<1x32x128xbf16> to vector<32x128xbf16>
    %15 = vector.shape_cast %12 : vector<32x128xbf16> to vector<1x32x128xbf16>
    tpu.vector_store %arg5[%c0_8, %c0_9, %c0_10], %15 {strides = array<i32>} : memref<1x32x128xbf16, #tpu.memory_space<vmem>>, vector<1x32x128xbf16>,
    return
  }
  func.func @transform_0(%arg0: i32, %arg1: i32) -> (i32, i32, i32) {
    %c0_i32 = arith.constant 0 : i32
    %c0_i32_0 = arith.constant 0 : i32
    return %arg0, %c0_i32, %arg1 : i32, i32, i32
  }
  func.func @transform_1(%arg0: i32, %arg1: i32) -> (i32, i32) {
    %c0_i32 = arith.constant 0 : i32
    %c0_i32_0 = arith.constant 0 : i32
    %c0_i32_1 = arith.constant 0 : i32
    return %c0_i32, %c0_i32_0 : i32, i32
  }
  func.func @transform_2(%arg0: i32, %arg1: i32) -> (i32, i32) {
    %c0_i32 = arith.constant 0 : i32
    %c0_i32_0 = arith.constant 0 : i32
    %c0_i32_1 = arith.constant 0 : i32
    return %c0_i32, %c0_i32_0 : i32, i32
  }
  func.func @transform_3(%arg0: i32, %arg1: i32) -> (i32, i32, i32) {
    %c0_i32 = arith.constant 0 : i32
    %c0_i32_0 = arith.constant 0 : i32
    return %arg0, %c0_i32, %arg1 : i32, i32, i32
  }
}

module attributes {stable_mosaic.version = 11 : i64} {
  func.func @_head_kernel(%arg0: memref<2x1568xbf16, #tpu.memory_space<vmem>>, %arg1: memref<2x64xf32, #tpu.memory_space<vmem>>, %arg2: memref<1568x64xbf16, #tpu.memory_space<vmem>>, %arg3: memref<1x64xf32, #tpu.memory_space<vmem>>, %arg4: memref<64x128xf32, #tpu.memory_space<vmem>>, %arg5: memref<1x128xf32, #tpu.memory_space<vmem>>, %arg6: memref<128x128xf32, #tpu.memory_space<vmem>>, %arg7: memref<1x128xf32, #tpu.memory_space<vmem>>, %arg8: memref<64x64xf32, #tpu.memory_space<vmem>>, %arg9: memref<1x64xf32, #tpu.memory_space<vmem>>, %arg10: memref<64x1568xbf16, #tpu.memory_space<vmem>>, %arg11: memref<1x1568xf32, #tpu.memory_space<vmem>>, %arg12: memref<2x64xf32, #tpu.memory_space<vmem>>, %arg13: memref<2x64xf32, #tpu.memory_space<vmem>>, %arg14: memref<2x1568xbf16, #tpu.memory_space<vmem>>) attributes {dimension_semantics = [], scalar_prefetch = 0 : i64, scratch_operands = 0 : i64, tpu.core_type = #tpu.core_type<tc>} {
    %c0 = arith.constant 0 : index
    %c0_0 = arith.constant 0 : index
    %0 = vector.load %arg0[%c0, %c0_0] : memref<2x1568xbf16, #tpu.memory_space<vmem>>, vector<2x1568xbf16>
    %c0_1 = arith.constant 0 : index
    %c0_2 = arith.constant 0 : index
    %1 = vector.load %arg2[%c0_1, %c0_2] : memref<1568x64xbf16, #tpu.memory_space<vmem>>, vector<1568x64xbf16>
    %cst = arith.constant dense<0.000000e+00> : vector<2x64xf32>
    %2 = tpu.matmul %0, %1, %cst {dimension_numbers = #tpu.dot_dimension_numbers<[1], [0], [0], [1], [0, 0, 1, 1], [], []>} : vector<2x1568xbf16>, vector<1568x64xbf16>, vector<2x64xf32> -> vector<2x64xf32>
    %c0_3 = arith.constant 0 : index
    %c0_4 = arith.constant 0 : index
    %3 = vector.load %arg3[%c0_3, %c0_4] : memref<1x64xf32, #tpu.memory_space<vmem>>, vector<1x64xf32>
    %4 = vector.broadcast %3 : vector<1x64xf32> to vector<2x64xf32>
    %5 = arith.addf %2, %4 : vector<2x64xf32>
    %cst_5 = arith.constant 0.000000e+00 : f32
    %6 = vector.broadcast %cst_5 : f32 to vector<2x64xf32>
    %7 = arith.cmpf oge, %5, %6 : vector<2x64xf32>
    %cst_6 = arith.constant 0.00999999977 : f32
    %8 = vector.broadcast %cst_6 : f32 to vector<2x64xf32>
    %9 = arith.mulf %8, %5 : vector<2x64xf32>
    %10 = arith.select %7, %5, %9 : vector<2x64xi1>, vector<2x64xf32>
    %c0_7 = arith.constant 0 : index
    %c0_8 = arith.constant 0 : index
    %11 = vector.load %arg4[%c0_7, %c0_8] : memref<64x128xf32, #tpu.memory_space<vmem>>, vector<64x128xf32>
    %cst_9 = arith.constant dense<0.000000e+00> : vector<2x128xf32>
    %12 = tpu.matmul %10, %11, %cst_9 {dimension_numbers = #tpu.dot_dimension_numbers<[1], [0], [0], [1], [0, 0, 1, 1], [], []>} : vector<2x64xf32>, vector<64x128xf32>, vector<2x128xf32> -> vector<2x128xf32>
    %c0_10 = arith.constant 0 : index
    %c0_11 = arith.constant 0 : index
    %13 = vector.load %arg5[%c0_10, %c0_11] : memref<1x128xf32, #tpu.memory_space<vmem>>, vector<1x128xf32>
    %14 = vector.broadcast %13 : vector<1x128xf32> to vector<2x128xf32>
    %15 = arith.addf %12, %14 : vector<2x128xf32>
    %c0_12 = arith.constant 0 : index
    %c0_13 = arith.constant 0 : index
    %16 = vector.load %arg6[%c0_12, %c0_13] : memref<128x128xf32, #tpu.memory_space<vmem>>, vector<128x128xf32>
    %cst_14 = arith.constant dense<0.000000e+00> : vector<2x128xf32>
    %17 = tpu.matmul %15, %16, %cst_14 {dimension_numbers = #tpu.dot_dimension_numbers<[1], [0], [0], [1], [0, 0, 1, 1], [], []>} : vector<2x128xf32>, vector<128x128xf32>, vector<2x128xf32> -> vector<2x128xf32>
    %c0_15 = arith.constant 0 : index
    %c0_16 = arith.constant 0 : index
    %18 = vector.load %arg7[%c0_15, %c0_16] : memref<1x128xf32, #tpu.memory_space<vmem>>, vector<1x128xf32>
    %19 = vector.broadcast %18 : vector<1x128xf32> to vector<2x128xf32>
    %20 = arith.addf %17, %19 : vector<2x128xf32>
    %21 = vector.extract_strided_slice %20 {offsets = [0, 0], sizes = [2, 64], strides = [1, 1]} : vector<2x128xf32> to vector<2x64xf32>
    %22 = vector.extract_strided_slice %20 {offsets = [0, 64], sizes = [2, 64], strides = [1, 1]} : vector<2x128xf32> to vector<2x64xf32>
    %cst_17 = arith.constant 5.000000e-01 : f32
    %23 = vector.broadcast %cst_17 : f32 to vector<2x64xf32>
    %24 = arith.mulf %23, %22 : vector<2x64xf32>
    %25 = math.exp %24 : vector<2x64xf32>
    %c0_18 = arith.constant 0 : index
    %c0_19 = arith.constant 0 : index
    %26 = vector.load %arg1[%c0_18, %c0_19] : memref<2x64xf32, #tpu.memory_space<vmem>>, vector<2x64xf32>
    %27 = arith.mulf %26, %25 : vector<2x64xf32>
    %28 = arith.addf %21, %27 : vector<2x64xf32>
    %c0_20 = arith.constant 0 : index
    %c0_21 = arith.constant 0 : index
    %29 = vector.load %arg8[%c0_20, %c0_21] : memref<64x64xf32, #tpu.memory_space<vmem>>, vector<64x64xf32>
    %cst_22 = arith.constant dense<0.000000e+00> : vector<2x64xf32>
    %30 = tpu.matmul %28, %29, %cst_22 {dimension_numbers = #tpu.dot_dimension_numbers<[1], [0], [0], [1], [0, 0, 1, 1], [], []>} : vector<2x64xf32>, vector<64x64xf32>, vector<2x64xf32> -> vector<2x64xf32>
    %c0_23 = arith.constant 0 : index
    %c0_24 = arith.constant 0 : index
    %31 = vector.load %arg9[%c0_23, %c0_24] : memref<1x64xf32, #tpu.memory_space<vmem>>, vector<1x64xf32>
    %32 = vector.broadcast %31 : vector<1x64xf32> to vector<2x64xf32>
    %33 = arith.addf %30, %32 : vector<2x64xf32>
    %34 = arith.truncf %33 : vector<2x64xf32> to vector<2x64xbf16>
    %c0_25 = arith.constant 0 : index
    %c0_26 = arith.constant 0 : index
    %35 = vector.load %arg10[%c0_25, %c0_26] : memref<64x1568xbf16, #tpu.memory_space<vmem>>, vector<64x1568xbf16>
    %cst_27 = arith.constant dense<0.000000e+00> : vector<2x1568xf32>
    %36 = tpu.matmul %34, %35, %cst_27 {dimension_numbers = #tpu.dot_dimension_numbers<[1], [0], [0], [1], [0, 0, 1, 1], [], []>} : vector<2x64xbf16>, vector<64x1568xbf16>, vector<2x1568xf32> -> vector<2x1568xf32>
    %c0_28 = arith.constant 0 : index
    %c0_29 = arith.constant 0 : index
    %37 = vector.load %arg11[%c0_28, %c0_29] : memref<1x1568xf32, #tpu.memory_space<vmem>>, vector<1x1568xf32>
    %38 = vector.broadcast %37 : vector<1x1568xf32> to vector<2x1568xf32>
    %39 = arith.addf %36, %38 : vector<2x1568xf32>
    %cst_30 = arith.constant 0.000000e+00 : f32
    %40 = vector.broadcast %cst_30 : f32 to vector<2x1568xf32>
    %41 = arith.cmpf oge, %39, %40 : vector<2x1568xf32>
    %cst_31 = arith.constant 0.00999999977 : f32
    %42 = vector.broadcast %cst_31 : f32 to vector<2x1568xf32>
    %43 = arith.mulf %42, %39 : vector<2x1568xf32>
    %44 = arith.select %41, %39, %43 : vector<2x1568xi1>, vector<2x1568xf32>
    %c0_32 = arith.constant 0 : index
    %c0_33 = arith.constant 0 : index
    %45 = vector.load %arg12[%c0_32, %c0_33] : memref<2x64xf32, #tpu.memory_space<vmem>>, vector<2x64xf32>
    tpu.vector_store %arg12[%c0_32, %c0_33], %21 {strides = array<i32>} : memref<2x64xf32, #tpu.memory_space<vmem>>, vector<2x64xf32>,
    %c0_34 = arith.constant 0 : index
    %c0_35 = arith.constant 0 : index
    %46 = vector.load %arg13[%c0_34, %c0_35] : memref<2x64xf32, #tpu.memory_space<vmem>>, vector<2x64xf32>
    tpu.vector_store %arg13[%c0_34, %c0_35], %22 {strides = array<i32>} : memref<2x64xf32, #tpu.memory_space<vmem>>, vector<2x64xf32>,
    %47 = arith.truncf %44 : vector<2x1568xf32> to vector<2x1568xbf16>
    %c0_36 = arith.constant 0 : index
    %c0_37 = arith.constant 0 : index
    %48 = vector.load %arg14[%c0_36, %c0_37] : memref<2x1568xbf16, #tpu.memory_space<vmem>>, vector<2x1568xbf16>
    tpu.vector_store %arg14[%c0_36, %c0_37], %47 {strides = array<i32>} : memref<2x1568xbf16, #tpu.memory_space<vmem>>, vector<2x1568xbf16>,
    return
  }
}

module attributes {stable_mosaic.version = 11 : i64} {
  func.func @_conv_mm_kernel(%arg0: i32, %arg1: i32, %arg2: memref<1x128x128xbf16, #tpu.memory_space<vmem>>, %arg3: memref<64x128xbf16, #tpu.memory_space<vmem>>, %arg4: memref<64x1xf32, #tpu.memory_space<vmem>>, %arg5: memref<1x64x128xbf16, #tpu.memory_space<vmem>>) attributes {dimension_semantics = [#tpu.dimension_semantics<parallel>, #tpu.dimension_semantics<parallel>], iteration_bounds = array<i64: 2, 1>, scalar_prefetch = 0 : i64, scratch_operands = 0 : i64, tpu.core_type = #tpu.core_type<tc>, window_params = [{transform_indices = @transform_0, window_bounds = array<i64: 1, 128, 128>}, {pipeline_mode = #tpu.pipeline_mode<synchronous>, transform_indices = @transform_1, window_bounds = array<i64: 64, 128>}, {pipeline_mode = #tpu.pipeline_mode<synchronous>, transform_indices = @transform_2, window_bounds = array<i64: 64, 1>}, {transform_indices = @transform_3, window_bounds = array<i64: 1, 64, 128>}]} {
    %c0 = arith.constant 0 : index
    %c0_0 = arith.constant 0 : index
    %0 = vector.load %arg3[%c0, %c0_0] : memref<64x128xbf16, #tpu.memory_space<vmem>>, vector<64x128xbf16>
    %c0_1 = arith.constant 0 : index
    %c0_2 = arith.constant 0 : index
    %c0_3 = arith.constant 0 : index
    %1 = vector.load %arg2[%c0_1, %c0_2, %c0_3] : memref<1x128x128xbf16, #tpu.memory_space<vmem>>, vector<1x128x128xbf16>
    %2 = vector.shape_cast %1 : vector<1x128x128xbf16> to vector<128x128xbf16>
    %cst = arith.constant dense<0.000000e+00> : vector<64x128xf32>
    %3 = tpu.matmul %0, %2, %cst {dimension_numbers = #tpu.dot_dimension_numbers<[1], [0], [0], [1], [0, 0, 1, 1], [], []>} : vector<64x128xbf16>, vector<128x128xbf16>, vector<64x128xf32> -> vector<64x128xf32>
    %c0_4 = arith.constant 0 : index
    %c0_5 = arith.constant 0 : index
    %4 = vector.load %arg4[%c0_4, %c0_5] : memref<64x1xf32, #tpu.memory_space<vmem>>, vector<64x1xf32>
    %5 = vector.broadcast %4 : vector<64x1xf32> to vector<64x128xf32>
    %6 = arith.addf %3, %5 : vector<64x128xf32>
    %cst_6 = arith.constant 0.000000e+00 : f32
    %7 = vector.broadcast %cst_6 : f32 to vector<64x128xf32>
    %8 = arith.cmpf oge, %6, %7 : vector<64x128xf32>
    %cst_7 = arith.constant 0.00999999977 : f32
    %9 = vector.broadcast %cst_7 : f32 to vector<64x128xf32>
    %10 = arith.mulf %9, %6 : vector<64x128xf32>
    %11 = arith.select %8, %6, %10 : vector<64x128xi1>, vector<64x128xf32>
    %12 = arith.truncf %11 : vector<64x128xf32> to vector<64x128xbf16>
    %c0_8 = arith.constant 0 : index
    %c0_9 = arith.constant 0 : index
    %c0_10 = arith.constant 0 : index
    %13 = vector.load %arg5[%c0_8, %c0_9, %c0_10] : memref<1x64x128xbf16, #tpu.memory_space<vmem>>, vector<1x64x128xbf16>
    %14 = vector.shape_cast %13 : vector<1x64x128xbf16> to vector<64x128xbf16>
    %15 = vector.shape_cast %12 : vector<64x128xbf16> to vector<1x64x128xbf16>
    tpu.vector_store %arg5[%c0_8, %c0_9, %c0_10], %15 {strides = array<i32>} : memref<1x64x128xbf16, #tpu.memory_space<vmem>>, vector<1x64x128xbf16>,
    return
  }
  func.func @transform_0(%arg0: i32, %arg1: i32) -> (i32, i32, i32) {
    %c0_i32 = arith.constant 0 : i32
    %c0_i32_0 = arith.constant 0 : i32
    return %arg0, %c0_i32, %arg1 : i32, i32, i32
  }
  func.func @transform_1(%arg0: i32, %arg1: i32) -> (i32, i32) {
    %c0_i32 = arith.constant 0 : i32
    %c0_i32_0 = arith.constant 0 : i32
    %c0_i32_1 = arith.constant 0 : i32
    return %c0_i32, %c0_i32_0 : i32, i32
  }
  func.func @transform_2(%arg0: i32, %arg1: i32) -> (i32, i32) {
    %c0_i32 = arith.constant 0 : i32
    %c0_i32_0 = arith.constant 0 : i32
    %c0_i32_1 = arith.constant 0 : i32
    return %c0_i32, %c0_i32_0 : i32, i32
  }
  func.func @transform_3(%arg0: i32, %arg1: i32) -> (i32, i32, i32) {
    %c0_i32 = arith.constant 0 : i32
    %c0_i32_0 = arith.constant 0 : i32
    return %arg0, %c0_i32, %arg1 : i32, i32, i32
  }
}

module attributes {stable_mosaic.version = 11 : i64} {
  func.func @_conv_mm_kernel(%arg0: i32, %arg1: i32, %arg2: memref<1x144x384xbf16, #tpu.memory_space<vmem>>, %arg3: memref<27x144xbf16, #tpu.memory_space<vmem>>, %arg4: memref<27x1xf32, #tpu.memory_space<vmem>>, %arg5: memref<1x27x384xf32, #tpu.memory_space<vmem>>) attributes {dimension_semantics = [#tpu.dimension_semantics<parallel>, #tpu.dimension_semantics<parallel>], iteration_bounds = array<i64: 2, 1>, scalar_prefetch = 0 : i64, scratch_operands = 0 : i64, tpu.core_type = #tpu.core_type<tc>, window_params = [{transform_indices = @transform_0, window_bounds = array<i64: 1, 144, 384>}, {pipeline_mode = #tpu.pipeline_mode<synchronous>, transform_indices = @transform_1, window_bounds = array<i64: 27, 144>}, {pipeline_mode = #tpu.pipeline_mode<synchronous>, transform_indices = @transform_2, window_bounds = array<i64: 27, 1>}, {transform_indices = @transform_3, window_bounds = array<i64: 1, 27, 384>}]} {
    %c0 = arith.constant 0 : index
    %c0_0 = arith.constant 0 : index
    %0 = vector.load %arg3[%c0, %c0_0] : memref<27x144xbf16, #tpu.memory_space<vmem>>, vector<27x144xbf16>
    %c0_1 = arith.constant 0 : index
    %c0_2 = arith.constant 0 : index
    %c0_3 = arith.constant 0 : index
    %1 = vector.load %arg2[%c0_1, %c0_2, %c0_3] : memref<1x144x384xbf16, #tpu.memory_space<vmem>>, vector<1x144x384xbf16>
    %2 = vector.shape_cast %1 : vector<1x144x384xbf16> to vector<144x384xbf16>
    %cst = arith.constant dense<0.000000e+00> : vector<27x384xf32>
    %3 = tpu.matmul %0, %2, %cst {dimension_numbers = #tpu.dot_dimension_numbers<[1], [0], [0], [1], [0, 0, 1, 1], [], []>} : vector<27x144xbf16>, vector<144x384xbf16>, vector<27x384xf32> -> vector<27x384xf32>
    %c0_4 = arith.constant 0 : index
    %c0_5 = arith.constant 0 : index
    %4 = vector.load %arg4[%c0_4, %c0_5] : memref<27x1xf32, #tpu.memory_space<vmem>>, vector<27x1xf32>
    %5 = vector.broadcast %4 : vector<27x1xf32> to vector<27x384xf32>
    %6 = arith.addf %3, %5 : vector<27x384xf32>
    %7 = arith.negf %6 : vector<27x384xf32>
    %8 = math.exp %7 : vector<27x384xf32>
    %cst_6 = arith.constant 1.000000e+00 : f32
    %9 = vector.broadcast %cst_6 : f32 to vector<27x384xf32>
    %10 = arith.addf %9, %8 : vector<27x384xf32>
    %11 = arith.divf %9, %10 : vector<27x384xf32>
    %c0_7 = arith.constant 0 : index
    %c0_8 = arith.constant 0 : index
    %c0_9 = arith.constant 0 : index
    %12 = vector.load %arg5[%c0_7, %c0_8, %c0_9] : memref<1x27x384xf32, #tpu.memory_space<vmem>>, vector<1x27x384xf32>
    %13 = vector.shape_cast %12 : vector<1x27x384xf32> to vector<27x384xf32>
    %14 = vector.shape_cast %11 : vector<27x384xf32> to vector<1x27x384xf32>
    tpu.vector_store %arg5[%c0_7, %c0_8, %c0_9], %14 {strides = array<i32>} : memref<1x27x384xf32, #tpu.memory_space<vmem>>, vector<1x27x384xf32>,
    return
  }
  func.func @transform_0(%arg0: i32, %arg1: i32) -> (i32, i32, i32) {
    %c0_i32 = arith.constant 0 : i32
    %c0_i32_0 = arith.constant 0 : i32
    return %arg0, %c0_i32, %arg1 : i32, i32, i32
  }
  func.func @transform_1(%arg0: i32, %arg1: i32) -> (i32, i32) {
    %c0_i32 = arith.constant 0 : i32
    %c0_i32_0 = arith.constant 0 : i32
    %c0_i32_1 = arith.constant 0 : i32
    return %c0_i32, %c0_i32_0 : i32, i32
  }
  func.func @transform_2(%arg0: i32, %arg1: i32) -> (i32, i32) {
    %c0_i32 = arith.constant 0 : i32
    %c0_i32_0 = arith.constant 0 : i32
    %c0_i32_1 = arith.constant 0 : i32
    return %c0_i32, %c0_i32_0 : i32, i32
  }
  func.func @transform_3(%arg0: i32, %arg1: i32) -> (i32, i32, i32) {
    %c0_i32 = arith.constant 0 : i32
    %c0_i32_0 = arith.constant 0 : i32
    return %arg0, %c0_i32, %arg1 : i32, i32, i32
  }
}

</mosaic_0001>

<llo_original>
// kernel: landsat_cvae_forward.6
$region0: #{landsat_cvae_forward.6}
  #allocation0 [shape = 'u32[]', space=smem, size = 0x4, offset = 0x4, fixed_abs, tag = 'smem constant byte address 0x4 - core index']
  #allocation1 [shape = 'u32[72,128]{1,0:T(1,128)}', space=vmem, size = 0x9000, scoped, tag = 'internal scratch']
  %s0 = inlined_call_operand.vmem [shape: bf16[2,48,4096], index: 0, kind: input, shape index: {}]
  %s1 = inlined_call_operand.vmem [shape: bf16[8,48], index: 1, kind: input, shape index: {}]
  %s2 = inlined_call_operand.vmem [shape: f32[8,1], index: 2, kind: input, shape index: {}]
  %s3 = inlined_call_operand.vmem [shape: bf16[2,8,4096], index: 3, kind: output, shape index: {}]
  %s4 = sld [smem:[#allocation0]]
  $region68: #{landsat_cvae_forward.6} parent=0
    _
  %s6 = ssub.s32 1, %s4
  %s7 = scalar_select 0, %s6, %s4
  $region1: #{landsat_cvae_forward.6} parent=0
    #allocation2 [shape = 'u8[196608]{0}', space=vmem, size = 0x30000, scoped, tag = 'input window, operand 0']
    loop: start=0, step=1, limit=10
    $region2: #{landsat_cvae_forward.6} parent=1 // loop_pre_header
      _
    $region3: #{landsat_cvae_forward.6} parent=1 // loop_header
      %s9 = sphi 0, %s13
      %p10 = scmp.ge.s32.totalorder %s9, 10
      %s16 = sphi 0, %s28
      %s17 = sphi 0, %s24
      %s18 = sphi 0, %s16
      %s19 = sphi 0, %s17
      %s20 = sphi 0, %s18
      %s21 = sphi 0, %s19
      %s33 = sphi 0, %s35
      %s36 = sphi 0, %s33
      %s37 = sphi 0, %s36
      %s53 = sphi 0, %s37
      %s57 = sphi 0, %s57
      %s59 = sphi 0, %s57
      %s60 = sphi 0, %s59
      %s74 = sphi 0, %s60
      %s78 = sphi 0, %s78
      %s80 = sphi 0, %s78
      %s81 = sphi 0, %s80
      %s95 = sphi 0, %s81
      %s103 = sphi 0, %s105
      %s106 = sphi 0, %s103
      %s107 = sphi 0, %s106
      %s123 = sphi 0, %s107
    $region4: #{landsat_cvae_forward.6} parent=1 // loop_header_branch
      %12 = sbr.rel (%p10) target = $region8
    $region5: #{landsat_cvae_forward.6} parent=1 // loop_body
      %s14 = ssub.s32 %s9, 1
      %s15 = ssub.s32 %s9, 2
      %s22 = sadd.s32 1, %s17
      %p23 = scmp.ge.s32.totalorder %s22, 4
      %s24 = scalar_select %p23, 0, %s22
      %s25 = sadd.s32 1, %s16
      %s26 = scalar_select %p23, %s25, %s16
      %p27 = scmp.ge.s32.totalorder %s26, 2
      %s28 = scalar_select %p27, 0, %s26
      %s29 = ssub.s32 %s16, %s28
      %s30 = ssub.s32 %s17, %s24
      %s31 = sor.u32 %s29, %s30
      %p32 = scmp.eq.s32.totalorder %s31, 0
      %s34 = sadd.s32 %s33, 1
      %s35 = scalar_select %p32, %s33, %s34
      %p38 = pneg %p32
      %p39 = scmp.eq.s32.totalorder %s9, 7
      %p40 = por %p38, %p39
      %p41 = scmp.ne.s32.totalorder %s33, %s36
      %p42 = scmp.eq.s32.totalorder %s9, 0
      %p43 = por %p41, %p42
      %p44 = scmp.ne.s32.totalorder %s33, %s36
      %p45 = scmp.eq.s32.totalorder %s14, 7
      %p46 = por %p44, %p45
      %p47 = scmp.ne.s32.totalorder %s36, %s37
      %p48 = scmp.eq.s32.totalorder %s14, 0
      %p49 = por %p47, %p48
      %p50 = scmp.ne.s32.totalorder %s36, %s37
      %p51 = scmp.eq.s32.totalorder %s15, 7
      %p52 = por %p50, %p51
      %p54 = scmp.ne.s32.totalorder %s37, %s53
      %p55 = scmp.eq.s32.totalorder %s15, 0
      %p56 = por %p54, %p55
      %s58 = sadd.s32 %s57, 1
      %p61 = scmp.eq.s32.totalorder %s9, 7
      %p62 = scmp.ne.s32.totalorder %s57, %s59
      %p63 = scmp.eq.s32.totalorder %s9, 0
      %p64 = por %p62, %p63
      %p65 = scmp.ne.s32.totalorder %s57, %s59
      %p66 = scmp.eq.s32.totalorder %s14, 7
      %p67 = por %p65, %p66
      %p68 = scmp.ne.s32.totalorder %s59, %s60
      %p69 = scmp.eq.s32.totalorder %s14, 0
      %p70 = por %p68, %p69
      %p71 = scmp.ne.s32.totalorder %s59, %s60
      %p72 = scmp.eq.s32.totalorder %s15, 7
      %p73 = por %p71, %p72
      %p75 = scmp.ne.s32.totalorder %s60, %s74
      %p76 = scmp.eq.s32.totalorder %s15, 0
      %p77 = por %p75, %p76
      %s79 = sadd.s32 %s78, 1
      %p82 = scmp.eq.s32.totalorder %s9, 7
      %p83 = scmp.ne.s32.totalorder %s78, %s80
      %p84 = scmp.eq.s32.totalorder %s9, 0
      %p85 = por %p83, %p84
      %p86 = scmp.ne.s32.totalorder %s78, %s80
      %p87 = scmp.eq.s32.totalorder %s14, 7
      %p88 = por %p86, %p87
      %p89 = scmp.ne.s32.totalorder %s80, %s81
      %p90 = scmp.eq.s32.totalorder %s14, 0
      %p91 = por %p89, %p90
      %p92 = scmp.ne.s32.totalorder %s80, %s81
      %p93 = scmp.eq.s32.totalorder %s15, 7
      %p94 = por %p92, %p93
      %p96 = scmp.ne.s32.totalorder %s81, %s95
      %p97 = scmp.eq.s32.totalorder %s15, 0
      %p98 = por %p96, %p97
      %s99 = ssub.s32 %s16, %s28
      %s100 = ssub.s32 %s17, %s24
      %s101 = sor.u32 %s99, %s100
      %p102 = scmp.eq.s32.totalorder %s101, 0
      %s104 = sadd.s32 %s103, 1
      %s105 = scalar_select %p102, %s103, %s104
      %p108 = pneg %p102
      %p109 = scmp.eq.s32.totalorder %s9, 7
      %p110 = por %p108, %p109
      %p111 = scmp.ne.s32.totalorder %s103, %s106
      %p112 = scmp.eq.s32.totalorder %s9, 0
      %p113 = por %p111, %p112
      %p114 = scmp.ne.s32.totalorder %s103, %s106
      %p115 = scmp.eq.s32.totalorder %s14, 7
      %p116 = por %p114, %p115
      %p117 = scmp.ne.s32.totalorder %s106, %s107
      %p118 = scmp.eq.s32.totalorder %s14, 0
      %p119 = por %p117, %p118
      %p120 = scmp.ne.s32.totalorder %s106, %s107
      %p121 = scmp.eq.s32.totalorder %s15, 7
      %p122 = por %p120, %p121
      %p124 = scmp.ne.s32.totalorder %s107, %s123
      %p125 = scmp.eq.s32.totalorder %s15, 0
      %p126 = por %p124, %p125
      %p127 = scmp.le.s32.totalorder 1, %s9
      %p128 = scmp.lt.s32.totalorder %s9, 9
      %p129 = pnand %p127, %p128
      %p130 = pneg %p129
      // Predicated region
      $region9: #{landsat_cvae_forward.6} parent=5 // pred_check
        _
      $region10: #{landsat_cvae_forward.6} parent=5 // pred_check_branch
        %132 = sbr.rel (%p129) target = $region12
      $region11: #{landsat_cvae_forward.6} parent=5 // pred_region
        %s133 = ssub.s32 %s9, 1
        // Predicated region
        $region13: #{landsat_cvae_forward.6} parent=11 // pred_check
          %p134 = pneg %p70
        $region14: #{landsat_cvae_forward.6} parent=11 // pred_check_branch
          %136 = sbr.rel (%p134) target = $region16
        $region15: #{landsat_cvae_forward.6} parent=11 // pred_region
          _
        $region16: #{landsat_cvae_forward.6} parent=11 // pred_fallthru
          _
        // Predicated region
        $region17: #{landsat_cvae_forward.6} parent=11 // pred_check
          %p137 = pneg %p91
        $region18: #{landsat_cvae_forward.6} parent=11 // pred_check_branch
          %139 = sbr.rel (%p137) target = $region20
        $region19: #{landsat_cvae_forward.6} parent=11 // pred_region
          _
        $region20: #{landsat_cvae_forward.6} parent=11 // pred_fallthru
          _
      $region12: #{landsat_cvae_forward.6} parent=5 // pred_fallthru
        _
      %p140 = scmp.lt.s32.totalorder %s9, 8
      // Predicated region
      $region21: #{landsat_cvae_forward.6} parent=5 // pred_check
        %p141 = pneg %p140
      $region22: #{landsat_cvae_forward.6} parent=5 // pred_check_branch
        %143 = sbr.rel (%p141) target = $region24
      $region23: #{landsat_cvae_forward.6} parent=5 // pred_region
        // Predicated region
        $region25: #{landsat_cvae_forward.6} parent=23 // pred_check
          %p144 = pneg %p43
        $region26: #{landsat_cvae_forward.6} parent=23 // pred_check_branch
          %146 = sbr.rel (%p144) target = $region28
        $region27: #{landsat_cvae_forward.6} parent=23 // pred_region
          %s147 = sand.u32 %s33, 1
          %s148 = sand.u32 %s33, 1
          %s149 = smul.addr %s148, 192
          %s150 = scalar_lea.vmem [#allocation2], %s149
          %s151 = smul.u32 8, %s17
          %s152 = smul.addr %s16, 192
          %s153 = sadd.s32 %s151, %s152
          %s154 = smul.addr %s153, 4
          %s155 = scalar_lea.vmem %s0, %s154
          // Predicated region
          $region29: #{landsat_cvae_forward.6} parent=27 // pred_check
            _
          $region30: #{landsat_cvae_forward.6} parent=27 // pred_check_branch
            %157 = sbr.rel (0) target = $region32
          $region31: #{landsat_cvae_forward.6} parent=27 // pred_region
            // Predicated region
            $region33: #{landsat_cvae_forward.6} parent=31 // pred_check
              _
            $region34: #{landsat_cvae_forward.6} parent=31 // pred_check_branch
              %159 = sbr.rel (0) target = $region36
            $region35: #{landsat_cvae_forward.6} parent=31 // pred_region
              loop: start=0, step=1, limit=1
              $region37: #{landsat_cvae_forward.6} parent=35 // loop_pre_header
                _
              $region38: #{landsat_cvae_forward.6} parent=35 // loop_header
                %s161 = sphi 0, %s165
                %p162 = scmp.ge.s32.totalorder %s161, 1
                %s166 = sphi %s155, %s155
                %s167 = sphi %s150, %s150
              $region39: #{landsat_cvae_forward.6} parent=35 // loop_header_branch
                %164 = sbr.rel (%p162) target = $region43
              $region40: #{landsat_cvae_forward.6} parent=35 // loop_body
                %v168 = vld [vmem:[%s166] sm:$0xff]
                %169 = vst [vmem:[%s167] sm:$0xff] %v168
                %v170 = vld [vmem:[%s166 + $0x8] sm:$0xff]
                %171 = vst [vmem:[%s167 + $0x8] sm:$0xff] %v170
                %v172 = vld [vmem:[%s166 + $0x10] sm:$0xff]
                %173 = vst [vmem:[%s167 + $0x10] sm:$0xff] %v172
                %v174 = vld [vmem:[%s166 + $0x18] sm:$0xff]
                %175 = vst [vmem:[%s167 + $0x18] sm:$0xff] %v174
                %v176 = vld [vmem:[%s166 + $0x80] sm:$0xff]
                %177 = vst [vmem:[%s167 + $0x20] sm:$0xff] %v176
                %v178 = vld [vmem:[%s166 + $0x88] sm:$0xff]
                %179 = vst [vmem:[%s167 + $0x28] sm:$0xff] %v178
                %v180 = vld [vmem:[%s166 + $0x90] sm:$0xff]
                %181 = vst [vmem:[%s167 + $0x30] sm:$0xff] %v180
                %v182 = vld [vmem:[%s166 + $0x98] sm:$0xff]
                %183 = vst [vmem:[%s167 + $0x38] sm:$0xff] %v182
                %v184 = vld [vmem:[%s166 + $0x100] sm:$0xff]
                %185 = vst [vmem:[%s167 + $0x40] sm:$0xff] %v184
                %v186 = vld [vmem:[%s166 + $0x108] sm:$0xff]
                %187 = vst [vmem:[%s167 + $0x48] sm:$0xff] %v186
                %v188 = vld [vmem:[%s166 + $0x110] sm:$0xff]
                %189 = vst [vmem:[%s167 + $0x50] sm:$0xff] %v188
                %v190 = vld [vmem:[%s166 + $0x118] sm:$0xff]
                %191 = vst [vmem:[%s167 + $0x58] sm:$0xff] %v190
                %v192 = vld [vmem:[%s166 + $0x180] sm:$0xff]
                %193 = vst [vmem:[%s167 + $0x60] sm:$0xff] %v192
                %v194 = vld [vmem:[%s166 + $0x188] sm:$0xff]
                %195 = vst [vmem:[%s167 + $0x68] sm:$0xff] %v194
                %v196 = vld [vmem:[%s166 + $0x190] sm:$0xff]
                %197 = vst [vmem:[%s167 + $0x70] sm:$0xff] %v196
                %v198 = vld [vmem:[%s166 + $0x198] sm:$0xff]
                %199 = vst [vmem:[%s167 + $0x78] sm:$0xff] %v198
                %v200 = vld [vmem:[%s166 + $0x200] sm:$0xff]
                %201 = vst [vmem:[%s167 + $0x80] sm:$0xff] %v200
                %v202 = vld [vmem:[%s166 + $0x208] sm:$0xff]
                %203 = vst [vmem:[%s167 + $0x88] sm:$0xff] %v202
                %v204 = vld [vmem:[%s166 + $0x210] sm:$0xff]
                %205 = vst [vmem:[%s167 + $0x90] sm:$0xff] %v204
                %v206 = vld [vmem:[%s166 + $0x218] sm:$0xff]
                %207 = vst [vmem:[%s167 + $0x98] sm:$0xff] %v206
                %v208 = vld [vmem:[%s166 + $0x280] sm:$0xff]
                %209 = vst [vmem:[%s167 + $0xa0] sm:$0xff] %v208
                %v210 = vld [vmem:[%s166 + $0x288] sm:$0xff]
                %211 = vst [vmem:[%s167 + $0xa8] sm:$0xff] %v210
                %v212 = vld [vmem:[%s166 + $0x290] sm:$0xff]
                %213 = vst [vmem:[%s167 + $0xb0] sm:$0xff] %v212
                %v214 = vld [vmem:[%s166 + $0x298] sm:$0xff]
                %215 = vst [vmem:[%s167 + $0xb8] sm:$0xff] %v214
              $region41: #{landsat_cvae_forward.6} parent=35 // loop_footer
                %s165 = sadd.s32 1, %s161
              $region42: #{landsat_cvae_forward.6} parent=35 // loop_footer_branch
                %160 = sbr.rel target = $region38
              $region43: #{landsat_cvae_forward.6} parent=35 // loop_exit
                _
            $region36: #{landsat_cvae_forward.6} parent=31 // pred_fallthru
              _
            // Predicated region
            $region44: #{landsat_cvae_forward.6} parent=31 // pred_check
              _
            $region45: #{landsat_cvae_forward.6} parent=31 // pred_check_branch
              %217 = sbr.rel target = $region47
            $region46: #{landsat_cvae_forward.6} parent=31 // pred_region
              _
            $region47: #{landsat_cvae_forward.6} parent=31 // pred_fallthru
              _
          $region32: #{landsat_cvae_forward.6} parent=27 // pred_fallthru
            _
          %218 = vnop
        $region28: #{landsat_cvae_forward.6} parent=23 // pred_fallthru
          _
      $region24: #{landsat_cvae_forward.6} parent=5 // pred_fallthru
        _
      %p219 = scmp.le.s32.totalorder 1, %s9
      %p220 = scmp.lt.s32.totalorder %s9, 9
      %p221 = pnand %p219, %p220
      %p222 = pneg %p221
      // Predicated region
      $region48: #{landsat_cvae_forward.6} parent=5 // pred_check
        _
      $region49: #{landsat_cvae_forward.6} parent=5 // pred_check_branch
        %224 = sbr.rel (%p221) target = $region51
      $region50: #{landsat_cvae_forward.6} parent=5 // pred_region
        %s225 = ssub.s32 %s9, 1
        %s226 = sand.u32 %s36, 1
        %s227 = sand.u32 %s36, 1
        %s228 = smul.addr %s227, 192
        %s229 = scalar_lea.vmem [#allocation2], %s228
        // Predicated region
        $region52: #{landsat_cvae_forward.6} parent=50 // pred_check
          %p230 = pneg %p49
        $region53: #{landsat_cvae_forward.6} parent=50 // pred_check_branch
          %232 = sbr.rel (%p230) target = $region55
        $region54: #{landsat_cvae_forward.6} parent=50 // pred_region
          _
        $region55: #{landsat_cvae_forward.6} parent=50 // pred_fallthru
          _
        %s233 = sand.u32 %s36, 1
        %s234 = sand.u32 %s36, 1
        %s235 = smul.addr %s234, 192
        %s236 = scalar_lea.vmem [#allocation2], %s235
        %p237 = pneg %p49
        %p238 = pneg %p46
        %p239 = pneg %p70
        %p240 = pneg %p67
        %p241 = pneg %p91
        %p242 = pneg %p88
        %p243 = pneg %p119
        %p244 = pneg %p116
        %s245 = smul.u32 8, %s19
        %p246 = scmp.lt.s32.totalorder %s18, 1
        %s247 = scalar_select %p246, %s18, 1
        %p248 = scmp.lt.s32.totalorder %s245, 31
        %s249 = scalar_select %p248, %s245, 31
        %s250 = smul.addr %s247, 32
        %s251 = sadd.s32 %s249, %s250
        %s252 = smul.addr %s251, 4
        %s253 = scalar_lea.vmem %s3, %s252
        %s254 = smul.u32 8, %s19
        %s255 = smul.u32 8, %s19
        %p256 = scmp.lt.s32.totalorder %s18, 1
        %s257 = scalar_select %p256, %s18, 1
        %p258 = scmp.lt.s32.totalorder %s255, 31
        %s259 = scalar_select %p258, %s255, 31
        %s260 = smul.addr %s257, 32
        %s261 = sadd.s32 %s259, %s260
        %s262 = smul.addr %s261, 4
        %s263 = scalar_lea.vmem %s3, %s262
        %s264 = smul.u32 8, %s19
        %v266 = vld [vmem:[%s1] sm:$0xf]
        %v267 = vld [vmem:[%s229] sm:$0xff]
        %v268 = vld [vmem:[%s229 + $0x8] sm:$0xff]
        %v269 = vld [vmem:[%s229 + $0x10] sm:$0xff]
        %v270 = vld [vmem:[%s229 + $0x18] sm:$0xff]
        %v271 = vld [vmem:[%s229 + $0x20] sm:$0xff]
        %v272 = vld [vmem:[%s229 + $0x28] sm:$0xff]
        %v273 = vld [vmem:[%s229 + $0x30] sm:$0xff]
        %v274 = vld [vmem:[%s229 + $0x38] sm:$0xff]
        %v275 = vld [vmem:[%s229 + $0x40] sm:$0xff]
        %v276 = vld [vmem:[%s229 + $0x48] sm:$0xff]
        %v277 = vld [vmem:[%s229 + $0x50] sm:$0xff]
        %v278 = vld [vmem:[%s229 + $0x58] sm:$0xff]
        %v279 = vld [vmem:[%s229 + $0x60] sm:$0xff]
        %v280 = vld [vmem:[%s229 + $0x68] sm:$0xff]
        %v281 = vld [vmem:[%s229 + $0x70] sm:$0xff]
        %v282 = vld [vmem:[%s229 + $0x78] sm:$0xff]
        %v283 = vld [vmem:[%s229 + $0x80] sm:$0xff]
        %v284 = vld [vmem:[%s229 + $0x88] sm:$0xff]
        %v285 = vld [vmem:[%s229 + $0x90] sm:$0xff]
        %v286 = vld [vmem:[%s229 + $0x98] sm:$0xff]
        %v287 = vld [vmem:[%s229 + $0xa0] sm:$0xff]
        %v288 = vld [vmem:[%s229 + $0xa8] sm:$0xff]
        %v289 = vld [vmem:[%s229 + $0xb0] sm:$0xff]
        %v290 = vld [vmem:[%s229 + $0xb8] sm:$0xff]
        %v291 = vld [vmem:[%s2] sm:$0xff]
        %293 = vset.pattern.permute.xlu0 0
        %294 = vperm.xlu0 %293, %v291
        %v295 = vpop.permute.xlu0 %294
        %v321 = vunpack.c.l.b16 %v267
        %v322 = vunpack.c.h.b16 %v267
        %v323 = vunpack.c.l.b16 %v268
        %v324 = vunpack.c.h.b16 %v268
        %v325 = vunpack.c.l.b16 %v269
        %v326 = vunpack.c.h.b16 %v269
        %v327 = vunpack.c.l.b16 %v270
        %v328 = vunpack.c.h.b16 %v270
        %v329 = vunpack.c.l.b16 %v271
        %v330 = vunpack.c.h.b16 %v271
        %v331 = vunpack.c.l.b16 %v272
        %v332 = vunpack.c.h.b16 %v272
        %v333 = vunpack.c.l.b16 %v273
        %v334 = vunpack.c.h.b16 %v273
        %v335 = vunpack.c.l.b16 %v274
        %v336 = vunpack.c.h.b16 %v274
        %v337 = vunpack.c.l.b16 %v275
        %v338 = vunpack.c.h.b16 %v275
        %v339 = vunpack.c.l.b16 %v276
        %v340 = vunpack.c.h.b16 %v276
        %v341 = vunpack.c.l.b16 %v277
        %v342 = vunpack.c.h.b16 %v277
        %v343 = vunpack.c.l.b16 %v278
        %v344 = vunpack.c.h.b16 %v278
        %v345 = vunpack.c.l.b16 %v279
        %v346 = vunpack.c.h.b16 %v279
        %v347 = vunpack.c.l.b16 %v280
        %v348 = vunpack.c.h.b16 %v280
        %v349 = vunpack.c.l.b16 %v281
        %v350 = vunpack.c.h.b16 %v281
        %v351 = vunpack.c.l.b16 %v282
        %v352 = vunpack.c.h.b16 %v282
        %v353 = vunpack.c.l.b16 %v283
        %v354 = vunpack.c.h.b16 %v283
        %v355 = vunpack.c.l.b16 %v284
        %v356 = vunpack.c.h.b16 %v284
        %v357 = vunpack.c.l.b16 %v285
        %v358 = vunpack.c.h.b16 %v285
        %v359 = vunpack.c.l.b16 %v286
        %v360 = vunpack.c.h.b16 %v286
        %v361 = vunpack.c.l.b16 %v287
        %v362 = vunpack.c.h.b16 %v287
        %v363 = vunpack.c.l.b16 %v288
        %v364 = vunpack.c.h.b16 %v288
        %v365 = vunpack.c.l.b16 %v289
        %v366 = vunpack.c.h.b16 %v289
        %v367 = vunpack.c.l.b16 %v290
        %v368 = vunpack.c.h.b16 %v290
        %v369 = vpack.c.b16 %v329, %v321
        %v370 = vpack.c.b16 %v330, %v322
        %v371 = vpack.c.b16 %v331, %v323
        %v372 = vpack.c.b16 %v332, %v324
        %v373 = vpack.c.b16 %v333, %v325
        %v374 = vpack.c.b16 %v334, %v326
        %v375 = vpack.c.b16 %v335, %v327
        %v376 = vpack.c.b16 %v336, %v328
        %v377 = vpack.c.b16 %v345, %v337
        %v378 = vpack.c.b16 %v346, %v338
        %v379 = vpack.c.b16 %v347, %v339
        %v380 = vpack.c.b16 %v348, %v340
        %v381 = vpack.c.b16 %v349, %v341
        %v382 = vpack.c.b16 %v350, %v342
        %v383 = vpack.c.b16 %v351, %v343
        %v384 = vpack.c.b16 %v352, %v344
        %v385 = vpack.c.b16 %v361, %v353
        %v386 = vpack.c.b16 %v362, %v354
        %v387 = vpack.c.b16 %v363, %v355
        %v388 = vpack.c.b16 %v364, %v356
        %v389 = vpack.c.b16 %v365, %v357
        %v390 = vpack.c.b16 %v366, %v358
        %v391 = vpack.c.b16 %v367, %v359
        %v392 = vpack.c.b16 %v368, %v360
        %vm417 = vcmask 392192
        %v419 = vsel %vm417, %v266, 0
        %421 = vmatpush.bf16.msra.mxu0 0
        %422 = vmatpush.bf16.msra.mxu0 0
        %423 = vmatpush.bf16.msra.mxu0 0
        %424 = vmatpush.bf16.msra.mxu0 0
        %425 = vmatpush.bf16.msra.mxu0 0
        %426 = vmatpush.bf16.msra.mxu0 %v385
        %427 = vmatpush.bf16.msra.mxu0 %v377
        %428 = vmatpush.bf16.msra.mxu0 %v369
        %429 = vmatmul.bf16.gmra.mxu0 %v419
        %v430 = vpop.f32.mrf.mxu0
        %v431 = vadd.f32 %v295, %v430
        %v432 = vpop.f32.mrf.mxu0
        %433 = vdwg.mxu0
        %434 = vmatpush.bf16.msra.mxu0 0
        %435 = vmatpush.bf16.msra.mxu0 0
        %436 = vmatpush.bf16.msra.mxu0 0
        %437 = vmatpush.bf16.msra.mxu0 0
        %438 = vmatpush.bf16.msra.mxu0 0
        %439 = vmatpush.bf16.msra.mxu0 %v386
        %440 = vmatpush.bf16.msra.mxu0 %v378
        %441 = vmatpush.bf16.msra.mxu0 %v370
        %442 = vmatmul.bf16.gmra.mxu0 %v419
        %v443 = vpop.f32.mrf.mxu0
        %v444 = vadd.f32 %v295, %v443
        %v445 = vpop.f32.mrf.mxu0
        %446 = vdwg.mxu0
        %447 = vmatpush.bf16.msra.mxu0 0
        %448 = vmatpush.bf16.msra.mxu0 0
        %449 = vmatpush.bf16.msra.mxu0 0
        %450 = vmatpush.bf16.msra.mxu0 0
        %451 = vmatpush.bf16.msra.mxu0 0
        %452 = vmatpush.bf16.msra.mxu0 %v387
        %453 = vmatpush.bf16.msra.mxu0 %v379
        %454 = vmatpush.bf16.msra.mxu0 %v371
        %455 = vmatmul.bf16.gmra.mxu0 %v419
        %v456 = vpop.f32.mrf.mxu0
        %v457 = vadd.f32 %v295, %v456
        %v458 = vpop.f32.mrf.mxu0
        %459 = vdwg.mxu0
        %460 = vmatpush.bf16.msra.mxu0 0
        %461 = vmatpush.bf16.msra.mxu0 0
        %462 = vmatpush.bf16.msra.mxu0 0
        %463 = vmatpush.bf16.msra.mxu0 0
        %464 = vmatpush.bf16.msra.mxu0 0
        %465 = vmatpush.bf16.msra.mxu0 %v388
        %466 = vmatpush.bf16.msra.mxu0 %v380
        %467 = vmatpush.bf16.msra.mxu0 %v372
        %468 = vmatmul.bf16.gmra.mxu0 %v419
        %v469 = vpop.f32.mrf.mxu0
        %v470 = vadd.f32 %v295, %v469
        %v471 = vpop.f32.mrf.mxu0
        %472 = vdwg.mxu0
        %473 = vmatpush.bf16.msra.mxu0 0
        %474 = vmatpush.bf16.msra.mxu0 0
        %475 = vmatpush.bf16.msra.mxu0 0
        %476 = vmatpush.bf16.msra.mxu0 0
        %477 = vmatpush.bf16.msra.mxu0 0
        %478 = vmatpush.bf16.msra.mxu0 %v389
        %479 = vmatpush.bf16.msra.mxu0 %v381
        %480 = vmatpush.bf16.msra.mxu0 %v373
        %481 = vmatmul.bf16.gmra.mxu0 %v419
        %v482 = vpop.f32.mrf.mxu0
        %v483 = vadd.f32 %v295, %v482
        %v484 = vpop.f32.mrf.mxu0
        %485 = vdwg.mxu0
        %486 = vmatpush.bf16.msra.mxu0 0
        %487 = vmatpush.bf16.msra.mxu0 0
        %488 = vmatpush.bf16.msra.mxu0 0
        %489 = vmatpush.bf16.msra.mxu0 0
        %490 = vmatpush.bf16.msra.mxu0 0
        %491 = vmatpush.bf16.msra.mxu0 %v390
        %492 = vmatpush.bf16.msra.mxu0 %v382
        %493 = vmatpush.bf16.msra.mxu0 %v374
        %494 = vmatmul.bf16.gmra.mxu0 %v419
        %v495 = vpop.f32.mrf.mxu0
        %v496 = vadd.f32 %v295, %v495
        %v497 = vpop.f32.mrf.mxu0
        %498 = vdwg.mxu0
        %499 = vmatpush.bf16.msra.mxu0 0
        %500 = vmatpush.bf16.msra.mxu0 0
        %501 = vmatpush.bf16.msra.mxu0 0
        %502 = vmatpush.bf16.msra.mxu0 0
        %503 = vmatpush.bf16.msra.mxu0 0
        %504 = vmatpush.bf16.msra.mxu0 %v391
        %505 = vmatpush.bf16.msra.mxu0 %v383
        %506 = vmatpush.bf16.msra.mxu0 %v375
        %507 = vmatmul.bf16.gmra.mxu0 %v419
        %v508 = vpop.f32.mrf.mxu0
        %v509 = vadd.f32 %v295, %v508
        %v510 = vpop.f32.mrf.mxu0
        %511 = vdwg.mxu0
        %512 = vmatpush.bf16.msra.mxu0 0
        %513 = vmatpush.bf16.msra.mxu0 0
        %514 = vmatpush.bf16.msra.mxu0 0
        %515 = vmatpush.bf16.msra.mxu0 0
        %516 = vmatpush.bf16.msra.mxu0 0
        %517 = vmatpush.bf16.msra.mxu0 %v392
        %518 = vmatpush.bf16.msra.mxu0 %v384
        %519 = vmatpush.bf16.msra.mxu0 %v376
        %520 = vmatmul.bf16.gmra.mxu0 %v419
        %v521 = vpop.f32.mrf.mxu0
        %v522 = vadd.f32 %v295, %v521
        %v523 = vpop.f32.mrf.mxu0
        %524 = vdwg.mxu0
        %vm525 = vcmp.ge.f32.partialorder %v431, 0.0
        %vm526 = vcmp.ge.f32.partialorder %v444, 0.0
        %vm527 = vcmp.ge.f32.partialorder %v457, 0.0
        %vm528 = vcmp.ge.f32.partialorder %v470, 0.0
        %vm529 = vcmp.ge.f32.partialorder %v483, 0.0
        %vm530 = vcmp.ge.f32.partialorder %v496, 0.0
        %vm531 = vcmp.ge.f32.partialorder %v509, 0.0
        %vm532 = vcmp.ge.f32.partialorder %v522, 0.0
        %v533 = vmul.f32 %v431, 0.01
        %v534 = vmul.f32 %v444, 0.01
        %v535 = vmul.f32 %v457, 0.01
        %v536 = vmul.f32 %v470, 0.01
        %v537 = vmul.f32 %v483, 0.01
        %v538 = vmul.f32 %v496, 0.01
        %v539 = vmul.f32 %v509, 0.01
        %v540 = vmul.f32 %v522, 0.01
        %v541 = vsel %vm525, %v431, %v533
        %v542 = vsel %vm526, %v444, %v534
        %v543 = vsel %vm527, %v457, %v535
        %v544 = vsel %vm528, %v470, %v536
        %v545 = vsel %vm529, %v483, %v537
        %v546 = vsel %vm530, %v496, %v538
        %v547 = vsel %vm531, %v509, %v539
        %v548 = vsel %vm532, %v522, %v540
        %v549 = vpack.c.bf16 %v542, %v541
        %v550 = vpack.c.bf16 %v544, %v543
        %v551 = vpack.c.bf16 %v546, %v545
        %v552 = vpack.c.bf16 %v548, %v547
        %553 = vst [vmem:[%s263] sm:$0xff] %v549
        %554 = vst [vmem:[%s263 + $0x8] sm:$0xff] %v550
        %555 = vst [vmem:[%s263 + $0x10] sm:$0xff] %v551
        %556 = vst [vmem:[%s263 + $0x18] sm:$0xff] %v552
        %s557 = smul.u32 8, %s19
        %p558 = scmp.lt.s32.totalorder %s18, 1
        %s559 = scalar_select %p558, %s18, 1
        %p560 = scmp.lt.s32.totalorder %s557, 31
        %s561 = scalar_select %p560, %s557, 31
        %s562 = smul.addr %s559, 32
        %s563 = sadd.s32 %s561, %s562
        %s564 = smul.addr %s563, 4
        %s565 = scalar_lea.vmem %s3, %s564
        // Predicated region
        $region56: #{landsat_cvae_forward.6} parent=50 // pred_check
          %p566 = pneg %p116
        $region57: #{landsat_cvae_forward.6} parent=50 // pred_check_branch
          %568 = sbr.rel (%p566) target = $region59
        $region58: #{landsat_cvae_forward.6} parent=50 // pred_region
          %s569 = smul.u32 8, %s19
        $region59: #{landsat_cvae_forward.6} parent=50 // pred_fallthru
          _
      $region51: #{landsat_cvae_forward.6} parent=5 // pred_fallthru
        _
      %p570 = scmp.le.s32.totalorder 2, %s9
      // Predicated region
      $region60: #{landsat_cvae_forward.6} parent=5 // pred_check
        %p571 = pneg %p570
      $region61: #{landsat_cvae_forward.6} parent=5 // pred_check_branch
        %573 = sbr.rel (%p571) target = $region63
      $region62: #{landsat_cvae_forward.6} parent=5 // pred_region
        %s574 = ssub.s32 %s9, 2
        // Predicated region
        $region64: #{landsat_cvae_forward.6} parent=62 // pred_check
          %p575 = pneg %p122
        $region65: #{landsat_cvae_forward.6} parent=62 // pred_check_branch
          %577 = sbr.rel (%p575) target = $region67
        $region66: #{landsat_cvae_forward.6} parent=62 // pred_region
          %s578 = smul.u32 8, %s21
          %p579 = scmp.lt.s32.totalorder %s20, 1
          %s580 = scalar_select %p579, %s20, 1
          %p581 = scmp.lt.s32.totalorder %s578, 31
          %s582 = scalar_select %p581, %s578, 31
          %s583 = smul.addr %s580, 32
          %s584 = sadd.s32 %s582, %s583
          %s585 = smul.addr %s584, 4
          %s586 = scalar_lea.vmem %s3, %s585
        $region67: #{landsat_cvae_forward.6} parent=62 // pred_fallthru
          _
      $region63: #{landsat_cvae_forward.6} parent=5 // pred_fallthru
        _
    $region6: #{landsat_cvae_forward.6} parent=1 // loop_footer
      %s13 = sadd.s32 1, %s9
    $region7: #{landsat_cvae_forward.6} parent=1 // loop_footer_branch
      %8 = sbr.rel target = $region3
    $region8: #{landsat_cvae_forward.6} parent=1 // loop_exit
      _

// kernel: landsat_cvae_forward.7
$region0: #{landsat_cvae_forward.7}
  #allocation0 [shape = 'u32[]', space=smem, size = 0x4, offset = 0x4, fixed_abs, tag = 'smem constant byte address 0x4 - core index']
  #allocation1 [shape = 'u32[72,128]{1,0:T(1,128)}', space=vmem, size = 0x9000, scoped, tag = 'internal scratch']
  %s0 = inlined_call_operand.vmem [shape: bf16[2,128,512], index: 0, kind: input, shape index: {}]
  %s1 = inlined_call_operand.vmem [shape: bf16[16,128], index: 1, kind: input, shape index: {}]
  %s2 = inlined_call_operand.vmem [shape: f32[16,1], index: 2, kind: input, shape index: {}]
  %s3 = inlined_call_operand.vmem [shape: bf16[2,16,512], index: 3, kind: output, shape index: {}]
  %s4 = sld [smem:[#allocation0]]
  $region45: #{landsat_cvae_forward.7} parent=0
    _
  %s6 = ssub.s32 1, %s4
  %s7 = scalar_select 0, %s6, %s4
  loop: start=0, step=1, limit=4
  $region2: #{landsat_cvae_forward.7} parent=0 // loop_pre_header
    _
  $region3: #{landsat_cvae_forward.7} parent=0 // loop_header
    %s9 = sphi 0, %s13
    %p10 = scmp.ge.s32.totalorder %s9, 4
    %s16 = sphi 0, %s28
    %s17 = sphi 0, %s24
    %s18 = sphi 0, %s16
    %s19 = sphi 0, %s17
    %s20 = sphi 0, %s18
    %s21 = sphi 0, %s19
    %s33 = sphi 0, %s35
    %s36 = sphi 0, %s33
    %s37 = sphi 0, %s36
    %s53 = sphi 0, %s37
    %s57 = sphi 0, %s57
    %s59 = sphi 0, %s57
    %s60 = sphi 0, %s59
    %s74 = sphi 0, %s60
    %s78 = sphi 0, %s78
    %s80 = sphi 0, %s78
    %s81 = sphi 0, %s80
    %s95 = sphi 0, %s81
    %s103 = sphi 0, %s105
    %s106 = sphi 0, %s103
    %s107 = sphi 0, %s106
    %s123 = sphi 0, %s107
  $region4: #{landsat_cvae_forward.7} parent=0 // loop_header_branch
    %12 = sbr.rel (%p10) target = $region8
  $region5: #{landsat_cvae_forward.7} parent=0 // loop_body
    %s14 = ssub.s32 %s9, 1
    %s15 = ssub.s32 %s9, 2
    %s22 = sadd.s32 1, %s17
    %p23 = scmp.ge.s32.totalorder %s22, 1
    %s24 = scalar_select %p23, 0, %s22
    %s25 = sadd.s32 1, %s16
    %s26 = scalar_select %p23, %s25, %s16
    %p27 = scmp.ge.s32.totalorder %s26, 2
    %s28 = scalar_select %p27, 0, %s26
    %s29 = ssub.s32 %s16, %s28
    %s30 = ssub.s32 %s17, %s24
    %s31 = sor.u32 %s29, %s30
    %p32 = scmp.eq.s32.totalorder %s31, 0
    %s34 = sadd.s32 %s33, 1
    %s35 = scalar_select %p32, %s33, %s34
    %p38 = pneg %p32
    %p39 = scmp.eq.s32.totalorder %s9, 1
    %p40 = por %p38, %p39
    %p41 = scmp.ne.s32.totalorder %s33, %s36
    %p42 = scmp.eq.s32.totalorder %s9, 0
    %p43 = por %p41, %p42
    %p44 = scmp.ne.s32.totalorder %s33, %s36
    %p45 = scmp.eq.s32.totalorder %s14, 1
    %p46 = por %p44, %p45
    %p47 = scmp.ne.s32.totalorder %s36, %s37
    %p48 = scmp.eq.s32.totalorder %s14, 0
    %p49 = por %p47, %p48
    %p50 = scmp.ne.s32.totalorder %s36, %s37
    %p51 = scmp.eq.s32.totalorder %s15, 1
    %p52 = por %p50, %p51
    %p54 = scmp.ne.s32.totalorder %s37, %s53
    %p55 = scmp.eq.s32.totalorder %s15, 0
    %p56 = por %p54, %p55
    %s58 = sadd.s32 %s57, 1
    %p61 = scmp.eq.s32.totalorder %s9, 1
    %p62 = scmp.ne.s32.totalorder %s57, %s59
    %p63 = scmp.eq.s32.totalorder %s9, 0
    %p64 = por %p62, %p63
    %p65 = scmp.ne.s32.totalorder %s57, %s59
    %p66 = scmp.eq.s32.totalorder %s14, 1
    %p67 = por %p65, %p66
    %p68 = scmp.ne.s32.totalorder %s59, %s60
    %p69 = scmp.eq.s32.totalorder %s14, 0
    %p70 = por %p68, %p69
    %p71 = scmp.ne.s32.totalorder %s59, %s60
    %p72 = scmp.eq.s32.totalorder %s15, 1
    %p73 = por %p71, %p72
    %p75 = scmp.ne.s32.totalorder %s60, %s74
    %p76 = scmp.eq.s32.totalorder %s15, 0
    %p77 = por %p75, %p76
    %s79 = sadd.s32 %s78, 1
    %p82 = scmp.eq.s32.totalorder %s9, 1
    %p83 = scmp.ne.s32.totalorder %s78, %s80
    %p84 = scmp.eq.s32.totalorder %s9, 0
    %p85 = por %p83, %p84
    %p86 = scmp.ne.s32.totalorder %s78, %s80
    %p87 = scmp.eq.s32.totalorder %s14, 1
    %p88 = por %p86, %p87
    %p89 = scmp.ne.s32.totalorder %s80, %s81
    %p90 = scmp.eq.s32.totalorder %s14, 0
    %p91 = por %p89, %p90
    %p92 = scmp.ne.s32.totalorder %s80, %s81
    %p93 = scmp.eq.s32.totalorder %s15, 1
    %p94 = por %p92, %p93
    %p96 = scmp.ne.s32.totalorder %s81, %s95
    %p97 = scmp.eq.s32.totalorder %s15, 0
    %p98 = por %p96, %p97
    %s99 = ssub.s32 %s16, %s28
    %s100 = ssub.s32 %s17, %s24
    %s101 = sor.u32 %s99, %s100
    %p102 = scmp.eq.s32.totalorder %s101, 0
    %s104 = sadd.s32 %s103, 1
    %s105 = scalar_select %p102, %s103, %s104
    %p108 = pneg %p102
    %p109 = scmp.eq.s32.totalorder %s9, 1
    %p110 = por %p108, %p109
    %p111 = scmp.ne.s32.totalorder %s103, %s106
    %p112 = scmp.eq.s32.totalorder %s9, 0
    %p113 = por %p111, %p112
    %p114 = scmp.ne.s32.totalorder %s103, %s106
    %p115 = scmp.eq.s32.totalorder %s14, 1
    %p116 = por %p114, %p115
    %p117 = scmp.ne.s32.totalorder %s106, %s107
    %p118 = scmp.eq.s32.totalorder %s14, 0
    %p119 = por %p117, %p118
    %p120 = scmp.ne.s32.totalorder %s106, %s107
    %p121 = scmp.eq.s32.totalorder %s15, 1
    %p122 = por %p120, %p121
    %p124 = scmp.ne.s32.totalorder %s107, %s123
    %p125 = scmp.eq.s32.totalorder %s15, 0
    %p126 = por %p124, %p125
    %p127 = scmp.le.s32.totalorder 1, %s9
    %p128 = scmp.lt.s32.totalorder %s9, 3
    %p129 = pnand %p127, %p128
    %p130 = pneg %p129
    // Predicated region
    $region9: #{landsat_cvae_forward.7} parent=5 // pred_check
      _
    $region10: #{landsat_cvae_forward.7} parent=5 // pred_check_branch
      %132 = sbr.rel (%p129) target = $region12
    $region11: #{landsat_cvae_forward.7} parent=5 // pred_region
      %s133 = ssub.s32 %s9, 1
      // Predicated region
      $region13: #{landsat_cvae_forward.7} parent=11 // pred_check
        %p134 = pneg %p70
      $region14: #{landsat_cvae_forward.7} parent=11 // pred_check_branch
        %136 = sbr.rel (%p134) target = $region16
      $region15: #{landsat_cvae_forward.7} parent=11 // pred_region
        _
      $region16: #{landsat_cvae_forward.7} parent=11 // pred_fallthru
        _
      // Predicated region
      $region17: #{landsat_cvae_forward.7} parent=11 // pred_check
        %p137 = pneg %p91
      $region18: #{landsat_cvae_forward.7} parent=11 // pred_check_branch
        %139 = sbr.rel (%p137) target = $region20
      $region19: #{landsat_cvae_forward.7} parent=11 // pred_region
        _
      $region20: #{landsat_cvae_forward.7} parent=11 // pred_fallthru
        _
    $region12: #{landsat_cvae_forward.7} parent=5 // pred_fallthru
      _
    %p140 = scmp.lt.s32.totalorder %s9, 2
    // Predicated region
    $region21: #{landsat_cvae_forward.7} parent=5 // pred_check
      %p141 = pneg %p140
    $region22: #{landsat_cvae_forward.7} parent=5 // pred_check_branch
      %143 = sbr.rel (%p141) target = $region24
    $region23: #{landsat_cvae_forward.7} parent=5 // pred_region
      // Predicated region
      $region25: #{landsat_cvae_forward.7} parent=23 // pred_check
        %p144 = pneg %p43
      $region26: #{landsat_cvae_forward.7} parent=23 // pred_check_branch
        %146 = sbr.rel (%p144) target = $region28
      $region27: #{landsat_cvae_forward.7} parent=23 // pred_region
        %s147 = smul.u32 4, %s17
        %p148 = scmp.lt.s32.totalorder %s16, 1
        %s149 = scalar_select %p148, %s16, 1
        %p150 = scmp.lt.s32.totalorder %s147, 3
        %s151 = scalar_select %p150, %s147, 3
        %s152 = smul.addr %s149, 64
        %s153 = sadd.s32 %s151, %s152
        %s154 = smul.addr %s153, 4
        %s155 = scalar_lea.vmem %s0, %s154
        %s156 = smul.u32 4, %s17
      $region28: #{landsat_cvae_forward.7} parent=23 // pred_fallthru
        _
    $region24: #{landsat_cvae_forward.7} parent=5 // pred_fallthru
      _
    %p157 = scmp.le.s32.totalorder 1, %s9
    %p158 = scmp.lt.s32.totalorder %s9, 3
    %p159 = pnand %p157, %p158
    %p160 = pneg %p159
    // Predicated region
    $region29: #{landsat_cvae_forward.7} parent=5 // pred_check
      _
    $region30: #{landsat_cvae_forward.7} parent=5 // pred_check_branch
      %162 = sbr.rel (%p159) target = $region32
    $region31: #{landsat_cvae_forward.7} parent=5 // pred_region
      %s163 = ssub.s32 %s9, 1
      %s164 = smul.u32 4, %s19
      %p165 = scmp.lt.s32.totalorder %s18, 1
      %s166 = scalar_select %p165, %s18, 1
      %p167 = scmp.lt.s32.totalorder %s164, 3
      %s168 = scalar_select %p167, %s164, 3
      %s169 = smul.addr %s166, 64
      %s170 = sadd.s32 %s168, %s169
      %s171 = smul.addr %s170, 4
      %s172 = scalar_lea.vmem %s0, %s171
      %p173 = pneg %p49
      %p174 = pneg %p46
      %p175 = pneg %p70
      %p176 = pneg %p67
      %p177 = pneg %p91
      %p178 = pneg %p88
      %p179 = pneg %p119
      %p180 = pneg %p116
      %s181 = smul.u32 4, %s19
      %p182 = scmp.lt.s32.totalorder %s18, 1
      %s183 = scalar_select %p182, %s18, 1
      %p184 = scmp.lt.s32.totalorder %s181, 3
      %s185 = scalar_select %p184, %s181, 3
      %s186 = smul.addr %s183, 8
      %s187 = sadd.s32 %s185, %s186
      %s188 = smul.addr %s187, 4
      %s189 = scalar_lea.vmem %s3, %s188
      %s190 = smul.u32 4, %s19
      %p191 = scmp.lt.s32.totalorder %s18, 1
      %s192 = scalar_select %p191, %s18, 1
      %p193 = scmp.lt.s32.totalorder %s190, 3
      %s194 = scalar_select %p193, %s190, 3
      %s195 = smul.addr %s192, 64
      %s196 = sadd.s32 %s194, %s195
      %s197 = smul.addr %s196, 4
      %s198 = scalar_lea.vmem %s0, %s197
      %s199 = smul.u32 4, %s19
      %s200 = smul.u32 4, %s19
      %p201 = scmp.lt.s32.totalorder %s18, 1
      %s202 = scalar_select %p201, %s18, 1
      %p203 = scmp.lt.s32.totalorder %s200, 3
      %s204 = scalar_select %p203, %s200, 3
      %s205 = smul.addr %s202, 8
      %s206 = sadd.s32 %s204, %s205
      %s207 = smul.addr %s206, 4
      %s208 = scalar_lea.vmem %s3, %s207
      %s209 = smul.u32 4, %s19
      %v210 = vld [vmem:[%s1] sm:$0xf]
      %v211 = vld [vmem:[%s1 + $0x4] sm:$0xf]
      %v212 = vld [vmem:[%s198] sm:$0xff]
      %v213 = vld [vmem:[%s198 + $0x8] sm:$0xff]
      %v214 = vld [vmem:[%s198 + $0x10] sm:$0xff]
      %v215 = vld [vmem:[%s198 + $0x18] sm:$0xff]
      %v216 = vld [vmem:[%s198 + $0x20] sm:$0xff]
      %v217 = vld [vmem:[%s198 + $0x28] sm:$0xff]
      %v218 = vld [vmem:[%s198 + $0x30] sm:$0xff]
      %v219 = vld [vmem:[%s198 + $0x38] sm:$0xff]
      %v220 = vld [vmem:[%s198 + $0x40] sm:$0xff]
      %v221 = vld [vmem:[%s198 + $0x48] sm:$0xff]
      %v222 = vld [vmem:[%s198 + $0x50] sm:$0xff]
      %v223 = vld [vmem:[%s198 + $0x58] sm:$0xff]
      %v224 = vld [vmem:[%s198 + $0x60] sm:$0xff]
      %v225 = vld [vmem:[%s198 + $0x68] sm:$0xff]
      %v226 = vld [vmem:[%s198 + $0x70] sm:$0xff]
      %v227 = vld [vmem:[%s198 + $0x78] sm:$0xff]
      %v228 = vld [vmem:[%s198 + $0x80] sm:$0xff]
      %v229 = vld [vmem:[%s198 + $0x88] sm:$0xff]
      %v230 = vld [vmem:[%s198 + $0x90] sm:$0xff]
      %v231 = vld [vmem:[%s198 + $0x98] sm:$0xff]
      %v232 = vld [vmem:[%s198 + $0xa0] sm:$0xff]
      %v233 = vld [vmem:[%s198 + $0xa8] sm:$0xff]
      %v234 = vld [vmem:[%s198 + $0xb0] sm:$0xff]
      %v235 = vld [vmem:[%s198 + $0xb8] sm:$0xff]
      %v236 = vld [vmem:[%s198 + $0xc0] sm:$0xff]
      %v237 = vld [vmem:[%s198 + $0xc8] sm:$0xff]
      %v238 = vld [vmem:[%s198 + $0xd0] sm:$0xff]
      %v239 = vld [vmem:[%s198 + $0xd8] sm:$0xff]
      %v240 = vld [vmem:[%s198 + $0xe0] sm:$0xff]
      %v241 = vld [vmem:[%s198 + $0xe8] sm:$0xff]
      %v242 = vld [vmem:[%s198 + $0xf0] sm:$0xff]
      %v243 = vld [vmem:[%s198 + $0xf8] sm:$0xff]
      %v244 = vld [vmem:[%s2] sm:$0xff]
      %v245 = vld [vmem:[%s2 + $0x8] sm:$0xff]
      %247 = vset.pattern.permute.xlu0 0
      %248 = vperm.xlu0 %247, %v244
      %v249 = vpop.permute.xlu0 %248
      %252 = vset.pattern.permute.xlu0 0
      %253 = vperm.xlu0 %252, %v245
      %v254 = vpop.permute.xlu0 %253
      %v258 = vunpack.c.l.b16 %v210
      %v259 = vunpack.c.l.b16 %v211
      %v260 = vpack.c.b16 %v259, %v258
      %v294 = vunpack.c.l.b16 %v212
      %v295 = vunpack.c.h.b16 %v212
      %v296 = vunpack.c.l.b16 %v213
      %v297 = vunpack.c.h.b16 %v213
      %v298 = vunpack.c.l.b16 %v214
      %v299 = vunpack.c.h.b16 %v214
      %v300 = vunpack.c.l.b16 %v215
      %v301 = vunpack.c.h.b16 %v215
      %v302 = vunpack.c.l.b16 %v216
      %v303 = vunpack.c.h.b16 %v216
      %v304 = vunpack.c.l.b16 %v217
      %v305 = vunpack.c.h.b16 %v217
      %v306 = vunpack.c.l.b16 %v218
      %v307 = vunpack.c.h.b16 %v218
      %v308 = vunpack.c.l.b16 %v219
      %v309 = vunpack.c.h.b16 %v219
      %v310 = vunpack.c.l.b16 %v220
      %v311 = vunpack.c.h.b16 %v220
      %v312 = vunpack.c.l.b16 %v221
      %v313 = vunpack.c.h.b16 %v221
      %v314 = vunpack.c.l.b16 %v222
      %v315 = vunpack.c.h.b16 %v222
      %v316 = vunpack.c.l.b16 %v223
      %v317 = vunpack.c.h.b16 %v223
      %v318 = vunpack.c.l.b16 %v224
      %v319 = vunpack.c.h.b16 %v224
      %v320 = vunpack.c.l.b16 %v225
      %v321 = vunpack.c.h.b16 %v225
      %v322 = vunpack.c.l.b16 %v226
      %v323 = vunpack.c.h.b16 %v226
      %v324 = vunpack.c.l.b16 %v227
      %v325 = vunpack.c.h.b16 %v227
      %v326 = vunpack.c.l.b16 %v228
      %v327 = vunpack.c.h.b16 %v228
      %v328 = vunpack.c.l.b16 %v229
      %v329 = vunpack.c.h.b16 %v229
      %v330 = vunpack.c.l.b16 %v230
      %v331 = vunpack.c.h.b16 %v230
      %v332 = vunpack.c.l.b16 %v231
      %v333 = vunpack.c.h.b16 %v231
      %v334 = vunpack.c.l.b16 %v232
      %v335 = vunpack.c.h.b16 %v232
      %v336 = vunpack.c.l.b16 %v233
      %v337 = vunpack.c.h.b16 %v233
      %v338 = vunpack.c.l.b16 %v234
      %v339 = vunpack.c.h.b16 %v234
      %v340 = vunpack.c.l.b16 %v235
      %v341 = vunpack.c.h.b16 %v235
      %v342 = vunpack.c.l.b16 %v236
      %v343 = vunpack.c.h.b16 %v236
      %v344 = vunpack.c.l.b16 %v237
      %v345 = vunpack.c.h.b16 %v237
      %v346 = vunpack.c.l.b16 %v238
      %v347 = vunpack.c.h.b16 %v238
      %v348 = vunpack.c.l.b16 %v239
      %v349 = vunpack.c.h.b16 %v239
      %v350 = vunpack.c.l.b16 %v240
      %v351 = vunpack.c.h.b16 %v240
      %v352 = vunpack.c.l.b16 %v241
      %v353 = vunpack.c.h.b16 %v241
      %v354 = vunpack.c.l.b16 %v242
      %v355 = vunpack.c.h.b16 %v242
      %v356 = vunpack.c.l.b16 %v243
      %v357 = vunpack.c.h.b16 %v243
      %v358 = vpack.c.b16 %v298, %v294
      %v359 = vpack.c.b16 %v299, %v295
      %v360 = vpack.c.b16 %v300, %v296
      %v361 = vpack.c.b16 %v301, %v297
      %v362 = vpack.c.b16 %v306, %v302
      %v363 = vpack.c.b16 %v307, %v303
      %v364 = vpack.c.b16 %v308, %v304
      %v365 = vpack.c.b16 %v309, %v305
      %v366 = vpack.c.b16 %v314, %v310
      %v367 = vpack.c.b16 %v315, %v311
      %v368 = vpack.c.b16 %v316, %v312
      %v369 = vpack.c.b16 %v317, %v313
      %v370 = vpack.c.b16 %v322, %v318
      %v371 = vpack.c.b16 %v323, %v319
      %v372 = vpack.c.b16 %v324, %v320
      %v373 = vpack.c.b16 %v325, %v321
      %v374 = vpack.c.b16 %v330, %v326
      %v375 = vpack.c.b16 %v331, %v327
      %v376 = vpack.c.b16 %v332, %v328
      %v377 = vpack.c.b16 %v333, %v329
      %v378 = vpack.c.b16 %v338, %v334
      %v379 = vpack.c.b16 %v339, %v335
      %v380 = vpack.c.b16 %v340, %v336
      %v381 = vpack.c.b16 %v341, %v337
      %v382 = vpack.c.b16 %v346, %v342
      %v383 = vpack.c.b16 %v347, %v343
      %v384 = vpack.c.b16 %v348, %v344
      %v385 = vpack.c.b16 %v349, %v345
      %v386 = vpack.c.b16 %v354, %v350
      %v387 = vpack.c.b16 %v355, %v351
      %v388 = vpack.c.b16 %v356, %v352
      %v389 = vpack.c.b16 %v357, %v353
      %422 = vmatpush.bf16.msra.mxu0 %v386
      %423 = vmatpush.bf16.msra.mxu0 %v382
      %424 = vmatpush.bf16.msra.mxu0 %v378
      %425 = vmatpush.bf16.msra.mxu0 %v374
      %426 = vmatpush.bf16.msra.mxu0 %v370
      %427 = vmatpush.bf16.msra.mxu0 %v366
      %428 = vmatpush.bf16.msra.mxu0 %v362
      %429 = vmatpush.bf16.msra.mxu0 %v358
      %430 = vmatmul.bf16.gmra.mxu0 %v260
      %v431 = vpop.f32.mrf.mxu0
      %v432 = vadd.f32 %v249, %v431
      %v433 = vpop.f32.mrf.mxu0
      %v434 = vadd.f32 %v254, %v433
      %435 = vdwg.mxu0
      %436 = vmatpush.bf16.msra.mxu0 %v387
      %437 = vmatpush.bf16.msra.mxu0 %v383
      %438 = vmatpush.bf16.msra.mxu0 %v379
      %439 = vmatpush.bf16.msra.mxu0 %v375
      %440 = vmatpush.bf16.msra.mxu0 %v371
      %441 = vmatpush.bf16.msra.mxu0 %v367
      %442 = vmatpush.bf16.msra.mxu0 %v363
      %443 = vmatpush.bf16.msra.mxu0 %v359
      %444 = vmatmul.bf16.gmra.mxu0 %v260
      %v445 = vpop.f32.mrf.mxu0
      %v446 = vadd.f32 %v249, %v445
      %v447 = vpop.f32.mrf.mxu0
      %v448 = vadd.f32 %v254, %v447
      %449 = vdwg.mxu0
      %450 = vmatpush.bf16.msra.mxu0 %v388
      %451 = vmatpush.bf16.msra.mxu0 %v384
      %452 = vmatpush.bf16.msra.mxu0 %v380
      %453 = vmatpush.bf16.msra.mxu0 %v376
      %454 = vmatpush.bf16.msra.mxu0 %v372
      %455 = vmatpush.bf16.msra.mxu0 %v368
      %456 = vmatpush.bf16.msra.mxu0 %v364
      %457 = vmatpush.bf16.msra.mxu0 %v360
      %458 = vmatmul.bf16.gmra.mxu0 %v260
      %v459 = vpop.f32.mrf.mxu0
      %v460 = vadd.f32 %v249, %v459
      %v461 = vpop.f32.mrf.mxu0
      %v462 = vadd.f32 %v254, %v461
      %463 = vdwg.mxu0
      %464 = vmatpush.bf16.msra.mxu0 %v389
      %465 = vmatpush.bf16.msra.mxu0 %v385
      %466 = vmatpush.bf16.msra.mxu0 %v381
      %467 = vmatpush.bf16.msra.mxu0 %v377
      %468 = vmatpush.bf16.msra.mxu0 %v373
      %469 = vmatpush.bf16.msra.mxu0 %v369
      %470 = vmatpush.bf16.msra.mxu0 %v365
      %471 = vmatpush.bf16.msra.mxu0 %v361
      %472 = vmatmul.bf16.gmra.mxu0 %v260
      %v473 = vpop.f32.mrf.mxu0
      %v474 = vadd.f32 %v249, %v473
      %v475 = vpop.f32.mrf.mxu0
      %v476 = vadd.f32 %v254, %v475
      %477 = vdwg.mxu0
      %vm478 = vcmp.ge.f32.partialorder %v432, 0.0
      %vm479 = vcmp.ge.f32.partialorder %v446, 0.0
      %vm480 = vcmp.ge.f32.partialorder %v460, 0.0
      %vm481 = vcmp.ge.f32.partialorder %v474, 0.0
      %vm482 = vcmp.ge.f32.partialorder %v434, 0.0
      %vm483 = vcmp.ge.f32.partialorder %v448, 0.0
      %vm484 = vcmp.ge.f32.partialorder %v462, 0.0
      %vm485 = vcmp.ge.f32.partialorder %v476, 0.0
      %v486 = vmul.f32 %v432, 0.01
      %v487 = vmul.f32 %v446, 0.01
      %v488 = vmul.f32 %v460, 0.01
      %v489 = vmul.f32 %v474, 0.01
      %v490 = vmul.f32 %v434, 0.01
      %v491 = vmul.f32 %v448, 0.01
      %v492 = vmul.f32 %v462, 0.01
      %v493 = vmul.f32 %v476, 0.01
      %v494 = vsel %vm478, %v432, %v486
      %v495 = vsel %vm479, %v446, %v487
      %v496 = vsel %vm480, %v460, %v488
      %v497 = vsel %vm481, %v474, %v489
      %v498 = vsel %vm482, %v434, %v490
      %v499 = vsel %vm483, %v448, %v491
      %v500 = vsel %vm484, %v462, %v492
      %v501 = vsel %vm485, %v476, %v493
      %v502 = vpack.c.bf16 %v495, %v494
      %v503 = vpack.c.bf16 %v497, %v496
      %v504 = vpack.c.bf16 %v499, %v498
      %v505 = vpack.c.bf16 %v501, %v500
      %506 = vst [vmem:[%s208] sm:$0xff] %v502
      %507 = vst [vmem:[%s208 + $0x8] sm:$0xff] %v503
      %508 = vst [vmem:[%s208 + $0x10] sm:$0xff] %v504
      %509 = vst [vmem:[%s208 + $0x18] sm:$0xff] %v505
      %s510 = smul.u32 4, %s19
      %p511 = scmp.lt.s32.totalorder %s18, 1
      %s512 = scalar_select %p511, %s18, 1
      %p513 = scmp.lt.s32.totalorder %s510, 3
      %s514 = scalar_select %p513, %s510, 3
      %s515 = smul.addr %s512, 8
      %s516 = sadd.s32 %s514, %s515
      %s517 = smul.addr %s516, 4
      %s518 = scalar_lea.vmem %s3, %s517
      // Predicated region
      $region33: #{landsat_cvae_forward.7} parent=31 // pred_check
        %p519 = pneg %p116
      $region34: #{landsat_cvae_forward.7} parent=31 // pred_check_branch
        %521 = sbr.rel (%p519) target = $region36
      $region35: #{landsat_cvae_forward.7} parent=31 // pred_region
        %s522 = smul.u32 4, %s19
      $region36: #{landsat_cvae_forward.7} parent=31 // pred_fallthru
        _
    $region32: #{landsat_cvae_forward.7} parent=5 // pred_fallthru
      _
    %p523 = scmp.le.s32.totalorder 2, %s9
    // Predicated region
    $region37: #{landsat_cvae_forward.7} parent=5 // pred_check
      %p524 = pneg %p523
    $region38: #{landsat_cvae_forward.7} parent=5 // pred_check_branch
      %526 = sbr.rel (%p524) target = $region40
    $region39: #{landsat_cvae_forward.7} parent=5 // pred_region
      %s527 = ssub.s32 %s9, 2
      // Predicated region
      $region41: #{landsat_cvae_forward.7} parent=39 // pred_check
        %p528 = pneg %p122
      $region42: #{landsat_cvae_forward.7} parent=39 // pred_check_branch
        %530 = sbr.rel (%p528) target = $region44
      $region43: #{landsat_cvae_forward.7} parent=39 // pred_region
        %s531 = smul.u32 4, %s21
        %p532 = scmp.lt.s32.totalorder %s20, 1
        %s533 = scalar_select %p532, %s20, 1
        %p534 = scmp.lt.s32.totalorder %s531, 3
        %s535 = scalar_select %p534, %s531, 3
        %s536 = smul.addr %s533, 8
        %s537 = sadd.s32 %s535, %s536
        %s538 = smul.addr %s537, 4
        %s539 = scalar_lea.vmem %s3, %s538
      $region44: #{landsat_cvae_forward.7} parent=39 // pred_fallthru
        _
    $region40: #{landsat_cvae_forward.7} parent=5 // pred_fallthru
      _
  $region6: #{landsat_cvae_forward.7} parent=0 // loop_footer
    %s13 = sadd.s32 1, %s9
  $region7: #{landsat_cvae_forward.7} parent=0 // loop_footer_branch
    %8 = sbr.rel target = $region3
  $region8: #{landsat_cvae_forward.7} parent=0 // loop_exit
    _

// kernel: landsat_cvae_forward.8
$region0: #{landsat_cvae_forward.8}
  #allocation0 [shape = 'u32[]', space=smem, size = 0x4, offset = 0x4, fixed_abs, tag = 'smem constant byte address 0x4 - core index']
  #allocation1 [shape = 'u32[72,128]{1,0:T(1,128)}', space=vmem, size = 0x9000, scoped, tag = 'internal scratch']
  %s0 = inlined_call_operand.vmem [shape: bf16[2,256,128], index: 0, kind: input, shape index: {}]
  %s1 = inlined_call_operand.vmem [shape: bf16[32,256], index: 1, kind: input, shape index: {}]
  %s2 = inlined_call_operand.vmem [shape: f32[32,1], index: 2, kind: input, shape index: {}]
  %s3 = inlined_call_operand.vmem [shape: bf16[2,32,128], index: 3, kind: output, shape index: {}]
  %s4 = sld [smem:[#allocation0]]
  $region45: #{landsat_cvae_forward.8} parent=0
    _
  %s6 = ssub.s32 1, %s4
  %s7 = scalar_select 0, %s6, %s4
  loop: start=0, step=1, limit=4
  $region2: #{landsat_cvae_forward.8} parent=0 // loop_pre_header
    _
  $region3: #{landsat_cvae_forward.8} parent=0 // loop_header
    %s9 = sphi 0, %s13
    %p10 = scmp.ge.s32.totalorder %s9, 4
    %s16 = sphi 0, %s28
    %s17 = sphi 0, %s24
    %s18 = sphi 0, %s16
    %s19 = sphi 0, %s17
    %s20 = sphi 0, %s18
    %s21 = sphi 0, %s19
    %s33 = sphi 0, %s35
    %s36 = sphi 0, %s33
    %s37 = sphi 0, %s36
    %s53 = sphi 0, %s37
    %s57 = sphi 0, %s57
    %s59 = sphi 0, %s57
    %s60 = sphi 0, %s59
    %s74 = sphi 0, %s60
    %s78 = sphi 0, %s78
    %s80 = sphi 0, %s78
    %s81 = sphi 0, %s80
    %s95 = sphi 0, %s81
    %s103 = sphi 0, %s105
    %s106 = sphi 0, %s103
    %s107 = sphi 0, %s106
    %s123 = sphi 0, %s107
  $region4: #{landsat_cvae_forward.8} parent=0 // loop_header_branch
    %12 = sbr.rel (%p10) target = $region8
  $region5: #{landsat_cvae_forward.8} parent=0 // loop_body
    %s14 = ssub.s32 %s9, 1
    %s15 = ssub.s32 %s9, 2
    %s22 = sadd.s32 1, %s17
    %p23 = scmp.ge.s32.totalorder %s22, 1
    %s24 = scalar_select %p23, 0, %s22
    %s25 = sadd.s32 1, %s16
    %s26 = scalar_select %p23, %s25, %s16
    %p27 = scmp.ge.s32.totalorder %s26, 2
    %s28 = scalar_select %p27, 0, %s26
    %s29 = ssub.s32 %s16, %s28
    %s30 = ssub.s32 %s17, %s24
    %s31 = sor.u32 %s29, %s30
    %p32 = scmp.eq.s32.totalorder %s31, 0
    %s34 = sadd.s32 %s33, 1
    %s35 = scalar_select %p32, %s33, %s34
    %p38 = pneg %p32
    %p39 = scmp.eq.s32.totalorder %s9, 1
    %p40 = por %p38, %p39
    %p41 = scmp.ne.s32.totalorder %s33, %s36
    %p42 = scmp.eq.s32.totalorder %s9, 0
    %p43 = por %p41, %p42
    %p44 = scmp.ne.s32.totalorder %s33, %s36
    %p45 = scmp.eq.s32.totalorder %s14, 1
    %p46 = por %p44, %p45
    %p47 = scmp.ne.s32.totalorder %s36, %s37
    %p48 = scmp.eq.s32.totalorder %s14, 0
    %p49 = por %p47, %p48
    %p50 = scmp.ne.s32.totalorder %s36, %s37
    %p51 = scmp.eq.s32.totalorder %s15, 1
    %p52 = por %p50, %p51
    %p54 = scmp.ne.s32.totalorder %s37, %s53
    %p55 = scmp.eq.s32.totalorder %s15, 0
    %p56 = por %p54, %p55
    %s58 = sadd.s32 %s57, 1
    %p61 = scmp.eq.s32.totalorder %s9, 1
    %p62 = scmp.ne.s32.totalorder %s57, %s59
    %p63 = scmp.eq.s32.totalorder %s9, 0
    %p64 = por %p62, %p63
    %p65 = scmp.ne.s32.totalorder %s57, %s59
    %p66 = scmp.eq.s32.totalorder %s14, 1
    %p67 = por %p65, %p66
    %p68 = scmp.ne.s32.totalorder %s59, %s60
    %p69 = scmp.eq.s32.totalorder %s14, 0
    %p70 = por %p68, %p69
    %p71 = scmp.ne.s32.totalorder %s59, %s60
    %p72 = scmp.eq.s32.totalorder %s15, 1
    %p73 = por %p71, %p72
    %p75 = scmp.ne.s32.totalorder %s60, %s74
    %p76 = scmp.eq.s32.totalorder %s15, 0
    %p77 = por %p75, %p76
    %s79 = sadd.s32 %s78, 1
    %p82 = scmp.eq.s32.totalorder %s9, 1
    %p83 = scmp.ne.s32.totalorder %s78, %s80
    %p84 = scmp.eq.s32.totalorder %s9, 0
    %p85 = por %p83, %p84
    %p86 = scmp.ne.s32.totalorder %s78, %s80
    %p87 = scmp.eq.s32.totalorder %s14, 1
    %p88 = por %p86, %p87
    %p89 = scmp.ne.s32.totalorder %s80, %s81
    %p90 = scmp.eq.s32.totalorder %s14, 0
    %p91 = por %p89, %p90
    %p92 = scmp.ne.s32.totalorder %s80, %s81
    %p93 = scmp.eq.s32.totalorder %s15, 1
    %p94 = por %p92, %p93
    %p96 = scmp.ne.s32.totalorder %s81, %s95
    %p97 = scmp.eq.s32.totalorder %s15, 0
    %p98 = por %p96, %p97
    %s99 = ssub.s32 %s16, %s28
    %s100 = ssub.s32 %s17, %s24
    %s101 = sor.u32 %s99, %s100
    %p102 = scmp.eq.s32.totalorder %s101, 0
    %s104 = sadd.s32 %s103, 1
    %s105 = scalar_select %p102, %s103, %s104
    %p108 = pneg %p102
    %p109 = scmp.eq.s32.totalorder %s9, 1
    %p110 = por %p108, %p109
    %p111 = scmp.ne.s32.totalorder %s103, %s106
    %p112 = scmp.eq.s32.totalorder %s9, 0
    %p113 = por %p111, %p112
    %p114 = scmp.ne.s32.totalorder %s103, %s106
    %p115 = scmp.eq.s32.totalorder %s14, 1
    %p116 = por %p114, %p115
    %p117 = scmp.ne.s32.totalorder %s106, %s107
    %p118 = scmp.eq.s32.totalorder %s14, 0
    %p119 = por %p117, %p118
    %p120 = scmp.ne.s32.totalorder %s106, %s107
    %p121 = scmp.eq.s32.totalorder %s15, 1
    %p122 = por %p120, %p121
    %p124 = scmp.ne.s32.totalorder %s107, %s123
    %p125 = scmp.eq.s32.totalorder %s15, 0
    %p126 = por %p124, %p125
    %p127 = scmp.le.s32.totalorder 1, %s9
    %p128 = scmp.lt.s32.totalorder %s9, 3
    %p129 = pnand %p127, %p128
    %p130 = pneg %p129
    // Predicated region
    $region9: #{landsat_cvae_forward.8} parent=5 // pred_check
      _
    $region10: #{landsat_cvae_forward.8} parent=5 // pred_check_branch
      %132 = sbr.rel (%p129) target = $region12
    $region11: #{landsat_cvae_forward.8} parent=5 // pred_region
      %s133 = ssub.s32 %s9, 1
      // Predicated region
      $region13: #{landsat_cvae_forward.8} parent=11 // pred_check
        %p134 = pneg %p70
      $region14: #{landsat_cvae_forward.8} parent=11 // pred_check_branch
        %136 = sbr.rel (%p134) target = $region16
      $region15: #{landsat_cvae_forward.8} parent=11 // pred_region
        _
      $region16: #{landsat_cvae_forward.8} parent=11 // pred_fallthru
        _
      // Predicated region
      $region17: #{landsat_cvae_forward.8} parent=11 // pred_check
        %p137 = pneg %p91
      $region18: #{landsat_cvae_forward.8} parent=11 // pred_check_branch
        %139 = sbr.rel (%p137) target = $region20
      $region19: #{landsat_cvae_forward.8} parent=11 // pred_region
        _
      $region20: #{landsat_cvae_forward.8} parent=11 // pred_fallthru
        _
    $region12: #{landsat_cvae_forward.8} parent=5 // pred_fallthru
      _
    %p140 = scmp.lt.s32.totalorder %s9, 2
    // Predicated region
    $region21: #{landsat_cvae_forward.8} parent=5 // pred_check
      %p141 = pneg %p140
    $region22: #{landsat_cvae_forward.8} parent=5 // pred_check_branch
      %143 = sbr.rel (%p141) target = $region24
    $region23: #{landsat_cvae_forward.8} parent=5 // pred_region
      // Predicated region
      $region25: #{landsat_cvae_forward.8} parent=23 // pred_check
        %p144 = pneg %p43
      $region26: #{landsat_cvae_forward.8} parent=23 // pred_check_branch
        %146 = sbr.rel (%p144) target = $region28
      $region27: #{landsat_cvae_forward.8} parent=23 // pred_region
        %p147 = scmp.lt.s32.totalorder %s16, 1
        %s148 = scalar_select %p147, %s16, 1
        %p149 = scmp.lt.s32.totalorder %s17, 0
        %s150 = scalar_select %p149, %s17, 0
        %s151 = smul.addr %s148, 32
        %s152 = sadd.s32 %s150, %s151
        %s153 = smul.addr %s152, 4
        %s154 = scalar_lea.vmem %s0, %s153
      $region28: #{landsat_cvae_forward.8} parent=23 // pred_fallthru
        _
    $region24: #{landsat_cvae_forward.8} parent=5 // pred_fallthru
      _
    %p155 = scmp.le.s32.totalorder 1, %s9
    %p156 = scmp.lt.s32.totalorder %s9, 3
    %p157 = pnand %p155, %p156
    %p158 = pneg %p157
    // Predicated region
    $region29: #{landsat_cvae_forward.8} parent=5 // pred_check
      _
    $region30: #{landsat_cvae_forward.8} parent=5 // pred_check_branch
      %160 = sbr.rel (%p157) target = $region32
    $region31: #{landsat_cvae_forward.8} parent=5 // pred_region
      %s161 = ssub.s32 %s9, 1
      %p162 = scmp.lt.s32.totalorder %s18, 1
      %s163 = scalar_select %p162, %s18, 1
      %p164 = scmp.lt.s32.totalorder %s19, 0
      %s165 = scalar_select %p164, %s19, 0
      %s166 = smul.addr %s163, 32
      %s167 = sadd.s32 %s165, %s166
      %s168 = smul.addr %s167, 4
      %s169 = scalar_lea.vmem %s0, %s168
      %p170 = pneg %p49
      %p171 = pneg %p46
      %p172 = pneg %p70
      %p173 = pneg %p67
      %p174 = pneg %p91
      %p175 = pneg %p88
      %p176 = pneg %p119
      %p177 = pneg %p116
      %p178 = scmp.lt.s32.totalorder %s18, 1
      %s179 = scalar_select %p178, %s18, 1
      %p180 = scmp.lt.s32.totalorder %s19, 0
      %s181 = scalar_select %p180, %s19, 0
      %s182 = smul.addr %s179, 4
      %s183 = sadd.s32 %s181, %s182
      %s184 = smul.addr %s183, 4
      %s185 = scalar_lea.vmem %s3, %s184
      %p186 = scmp.lt.s32.totalorder %s18, 1
      %s187 = scalar_select %p186, %s18, 1
      %p188 = scmp.lt.s32.totalorder %s19, 0
      %s189 = scalar_select %p188, %s19, 0
      %s190 = smul.addr %s187, 32
      %s191 = sadd.s32 %s189, %s190
      %s192 = smul.addr %s191, 4
      %s193 = scalar_lea.vmem %s0, %s192
      %p194 = scmp.lt.s32.totalorder %s18, 1
      %s195 = scalar_select %p194, %s18, 1
      %p196 = scmp.lt.s32.totalorder %s19, 0
      %s197 = scalar_select %p196, %s19, 0
      %s198 = smul.addr %s195, 4
      %s199 = sadd.s32 %s197, %s198
      %s200 = smul.addr %s199, 4
      %s201 = scalar_lea.vmem %s3, %s200
      %v202 = vld [vmem:[%s1] sm:$0xff]
      %v203 = vld [vmem:[%s1 + $0x8] sm:$0xff]
      %v204 = vld [vmem:[%s1 + $0x10] sm:$0xff]
      %v205 = vld [vmem:[%s1 + $0x18] sm:$0xff]
      %v206 = vld [vmem:[%s193] sm:$0xf]
      %v207 = vld [vmem:[%s193 + $0x4] sm:$0xf]
      %v208 = vld [vmem:[%s193 + $0x8] sm:$0xf]
      %v209 = vld [vmem:[%s193 + $0xc] sm:$0xf]
      %v210 = vld [vmem:[%s193 + $0x10] sm:$0xf]
      %v211 = vld [vmem:[%s193 + $0x14] sm:$0xf]
      %v212 = vld [vmem:[%s193 + $0x18] sm:$0xf]
      %v213 = vld [vmem:[%s193 + $0x1c] sm:$0xf]
      %v214 = vld [vmem:[%s193 + $0x20] sm:$0xf]
      %v215 = vld [vmem:[%s193 + $0x24] sm:$0xf]
      %v216 = vld [vmem:[%s193 + $0x28] sm:$0xf]
      %v217 = vld [vmem:[%s193 + $0x2c] sm:$0xf]
      %v218 = vld [vmem:[%s193 + $0x30] sm:$0xf]
      %v219 = vld [vmem:[%s193 + $0x34] sm:$0xf]
      %v220 = vld [vmem:[%s193 + $0x38] sm:$0xf]
      %v221 = vld [vmem:[%s193 + $0x3c] sm:$0xf]
      %v222 = vld [vmem:[%s193 + $0x40] sm:$0xf]
      %v223 = vld [vmem:[%s193 + $0x44] sm:$0xf]
      %v224 = vld [vmem:[%s193 + $0x48] sm:$0xf]
      %v225 = vld [vmem:[%s193 + $0x4c] sm:$0xf]
      %v226 = vld [vmem:[%s193 + $0x50] sm:$0xf]
      %v227 = vld [vmem:[%s193 + $0x54] sm:$0xf]
      %v228 = vld [vmem:[%s193 + $0x58] sm:$0xf]
      %v229 = vld [vmem:[%s193 + $0x5c] sm:$0xf]
      %v230 = vld [vmem:[%s193 + $0x60] sm:$0xf]
      %v231 = vld [vmem:[%s193 + $0x64] sm:$0xf]
      %v232 = vld [vmem:[%s193 + $0x68] sm:$0xf]
      %v233 = vld [vmem:[%s193 + $0x6c] sm:$0xf]
      %v234 = vld [vmem:[%s193 + $0x70] sm:$0xf]
      %v235 = vld [vmem:[%s193 + $0x74] sm:$0xf]
      %v236 = vld [vmem:[%s193 + $0x78] sm:$0xf]
      %v237 = vld [vmem:[%s193 + $0x7c] sm:$0xf]
      %v238 = vld [vmem:[%s2] sm:$0xff]
      %v239 = vld [vmem:[%s2 + $0x8] sm:$0xff]
      %v240 = vld [vmem:[%s2 + $0x10] sm:$0xff]
      %v241 = vld [vmem:[%s2 + $0x18] sm:$0xff]
      %243 = vset.pattern.permute.xlu0 0
      %244 = vperm.xlu0 %243, %v238
      %v245 = vpop.permute.xlu0 %244
      %248 = vset.pattern.permute.xlu0 0
      %249 = vperm.xlu0 %248, %v239
      %v250 = vpop.permute.xlu0 %249
      %253 = vset.pattern.permute.xlu0 0
      %254 = vperm.xlu0 %253, %v240
      %v255 = vpop.permute.xlu0 %254
      %258 = vset.pattern.permute.xlu0 0
      %259 = vperm.xlu0 %258, %v241
      %v260 = vpop.permute.xlu0 %259
      %v266 = vunpack.c.l.b16 %v202
      %v267 = vunpack.c.h.b16 %v202
      %v268 = vunpack.c.l.b16 %v203
      %v269 = vunpack.c.h.b16 %v203
      %v270 = vunpack.c.l.b16 %v204
      %v271 = vunpack.c.h.b16 %v204
      %v272 = vunpack.c.l.b16 %v205
      %v273 = vunpack.c.h.b16 %v205
      %v274 = vpack.c.b16 %v268, %v266
      %v275 = vpack.c.b16 %v269, %v267
      %v276 = vpack.c.b16 %v272, %v270
      %v277 = vpack.c.b16 %v273, %v271
      %v314 = vunpack.c.l.b16 %v206
      %v315 = vunpack.c.l.b16 %v207
      %v316 = vunpack.c.l.b16 %v208
      %v317 = vunpack.c.l.b16 %v209
      %v318 = vunpack.c.l.b16 %v210
      %v319 = vunpack.c.l.b16 %v211
      %v320 = vunpack.c.l.b16 %v212
      %v321 = vunpack.c.l.b16 %v213
      %v322 = vunpack.c.l.b16 %v214
      %v323 = vunpack.c.l.b16 %v215
      %v324 = vunpack.c.l.b16 %v216
      %v325 = vunpack.c.l.b16 %v217
      %v326 = vunpack.c.l.b16 %v218
      %v327 = vunpack.c.l.b16 %v219
      %v328 = vunpack.c.l.b16 %v220
      %v329 = vunpack.c.l.b16 %v221
      %v330 = vunpack.c.l.b16 %v222
      %v331 = vunpack.c.l.b16 %v223
      %v332 = vunpack.c.l.b16 %v224
      %v333 = vunpack.c.l.b16 %v225
      %v334 = vunpack.c.l.b16 %v226
      %v335 = vunpack.c.l.b16 %v227
      %v336 = vunpack.c.l.b16 %v228
      %v337 = vunpack.c.l.b16 %v229
      %v338 = vunpack.c.l.b16 %v230
      %v339 = vunpack.c.l.b16 %v231
      %v340 = vunpack.c.l.b16 %v232
      %v341 = vunpack.c.l.b16 %v233
      %v342 = vunpack.c.l.b16 %v234
      %v343 = vunpack.c.l.b16 %v235
      %v344 = vunpack.c.l.b16 %v236
      %v345 = vunpack.c.l.b16 %v237
      %v346 = vpack.c.b16 %v315, %v314
      %v347 = vpack.c.b16 %v317, %v316
      %v348 = vpack.c.b16 %v319, %v318
      %v349 = vpack.c.b16 %v321, %v320
      %v350 = vpack.c.b16 %v323, %v322
      %v351 = vpack.c.b16 %v325, %v324
      %v352 = vpack.c.b16 %v327, %v326
      %v353 = vpack.c.b16 %v329, %v328
      %v354 = vpack.c.b16 %v331, %v330
      %v355 = vpack.c.b16 %v333, %v332
      %v356 = vpack.c.b16 %v335, %v334
      %v357 = vpack.c.b16 %v337, %v336
      %v358 = vpack.c.b16 %v339, %v338
      %v359 = vpack.c.b16 %v341, %v340
      %v360 = vpack.c.b16 %v343, %v342
      %v361 = vpack.c.b16 %v345, %v344
      %378 = vmatpush.bf16.msra.mxu0 %v353
      %379 = vmatpush.bf16.msra.mxu0 %v352
      %380 = vmatpush.bf16.msra.mxu0 %v351
      %381 = vmatpush.bf16.msra.mxu0 %v350
      %382 = vmatpush.bf16.msra.mxu0 %v349
      %383 = vmatpush.bf16.msra.mxu0 %v348
      %384 = vmatpush.bf16.msra.mxu0 %v347
      %385 = vmatpush.bf16.msra.mxu0 %v346
      %386 = vmatmul.bf16.gmra.mxu0 %v274
      %v387 = vpop.f32.mrf.mxu0
      %v388 = vadd.f32 %v245, %v387
      %v389 = vpop.f32.mrf.mxu0
      %v390 = vadd.f32 %v250, %v389
      %391 = vmatmul.bf16.gmra.mxu0 %v276
      %v392 = vpop.f32.mrf.mxu0
      %v393 = vadd.f32 %v255, %v392
      %v394 = vpop.f32.mrf.mxu0
      %v395 = vadd.f32 %v260, %v394
      %396 = vdwg.mxu0
      %397 = vmatpush.bf16.msra.mxu0 %v361
      %398 = vmatpush.bf16.msra.mxu0 %v360
      %399 = vmatpush.bf16.msra.mxu0 %v359
      %400 = vmatpush.bf16.msra.mxu0 %v358
      %401 = vmatpush.bf16.msra.mxu0 %v357
      %402 = vmatpush.bf16.msra.mxu0 %v356
      %403 = vmatpush.bf16.msra.mxu0 %v355
      %404 = vmatpush.bf16.msra.mxu0 %v354
      %405 = vmatmul.bf16.gmra.mxu0 %v275
      %v406 = vpop.f32.mrf.mxu0
      %v407 = vadd.f32 %v388, %v406
      %v408 = vpop.f32.mrf.mxu0
      %v409 = vadd.f32 %v390, %v408
      %410 = vmatmul.bf16.gmra.mxu0 %v277
      %v411 = vpop.f32.mrf.mxu0
      %v412 = vadd.f32 %v393, %v411
      %v413 = vpop.f32.mrf.mxu0
      %v414 = vadd.f32 %v395, %v413
      %415 = vdwg.mxu0
      %vm416 = vcmp.ge.f32.partialorder %v407, 0.0
      %vm417 = vcmp.ge.f32.partialorder %v409, 0.0
      %vm418 = vcmp.ge.f32.partialorder %v412, 0.0
      %vm419 = vcmp.ge.f32.partialorder %v414, 0.0
      %v420 = vmul.f32 %v407, 0.01
      %v421 = vmul.f32 %v409, 0.01
      %v422 = vmul.f32 %v412, 0.01
      %v423 = vmul.f32 %v414, 0.01
      %v424 = vsel %vm416, %v407, %v420
      %v425 = vsel %vm417, %v409, %v421
      %v426 = vsel %vm418, %v412, %v422
      %v427 = vsel %vm419, %v414, %v423
      %v428 = vpack.c.bf16 %v424, %v424
      %v429 = vpack.c.bf16 %v425, %v425
      %v430 = vpack.c.bf16 %v426, %v426
      %v431 = vpack.c.bf16 %v427, %v427
      %432 = vst [vmem:[%s201] sm:$0xf] %v428
      %433 = vst [vmem:[%s201 + $0x4] sm:$0xf] %v429
      %434 = vst [vmem:[%s201 + $0x8] sm:$0xf] %v430
      %435 = vst [vmem:[%s201 + $0xc] sm:$0xf] %v431
      %p436 = scmp.lt.s32.totalorder %s18, 1
      %s437 = scalar_select %p436, %s18, 1
      %p438 = scmp.lt.s32.totalorder %s19, 0
      %s439 = scalar_select %p438, %s19, 0
      %s440 = smul.addr %s437, 4
      %s441 = sadd.s32 %s439, %s440
      %s442 = smul.addr %s441, 4
      %s443 = scalar_lea.vmem %s3, %s442
      // Predicated region
      $region33: #{landsat_cvae_forward.8} parent=31 // pred_check
        %p444 = pneg %p116
      $region34: #{landsat_cvae_forward.8} parent=31 // pred_check_branch
        %446 = sbr.rel (%p444) target = $region36
      $region35: #{landsat_cvae_forward.8} parent=31 // pred_region
        _
      $region36: #{landsat_cvae_forward.8} parent=31 // pred_fallthru
        _
    $region32: #{landsat_cvae_forward.8} parent=5 // pred_fallthru
      _
    %p447 = scmp.le.s32.totalorder 2, %s9
    // Predicated region
    $region37: #{landsat_cvae_forward.8} parent=5 // pred_check
      %p448 = pneg %p447
    $region38: #{landsat_cvae_forward.8} parent=5 // pred_check_branch
      %450 = sbr.rel (%p448) target = $region40
    $region39: #{landsat_cvae_forward.8} parent=5 // pred_region
      %s451 = ssub.s32 %s9, 2
      // Predicated region
      $region41: #{landsat_cvae_forward.8} parent=39 // pred_check
        %p452 = pneg %p122
      $region42: #{landsat_cvae_forward.8} parent=39 // pred_check_branch
        %454 = sbr.rel (%p452) target = $region44
      $region43: #{landsat_cvae_forward.8} parent=39 // pred_region
        %p455 = scmp.lt.s32.totalorder %s20, 1
        %s456 = scalar_select %p455, %s20, 1
        %p457 = scmp.lt.s32.totalorder %s21, 0
        %s458 = scalar_select %p457, %s21, 0
        %s459 = smul.addr %s456, 4
        %s460 = sadd.s32 %s458, %s459
        %s461 = smul.addr %s460, 4
        %s462 = scalar_lea.vmem %s3, %s461
      $region44: #{landsat_cvae_forward.8} parent=39 // pred_fallthru
        _
    $region40: #{landsat_cvae_forward.8} parent=5 // pred_fallthru
      _
  $region6: #{landsat_cvae_forward.8} parent=0 // loop_footer
    %s13 = sadd.s32 1, %s9
  $region7: #{landsat_cvae_forward.8} parent=0 // loop_footer_branch
    %8 = sbr.rel target = $region3
  $region8: #{landsat_cvae_forward.8} parent=0 // loop_exit
    _

// kernel: landsat_cvae_forward.9
$region0: #{landsat_cvae_forward.9}
  #allocation0 [shape = 'u32[]', space=smem, size = 0x4, offset = 0x4, fixed_abs, tag = 'smem constant byte address 0x4 - core index']
  #allocation1 [shape = 'u32[72,128]{1,0:T(1,128)}', space=vmem, size = 0x9000, scoped, tag = 'internal scratch']
  %s0 = inlined_call_operand.vmem [shape: bf16[2,1568], index: 0, kind: input, shape index: {}]
  %s1 = inlined_call_operand.vmem [shape: f32[2,64], index: 1, kind: input, shape index: {}]
  %s2 = inlined_call_operand.vmem [shape: bf16[1568,64], index: 2, kind: input, shape index: {}]
  %s3 = inlined_call_operand.vmem [shape: f32[1,64], index: 3, kind: input, shape index: {}]
  %s4 = inlined_call_operand.vmem [shape: f32[64,128], index: 4, kind: input, shape index: {}]
  %s5 = inlined_call_operand.vmem [shape: f32[1,128], index: 5, kind: input, shape index: {}]
  %s6 = inlined_call_operand.vmem [shape: f32[128,128], index: 6, kind: input, shape index: {}]
  %s7 = inlined_call_operand.vmem [shape: f32[1,128], index: 7, kind: input, shape index: {}]
  %s8 = inlined_call_operand.vmem [shape: f32[64,64], index: 8, kind: input, shape index: {}]
  %s9 = inlined_call_operand.vmem [shape: f32[1,64], index: 9, kind: input, shape index: {}]
  %s10 = inlined_call_operand.vmem [shape: bf16[64,1568], index: 10, kind: input, shape index: {}]
  %s11 = inlined_call_operand.vmem [shape: f32[1,1568], index: 11, kind: input, shape index: {}]
  %s12 = inlined_call_operand.hbm [shape: f32[2,64], index: 12, kind: output, shape index: {0}]
  %s13 = inlined_call_operand.hbm [shape: f32[2,64], index: 13, kind: output, shape index: {1}]
  %s14 = inlined_call_operand.vmem [shape: bf16[2,1568], index: 14, kind: output, shape index: {2}]
  %15 = xla_tuple %s12, %s13, %s14
  %s16 = sld [smem:[#allocation0]]
  $region74: #{landsat_cvae_forward.9} parent=0
    _
  %s18 = ssub.s32 1, %s16
  %s19 = scalar_select 0, %s18, %s16
  $region1: #{landsat_cvae_forward.9} parent=0
    #allocation2 [shape = 'u8[1024]{0}', space=vmem, size = 0x400, scoped, tag = 'output window, operand 0, single buffered']
    #allocation3 [shape = 's32[1]{0}', space=sflag, size = 0x4, scoped, tag = 'scoped memory for landsat_cvae_forward.9']
    #allocation4 [shape = 'u8[1024]{0}', space=vmem, size = 0x400, scoped, tag = 'output window, operand 1, single buffered']
    #allocation5 [shape = 's32[1]{0}', space=sflag, size = 0x4, scoped, tag = 'scoped memory for landsat_cvae_forward.9']
    %20 = vsyncpa [#allocation3], 0
    %21 = vsyncpa [#allocation5], 0
    // Predicated region
    $region2: #{landsat_cvae_forward.9} parent=1 // pred_check
      _
    $region3: #{landsat_cvae_forward.9} parent=1 // pred_check_branch
      %23 = sbr.rel (0) target = $region5
    $region4: #{landsat_cvae_forward.9} parent=1 // pred_region
      _
    $region5: #{landsat_cvae_forward.9} parent=1 // pred_fallthru
      _
    // Predicated region
    $region6: #{landsat_cvae_forward.9} parent=1 // pred_check
      _
    $region7: #{landsat_cvae_forward.9} parent=1 // pred_check_branch
      %25 = sbr.rel (0) target = $region9
    $region8: #{landsat_cvae_forward.9} parent=1 // pred_region
      _
    $region9: #{landsat_cvae_forward.9} parent=1 // pred_fallthru
      _
    // Predicated region
    $region10: #{landsat_cvae_forward.9} parent=1 // pred_check
      _
    $region11: #{landsat_cvae_forward.9} parent=1 // pred_check_branch
      %27 = sbr.rel (0) target = $region13
    $region12: #{landsat_cvae_forward.9} parent=1 // pred_region
      _
    $region13: #{landsat_cvae_forward.9} parent=1 // pred_fallthru
      _
    // Predicated region
    $region14: #{landsat_cvae_forward.9} parent=1 // pred_check
      _
    $region15: #{landsat_cvae_forward.9} parent=1 // pred_check_branch
      %29 = sbr.rel (0) target = $region17
    $region16: #{landsat_cvae_forward.9} parent=1 // pred_region
      _
    $region17: #{landsat_cvae_forward.9} parent=1 // pred_fallthru
      _
    // Predicated region
    $region18: #{landsat_cvae_forward.9} parent=1 // pred_check
      _
    $region19: #{landsat_cvae_forward.9} parent=1 // pred_check_branch
      %31 = sbr.rel (0) target = $region21
    $region20: #{landsat_cvae_forward.9} parent=1 // pred_region
      _
    $region21: #{landsat_cvae_forward.9} parent=1 // pred_fallthru
      _
    // Predicated region
    $region22: #{landsat_cvae_forward.9} parent=1 // pred_check
      _
    $region23: #{landsat_cvae_forward.9} parent=1 // pred_check_branch
      %33 = sbr.rel (0) target = $region25
    $region24: #{landsat_cvae_forward.9} parent=1 // pred_region
      _
    $region25: #{landsat_cvae_forward.9} parent=1 // pred_fallthru
      _
    // Predicated region
    $region26: #{landsat_cvae_forward.9} parent=1 // pred_check
      _
    $region27: #{landsat_cvae_forward.9} parent=1 // pred_check_branch
      %35 = sbr.rel (0) target = $region29
    $region28: #{landsat_cvae_forward.9} parent=1 // pred_region
      _
    $region29: #{landsat_cvae_forward.9} parent=1 // pred_fallthru
      _
    // Predicated region
    $region30: #{landsat_cvae_forward.9} parent=1 // pred_check
      _
    $region31: #{landsat_cvae_forward.9} parent=1 // pred_check_branch
      %37 = sbr.rel (0) target = $region33
    $region32: #{landsat_cvae_forward.9} parent=1 // pred_region
      _
    $region33: #{landsat_cvae_forward.9} parent=1 // pred_fallthru
      _
    // Predicated region
    $region34: #{landsat_cvae_forward.9} parent=1 // pred_check
      _
    $region35: #{landsat_cvae_forward.9} parent=1 // pred_check_branch
      %39 = sbr.rel (0) target = $region37
    $region36: #{landsat_cvae_forward.9} parent=1 // pred_region
      _
    $region37: #{landsat_cvae_forward.9} parent=1 // pred_fallthru
      _
    // Predicated region
    $region38: #{landsat_cvae_forward.9} parent=1 // pred_check
      _
    $region39: #{landsat_cvae_forward.9} parent=1 // pred_check_branch
      %41 = sbr.rel (0) target = $region41
    $region40: #{landsat_cvae_forward.9} parent=1 // pred_region
      _
    $region41: #{landsat_cvae_forward.9} parent=1 // pred_fallthru
      _
    // Predicated region
    $region42: #{landsat_cvae_forward.9} parent=1 // pred_check
      _
    $region43: #{landsat_cvae_forward.9} parent=1 // pred_check_branch
      %43 = sbr.rel (0) target = $region45
    $region44: #{landsat_cvae_forward.9} parent=1 // pred_region
      _
    $region45: #{landsat_cvae_forward.9} parent=1 // pred_fallthru
      _
    // Predicated region
    $region46: #{landsat_cvae_forward.9} parent=1 // pred_check
      _
    $region47: #{landsat_cvae_forward.9} parent=1 // pred_check_branch
      %45 = sbr.rel (0) target = $region49
    $region48: #{landsat_cvae_forward.9} parent=1 // pred_region
      _
    $region49: #{landsat_cvae_forward.9} parent=1 // pred_fallthru
      _
    %v47 = vld [vmem:[%s0] sm:$0xff]
    %v48 = vld [vmem:[%s0 + $0x8] sm:$0x1f]
    %v49 = vld [vmem:[%s2] sm:$0xf]
    %v50 = vld [vmem:[%s2 + $0x4] sm:$0xf]
    %v51 = vld [vmem:[%s2 + $0x8] sm:$0xf]
    %v52 = vld [vmem:[%s2 + $0xc] sm:$0xf]
    %v53 = vld [vmem:[%s2 + $0x10] sm:$0xf]
    %v54 = vld [vmem:[%s2 + $0x14] sm:$0xf]
    %v55 = vld [vmem:[%s2 + $0x18] sm:$0xf]
    %v56 = vld [vmem:[%s2 + $0x1c] sm:$0xf]
    %v57 = vld [vmem:[%s2 + $0x20] sm:$0xf]
    %v58 = vld [vmem:[%s2 + $0x24] sm:$0xf]
    %v59 = vld [vmem:[%s2 + $0x28] sm:$0xf]
    %v60 = vld [vmem:[%s2 + $0x2c] sm:$0xf]
    %v61 = vld [vmem:[%s2 + $0x30] sm:$0xf]
    %v62 = vld [vmem:[%s2 + $0x34] sm:$0xf]
    %v63 = vld [vmem:[%s2 + $0x38] sm:$0xf]
    %v64 = vld [vmem:[%s2 + $0x3c] sm:$0xf]
    %v65 = vld [vmem:[%s2 + $0x40] sm:$0xf]
    %v66 = vld [vmem:[%s2 + $0x44] sm:$0xf]
    %v67 = vld [vmem:[%s2 + $0x48] sm:$0xf]
    %v68 = vld [vmem:[%s2 + $0x4c] sm:$0xf]
    %v69 = vld [vmem:[%s2 + $0x50] sm:$0xf]
    %v70 = vld [vmem:[%s2 + $0x54] sm:$0xf]
    %v71 = vld [vmem:[%s2 + $0x58] sm:$0xf]
    %v72 = vld [vmem:[%s2 + $0x5c] sm:$0xf]
    %v73 = vld [vmem:[%s2 + $0x60] sm:$0xf]
    %v74 = vld [vmem:[%s2 + $0x64] sm:$0xf]
    %v75 = vld [vmem:[%s2 + $0x68] sm:$0xf]
    %v76 = vld [vmem:[%s2 + $0x6c] sm:$0xf]
    %v77 = vld [vmem:[%s2 + $0x70] sm:$0xf]
    %v78 = vld [vmem:[%s2 + $0x74] sm:$0xf]
    %v79 = vld [vmem:[%s2 + $0x78] sm:$0xf]
    %v80 = vld [vmem:[%s2 + $0x7c] sm:$0xf]
    %v81 = vld [vmem:[%s2 + $0x80] sm:$0xf]
    %v82 = vld [vmem:[%s2 + $0x84] sm:$0xf]
    %v83 = vld [vmem:[%s2 + $0x88] sm:$0xf]
    %v84 = vld [vmem:[%s2 + $0x8c] sm:$0xf]
    %v85 = vld [vmem:[%s2 + $0x90] sm:$0xf]
    %v86 = vld [vmem:[%s2 + $0x94] sm:$0xf]
    %v87 = vld [vmem:[%s2 + $0x98] sm:$0xf]
    %v88 = vld [vmem:[%s2 + $0x9c] sm:$0xf]
    %v89 = vld [vmem:[%s2 + $0xa0] sm:$0xf]
    %v90 = vld [vmem:[%s2 + $0xa4] sm:$0xf]
    %v91 = vld [vmem:[%s2 + $0xa8] sm:$0xf]
    %v92 = vld [vmem:[%s2 + $0xac] sm:$0xf]
    %v93 = vld [vmem:[%s2 + $0xb0] sm:$0xf]
    %v94 = vld [vmem:[%s2 + $0xb4] sm:$0xf]
    %v95 = vld [vmem:[%s2 + $0xb8] sm:$0xf]
    %v96 = vld [vmem:[%s2 + $0xbc] sm:$0xf]
    %v97 = vld [vmem:[%s2 + $0xc0] sm:$0xf]
    %v98 = vld [vmem:[%s2 + $0xc4] sm:$0xf]
    %v99 = vld [vmem:[%s2 + $0xc8] sm:$0xf]
    %v100 = vld [vmem:[%s2 + $0xcc] sm:$0xf]
    %v101 = vld [vmem:[%s2 + $0xd0] sm:$0xf]
    %v102 = vld [vmem:[%s2 + $0xd4] sm:$0xf]
    %v103 = vld [vmem:[%s2 + $0xd8] sm:$0xf]
    %v104 = vld [vmem:[%s2 + $0xdc] sm:$0xf]
    %v105 = vld [vmem:[%s2 + $0xe0] sm:$0xf]
    %v106 = vld [vmem:[%s2 + $0xe4] sm:$0xf]
    %v107 = vld [vmem:[%s2 + $0xe8] sm:$0xf]
    %v108 = vld [vmem:[%s2 + $0xec] sm:$0xf]
    %v109 = vld [vmem:[%s2 + $0xf0] sm:$0xf]
    %v110 = vld [vmem:[%s2 + $0xf4] sm:$0xf]
    %v111 = vld [vmem:[%s2 + $0xf8] sm:$0xf]
    %v112 = vld [vmem:[%s2 + $0xfc] sm:$0xf]
    %v113 = vld [vmem:[%s2 + $0x100] sm:$0xf]
    %v114 = vld [vmem:[%s2 + $0x104] sm:$0xf]
    %v115 = vld [vmem:[%s2 + $0x108] sm:$0xf]
    %v116 = vld [vmem:[%s2 + $0x10c] sm:$0xf]
    %v117 = vld [vmem:[%s2 + $0x110] sm:$0xf]
    %v118 = vld [vmem:[%s2 + $0x114] sm:$0xf]
    %v119 = vld [vmem:[%s2 + $0x118] sm:$0xf]
    %v120 = vld [vmem:[%s2 + $0x11c] sm:$0xf]
    %v121 = vld [vmem:[%s2 + $0x120] sm:$0xf]
    %v122 = vld [vmem:[%s2 + $0x124] sm:$0xf]
    %v123 = vld [vmem:[%s2 + $0x128] sm:$0xf]
    %v124 = vld [vmem:[%s2 + $0x12c] sm:$0xf]
    %v125 = vld [vmem:[%s2 + $0x130] sm:$0xf]
    %v126 = vld [vmem:[%s2 + $0x134] sm:$0xf]
    %v127 = vld [vmem:[%s2 + $0x138] sm:$0xf]
    %v128 = vld [vmem:[%s2 + $0x13c] sm:$0xf]
    %v129 = vld [vmem:[%s2 + $0x140] sm:$0xf]
    %v130 = vld [vmem:[%s2 + $0x144] sm:$0xf]
    %v131 = vld [vmem:[%s2 + $0x148] sm:$0xf]
    %v132 = vld [vmem:[%s2 + $0x14c] sm:$0xf]
    %v133 = vld [vmem:[%s2 + $0x150] sm:$0xf]
    %v134 = vld [vmem:[%s2 + $0x154] sm:$0xf]
    %v135 = vld [vmem:[%s2 + $0x158] sm:$0xf]
    %v136 = vld [vmem:[%s2 + $0x15c] sm:$0xf]
    %v137 = vld [vmem:[%s2 + $0x160] sm:$0xf]
    %v138 = vld [vmem:[%s2 + $0x164] sm:$0xf]
    %v139 = vld [vmem:[%s2 + $0x168] sm:$0xf]
    %v140 = vld [vmem:[%s2 + $0x16c] sm:$0xf]
    %v141 = vld [vmem:[%s2 + $0x170] sm:$0xf]
    %v142 = vld [vmem:[%s2 + $0x174] sm:$0xf]
    %v143 = vld [vmem:[%s2 + $0x178] sm:$0xf]
    %v144 = vld [vmem:[%s2 + $0x17c] sm:$0xf]
    %v145 = vld [vmem:[%s2 + $0x180] sm:$0xf]
    %v146 = vld [vmem:[%s2 + $0x184] sm:$0xf]
    %v147 = vld [vmem:[%s2 + $0x188] sm:$0xf]
    %v148 = vld [vmem:[%s2 + $0x18c] sm:$0xf]
    %v149 = vld [vmem:[%s2 + $0x190] sm:$0xf]
    %v150 = vld [vmem:[%s2 + $0x194] sm:$0xf]
    %v151 = vld [vmem:[%s2 + $0x198] sm:$0xf]
    %v152 = vld [vmem:[%s2 + $0x19c] sm:$0xf]
    %v153 = vld [vmem:[%s2 + $0x1a0] sm:$0xf]
    %v154 = vld [vmem:[%s2 + $0x1a4] sm:$0xf]
    %v155 = vld [vmem:[%s2 + $0x1a8] sm:$0xf]
    %v156 = vld [vmem:[%s2 + $0x1ac] sm:$0xf]
    %v157 = vld [vmem:[%s2 + $0x1b0] sm:$0xf]
    %v158 = vld [vmem:[%s2 + $0x1b4] sm:$0xf]
    %v159 = vld [vmem:[%s2 + $0x1b8] sm:$0xf]
    %v160 = vld [vmem:[%s2 + $0x1bc] sm:$0xf]
    %v161 = vld [vmem:[%s2 + $0x1c0] sm:$0xf]
    %v162 = vld [vmem:[%s2 + $0x1c4] sm:$0xf]
    %v163 = vld [vmem:[%s2 + $0x1c8] sm:$0xf]
    %v164 = vld [vmem:[%s2 + $0x1cc] sm:$0xf]
    %v165 = vld [vmem:[%s2 + $0x1d0] sm:$0xf]
    %v166 = vld [vmem:[%s2 + $0x1d4] sm:$0xf]
    %v167 = vld [vmem:[%s2 + $0x1d8] sm:$0xf]
    %v168 = vld [vmem:[%s2 + $0x1dc] sm:$0xf]
    %v169 = vld [vmem:[%s2 + $0x1e0] sm:$0xf]
    %v170 = vld [vmem:[%s2 + $0x1e4] sm:$0xf]
    %v171 = vld [vmem:[%s2 + $0x1e8] sm:$0xf]
    %v172 = vld [vmem:[%s2 + $0x1ec] sm:$0xf]
    %v173 = vld [vmem:[%s2 + $0x1f0] sm:$0xf]
    %v174 = vld [vmem:[%s2 + $0x1f4] sm:$0xf]
    %v175 = vld [vmem:[%s2 + $0x1f8] sm:$0xf]
    %v176 = vld [vmem:[%s2 + $0x1fc] sm:$0xf]
    %v177 = vld [vmem:[%s2 + $0x200] sm:$0xf]
    %v178 = vld [vmem:[%s2 + $0x204] sm:$0xf]
    %v179 = vld [vmem:[%s2 + $0x208] sm:$0xf]
    %v180 = vld [vmem:[%s2 + $0x20c] sm:$0xf]
    %v181 = vld [vmem:[%s2 + $0x210] sm:$0xf]
    %v182 = vld [vmem:[%s2 + $0x214] sm:$0xf]
    %v183 = vld [vmem:[%s2 + $0x218] sm:$0xf]
    %v184 = vld [vmem:[%s2 + $0x21c] sm:$0xf]
    %v185 = vld [vmem:[%s2 + $0x220] sm:$0xf]
    %v186 = vld [vmem:[%s2 + $0x224] sm:$0xf]
    %v187 = vld [vmem:[%s2 + $0x228] sm:$0xf]
    %v188 = vld [vmem:[%s2 + $0x22c] sm:$0xf]
    %v189 = vld [vmem:[%s2 + $0x230] sm:$0xf]
    %v190 = vld [vmem:[%s2 + $0x234] sm:$0xf]
    %v191 = vld [vmem:[%s2 + $0x238] sm:$0xf]
    %v192 = vld [vmem:[%s2 + $0x23c] sm:$0xf]
    %v193 = vld [vmem:[%s2 + $0x240] sm:$0xf]
    %v194 = vld [vmem:[%s2 + $0x244] sm:$0xf]
    %v195 = vld [vmem:[%s2 + $0x248] sm:$0xf]
    %v196 = vld [vmem:[%s2 + $0x24c] sm:$0xf]
    %v197 = vld [vmem:[%s2 + $0x250] sm:$0xf]
    %v198 = vld [vmem:[%s2 + $0x254] sm:$0xf]
    %v199 = vld [vmem:[%s2 + $0x258] sm:$0xf]
    %v200 = vld [vmem:[%s2 + $0x25c] sm:$0xf]
    %v201 = vld [vmem:[%s2 + $0x260] sm:$0xf]
    %v202 = vld [vmem:[%s2 + $0x264] sm:$0xf]
    %v203 = vld [vmem:[%s2 + $0x268] sm:$0xf]
    %v204 = vld [vmem:[%s2 + $0x26c] sm:$0xf]
    %v205 = vld [vmem:[%s2 + $0x270] sm:$0xf]
    %v206 = vld [vmem:[%s2 + $0x274] sm:$0xf]
    %v207 = vld [vmem:[%s2 + $0x278] sm:$0xf]
    %v208 = vld [vmem:[%s2 + $0x27c] sm:$0xf]
    %v209 = vld [vmem:[%s2 + $0x280] sm:$0xf]
    %v210 = vld [vmem:[%s2 + $0x284] sm:$0xf]
    %v211 = vld [vmem:[%s2 + $0x288] sm:$0xf]
    %v212 = vld [vmem:[%s2 + $0x28c] sm:$0xf]
    %v213 = vld [vmem:[%s2 + $0x290] sm:$0xf]
    %v214 = vld [vmem:[%s2 + $0x294] sm:$0xf]
    %v215 = vld [vmem:[%s2 + $0x298] sm:$0xf]
    %v216 = vld [vmem:[%s2 + $0x29c] sm:$0xf]
    %v217 = vld [vmem:[%s2 + $0x2a0] sm:$0xf]
    %v218 = vld [vmem:[%s2 + $0x2a4] sm:$0xf]
    %v219 = vld [vmem:[%s2 + $0x2a8] sm:$0xf]
    %v220 = vld [vmem:[%s2 + $0x2ac] sm:$0xf]
    %v221 = vld [vmem:[%s2 + $0x2b0] sm:$0xf]
    %v222 = vld [vmem:[%s2 + $0x2b4] sm:$0xf]
    %v223 = vld [vmem:[%s2 + $0x2b8] sm:$0xf]
    %v224 = vld [vmem:[%s2 + $0x2bc] sm:$0xf]
    %v225 = vld [vmem:[%s2 + $0x2c0] sm:$0xf]
    %v226 = vld [vmem:[%s2 + $0x2c4] sm:$0xf]
    %v227 = vld [vmem:[%s2 + $0x2c8] sm:$0xf]
    %v228 = vld [vmem:[%s2 + $0x2cc] sm:$0xf]
    %v229 = vld [vmem:[%s2 + $0x2d0] sm:$0xf]
    %v230 = vld [vmem:[%s2 + $0x2d4] sm:$0xf]
    %v231 = vld [vmem:[%s2 + $0x2d8] sm:$0xf]
    %v232 = vld [vmem:[%s2 + $0x2dc] sm:$0xf]
    %v233 = vld [vmem:[%s2 + $0x2e0] sm:$0xf]
    %v234 = vld [vmem:[%s2 + $0x2e4] sm:$0xf]
    %v235 = vld [vmem:[%s2 + $0x2e8] sm:$0xf]
    %v236 = vld [vmem:[%s2 + $0x2ec] sm:$0xf]
    %v237 = vld [vmem:[%s2 + $0x2f0] sm:$0xf]
    %v238 = vld [vmem:[%s2 + $0x2f4] sm:$0xf]
    %v239 = vld [vmem:[%s2 + $0x2f8] sm:$0xf]
    %v240 = vld [vmem:[%s2 + $0x2fc] sm:$0xf]
    %v241 = vld [vmem:[%s2 + $0x300] sm:$0xf]
    %v242 = vld [vmem:[%s2 + $0x304] sm:$0xf]
    %v243 = vld [vmem:[%s2 + $0x308] sm:$0xf]
    %v244 = vld [vmem:[%s2 + $0x30c] sm:$0xf]
    %v245 = vld [vmem:[%s3] sm:$0x1]
    %v247 = vperm.slane %v245, 0
    %250 = vst [vmem:[#allocation1] ss:$9 sm:$0xff] %v47
    %v251 = vld [vmem:[#allocation1] sm:$0xff]
    %v252 = vld [vmem:[#allocation1 + $0x9] sm:$0xff]
    %v253 = vld [vmem:[#allocation1 + $0x12] sm:$0xff]
    %v254 = vld [vmem:[#allocation1 + $0x1b] sm:$0xff]
    %v255 = vld [vmem:[#allocation1 + $0x24] sm:$0xff]
    %v256 = vld [vmem:[#allocation1 + $0x2d] sm:$0xff]
    %v257 = vld [vmem:[#allocation1 + $0x36] sm:$0xff]
    %v258 = vld [vmem:[#allocation1 + $0x3f] sm:$0xff]
    %260 = vst [vmem:[#allocation1] ss:$9 sm:$0xff] %v48
    %v261 = vld [vmem:[#allocation1] sm:$0xff]
    %v262 = vld [vmem:[#allocation1 + $0x9] sm:$0xff]
    %v263 = vld [vmem:[#allocation1 + $0x12] sm:$0xff]
    %v264 = vld [vmem:[#allocation1 + $0x1b] sm:$0xff]
    %v265 = vld [vmem:[#allocation1 + $0x24] sm:$0xff]
    %v474 = vunpack.c.l.b16 %v49
    %v475 = vunpack.c.l.b16 %v50
    %v476 = vunpack.c.l.b16 %v51
    %v477 = vunpack.c.l.b16 %v52
    %v478 = vunpack.c.l.b16 %v53
    %v479 = vunpack.c.l.b16 %v54
    %v480 = vunpack.c.l.b16 %v55
    %v481 = vunpack.c.l.b16 %v56
    %v482 = vunpack.c.l.b16 %v57
    %v483 = vunpack.c.l.b16 %v58
    %v484 = vunpack.c.l.b16 %v59
    %v485 = vunpack.c.l.b16 %v60
    %v486 = vunpack.c.l.b16 %v61
    %v487 = vunpack.c.l.b16 %v62
    %v488 = vunpack.c.l.b16 %v63
    %v489 = vunpack.c.l.b16 %v64
    %v490 = vunpack.c.l.b16 %v65
    %v491 = vunpack.c.l.b16 %v66
    %v492 = vunpack.c.l.b16 %v67
    %v493 = vunpack.c.l.b16 %v68
    %v494 = vunpack.c.l.b16 %v69
    %v495 = vunpack.c.l.b16 %v70
    %v496 = vunpack.c.l.b16 %v71
    %v497 = vunpack.c.l.b16 %v72
    %v498 = vunpack.c.l.b16 %v73
    %v499 = vunpack.c.l.b16 %v74
    %v500 = vunpack.c.l.b16 %v75
    %v501 = vunpack.c.l.b16 %v76
    %v502 = vunpack.c.l.b16 %v77
    %v503 = vunpack.c.l.b16 %v78
    %v504 = vunpack.c.l.b16 %v79
    %v505 = vunpack.c.l.b16 %v80
    %v506 = vunpack.c.l.b16 %v81
    %v507 = vunpack.c.l.b16 %v82
    %v508 = vunpack.c.l.b16 %v83
    %v509 = vunpack.c.l.b16 %v84
    %v510 = vunpack.c.l.b16 %v85
    %v511 = vunpack.c.l.b16 %v86
    %v512 = vunpack.c.l.b16 %v87
    %v513 = vunpack.c.l.b16 %v88
    %v514 = vunpack.c.l.b16 %v89
    %v515 = vunpack.c.l.b16 %v90
    %v516 = vunpack.c.l.b16 %v91
    %v517 = vunpack.c.l.b16 %v92
    %v518 = vunpack.c.l.b16 %v93
    %v519 = vunpack.c.l.b16 %v94
    %v520 = vunpack.c.l.b16 %v95
    %v521 = vunpack.c.l.b16 %v96
    %v522 = vunpack.c.l.b16 %v97
    %v523 = vunpack.c.l.b16 %v98
    %v524 = vunpack.c.l.b16 %v99
    %v525 = vunpack.c.l.b16 %v100
    %v526 = vunpack.c.l.b16 %v101
    %v527 = vunpack.c.l.b16 %v102
    %v528 = vunpack.c.l.b16 %v103
    %v529 = vunpack.c.l.b16 %v104
    %v530 = vunpack.c.l.b16 %v105
    %v531 = vunpack.c.l.b16 %v106
    %v532 = vunpack.c.l.b16 %v107
    %v533 = vunpack.c.l.b16 %v108
    %v534 = vunpack.c.l.b16 %v109
    %v535 = vunpack.c.l.b16 %v110
    %v536 = vunpack.c.l.b16 %v111
    %v537 = vunpack.c.l.b16 %v112
    %v538 = vunpack.c.l.b16 %v113
    %v539 = vunpack.c.l.b16 %v114
    %v540 = vunpack.c.l.b16 %v115
    %v541 = vunpack.c.l.b16 %v116
    %v542 = vunpack.c.l.b16 %v117
    %v543 = vunpack.c.l.b16 %v118
    %v544 = vunpack.c.l.b16 %v119
    %v545 = vunpack.c.l.b16 %v120
    %v546 = vunpack.c.l.b16 %v121
    %v547 = vunpack.c.l.b16 %v122
    %v548 = vunpack.c.l.b16 %v123
    %v549 = vunpack.c.l.b16 %v124
    %v550 = vunpack.c.l.b16 %v125
    %v551 = vunpack.c.l.b16 %v126
    %v552 = vunpack.c.l.b16 %v127
    %v553 = vunpack.c.l.b16 %v128
    %v554 = vunpack.c.l.b16 %v129
    %v555 = vunpack.c.l.b16 %v130
    %v556 = vunpack.c.l.b16 %v131
    %v557 = vunpack.c.l.b16 %v132
    %v558 = vunpack.c.l.b16 %v133
    %v559 = vunpack.c.l.b16 %v134
    %v560 = vunpack.c.l.b16 %v135
    %v561 = vunpack.c.l.b16 %v136
    %v562 = vunpack.c.l.b16 %v137
    %v563 = vunpack.c.l.b16 %v138
    %v564 = vunpack.c.l.b16 %v139
    %v565 = vunpack.c.l.b16 %v140
    %v566 = vunpack.c.l.b16 %v141
    %v567 = vunpack.c.l.b16 %v142
    %v568 = vunpack.c.l.b16 %v143
    %v569 = vunpack.c.l.b16 %v144
    %v570 = vunpack.c.l.b16 %v145
    %v571 = vunpack.c.l.b16 %v146
    %v572 = vunpack.c.l.b16 %v147
    %v573 = vunpack.c.l.b16 %v148
    %v574 = vunpack.c.l.b16 %v149
    %v575 = vunpack.c.l.b16 %v150
    %v576 = vunpack.c.l.b16 %v151
    %v577 = vunpack.c.l.b16 %v152
    %v578 = vunpack.c.l.b16 %v153
    %v579 = vunpack.c.l.b16 %v154
    %v580 = vunpack.c.l.b16 %v155
    %v581 = vunpack.c.l.b16 %v156
    %v582 = vunpack.c.l.b16 %v157
    %v583 = vunpack.c.l.b16 %v158
    %v584 = vunpack.c.l.b16 %v159
    %v585 = vunpack.c.l.b16 %v160
    %v586 = vunpack.c.l.b16 %v161
    %v587 = vunpack.c.l.b16 %v162
    %v588 = vunpack.c.l.b16 %v163
    %v589 = vunpack.c.l.b16 %v164
    %v590 = vunpack.c.l.b16 %v165
    %v591 = vunpack.c.l.b16 %v166
    %v592 = vunpack.c.l.b16 %v167
    %v593 = vunpack.c.l.b16 %v168
    %v594 = vunpack.c.l.b16 %v169
    %v595 = vunpack.c.l.b16 %v170
    %v596 = vunpack.c.l.b16 %v171
    %v597 = vunpack.c.l.b16 %v172
    %v598 = vunpack.c.l.b16 %v173
    %v599 = vunpack.c.l.b16 %v174
    %v600 = vunpack.c.l.b16 %v175
    %v601 = vunpack.c.l.b16 %v176
    %v602 = vunpack.c.l.b16 %v177
    %v603 = vunpack.c.l.b16 %v178
    %v604 = vunpack.c.l.b16 %v179
    %v605 = vunpack.c.l.b16 %v180
    %v606 = vunpack.c.l.b16 %v181
    %v607 = vunpack.c.l.b16 %v182
    %v608 = vunpack.c.l.b16 %v183
    %v609 = vunpack.c.l.b16 %v184
    %v610 = vunpack.c.l.b16 %v185
    %v611 = vunpack.c.l.b16 %v186
    %v612 = vunpack.c.l.b16 %v187
    %v613 = vunpack.c.l.b16 %v188
    %v614 = vunpack.c.l.b16 %v189
    %v615 = vunpack.c.l.b16 %v190
    %v616 = vunpack.c.l.b16 %v191
    %v617 = vunpack.c.l.b16 %v192
    %v618 = vunpack.c.l.b16 %v193
    %v619 = vunpack.c.l.b16 %v194
    %v620 = vunpack.c.l.b16 %v195
    %v621 = vunpack.c.l.b16 %v196
    %v622 = vunpack.c.l.b16 %v197
    %v623 = vunpack.c.l.b16 %v198
    %v624 = vunpack.c.l.b16 %v199
    %v625 = vunpack.c.l.b16 %v200
    %v626 = vunpack.c.l.b16 %v201
    %v627 = vunpack.c.l.b16 %v202
    %v628 = vunpack.c.l.b16 %v203
    %v629 = vunpack.c.l.b16 %v204
    %v630 = vunpack.c.l.b16 %v205
    %v631 = vunpack.c.l.b16 %v206
    %v632 = vunpack.c.l.b16 %v207
    %v633 = vunpack.c.l.b16 %v208
    %v634 = vunpack.c.l.b16 %v209
    %v635 = vunpack.c.l.b16 %v210
    %v636 = vunpack.c.l.b16 %v211
    %v637 = vunpack.c.l.b16 %v212
    %v638 = vunpack.c.l.b16 %v213
    %v639 = vunpack.c.l.b16 %v214
    %v640 = vunpack.c.l.b16 %v215
    %v641 = vunpack.c.l.b16 %v216
    %v642 = vunpack.c.l.b16 %v217
    %v643 = vunpack.c.l.b16 %v218
    %v644 = vunpack.c.l.b16 %v219
    %v645 = vunpack.c.l.b16 %v220
    %v646 = vunpack.c.l.b16 %v221
    %v647 = vunpack.c.l.b16 %v222
    %v648 = vunpack.c.l.b16 %v223
    %v649 = vunpack.c.l.b16 %v224
    %v650 = vunpack.c.l.b16 %v225
    %v651 = vunpack.c.l.b16 %v226
    %v652 = vunpack.c.l.b16 %v227
    %v653 = vunpack.c.l.b16 %v228
    %v654 = vunpack.c.l.b16 %v229
    %v655 = vunpack.c.l.b16 %v230
    %v656 = vunpack.c.l.b16 %v231
    %v657 = vunpack.c.l.b16 %v232
    %v658 = vunpack.c.l.b16 %v233
    %v659 = vunpack.c.l.b16 %v234
    %v660 = vunpack.c.l.b16 %v235
    %v661 = vunpack.c.l.b16 %v236
    %v662 = vunpack.c.l.b16 %v237
    %v663 = vunpack.c.l.b16 %v238
    %v664 = vunpack.c.l.b16 %v239
    %v665 = vunpack.c.l.b16 %v240
    %v666 = vunpack.c.l.b16 %v241
    %v667 = vunpack.c.l.b16 %v242
    %v668 = vunpack.c.l.b16 %v243
    %v669 = vunpack.c.l.b16 %v244
    %v670 = vpack.c.b16 %v475, %v474
    %v671 = vpack.c.b16 %v477, %v476
    %v672 = vpack.c.b16 %v479, %v478
    %v673 = vpack.c.b16 %v481, %v480
    %v674 = vpack.c.b16 %v483, %v482
    %v675 = vpack.c.b16 %v485, %v484
    %v676 = vpack.c.b16 %v487, %v486
    %v677 = vpack.c.b16 %v489, %v488
    %v678 = vpack.c.b16 %v491, %v490
    %v679 = vpack.c.b16 %v493, %v492
    %v680 = vpack.c.b16 %v495, %v494
    %v681 = vpack.c.b16 %v497, %v496
    %v682 = vpack.c.b16 %v499, %v498
    %v683 = vpack.c.b16 %v501, %v500
    %v684 = vpack.c.b16 %v503, %v502
    %v685 = vpack.c.b16 %v505, %v504
    %v686 = vpack.c.b16 %v507, %v506
    %v687 = vpack.c.b16 %v509, %v508
    %v688 = vpack.c.b16 %v511, %v510
    %v689 = vpack.c.b16 %v513, %v512
    %v690 = vpack.c.b16 %v515, %v514
    %v691 = vpack.c.b16 %v517, %v516
    %v692 = vpack.c.b16 %v519, %v518
    %v693 = vpack.c.b16 %v521, %v520
    %v694 = vpack.c.b16 %v523, %v522
    %v695 = vpack.c.b16 %v525, %v524
    %v696 = vpack.c.b16 %v527, %v526
    %v697 = vpack.c.b16 %v529, %v528
    %v698 = vpack.c.b16 %v531, %v530
    %v699 = vpack.c.b16 %v533, %v532
    %v700 = vpack.c.b16 %v535, %v534
    %v701 = vpack.c.b16 %v537, %v536
    %v702 = vpack.c.b16 %v539, %v538
    %v703 = vpack.c.b16 %v541, %v540
    %v704 = vpack.c.b16 %v543, %v542
    %v705 = vpack.c.b16 %v545, %v544
    %v706 = vpack.c.b16 %v547, %v546
    %v707 = vpack.c.b16 %v549, %v548
    %v708 = vpack.c.b16 %v551, %v550
    %v709 = vpack.c.b16 %v553, %v552
    %v710 = vpack.c.b16 %v555, %v554
    %v711 = vpack.c.b16 %v557, %v556
    %v712 = vpack.c.b16 %v559, %v558
    %v713 = vpack.c.b16 %v561, %v560
    %v714 = vpack.c.b16 %v563, %v562
    %v715 = vpack.c.b16 %v565, %v564
    %v716 = vpack.c.b16 %v567, %v566
    %v717 = vpack.c.b16 %v569, %v568
    %v718 = vpack.c.b16 %v571, %v570
    %v719 = vpack.c.b16 %v573, %v572
    %v720 = vpack.c.b16 %v575, %v574
    %v721 = vpack.c.b16 %v577, %v576
    %v722 = vpack.c.b16 %v579, %v578
    %v723 = vpack.c.b16 %v581, %v580
    %v724 = vpack.c.b16 %v583, %v582
    %v725 = vpack.c.b16 %v585, %v584
    %v726 = vpack.c.b16 %v587, %v586
    %v727 = vpack.c.b16 %v589, %v588
    %v728 = vpack.c.b16 %v591, %v590
    %v729 = vpack.c.b16 %v593, %v592
    %v730 = vpack.c.b16 %v595, %v594
    %v731 = vpack.c.b16 %v597, %v596
    %v732 = vpack.c.b16 %v599, %v598
    %v733 = vpack.c.b16 %v601, %v600
    %v734 = vpack.c.b16 %v603, %v602
    %v735 = vpack.c.b16 %v605, %v604
    %v736 = vpack.c.b16 %v607, %v606
    %v737 = vpack.c.b16 %v609, %v608
    %v738 = vpack.c.b16 %v611, %v610
    %v739 = vpack.c.b16 %v613, %v612
    %v740 = vpack.c.b16 %v615, %v614
    %v741 = vpack.c.b16 %v617, %v616
    %v742 = vpack.c.b16 %v619, %v618
    %v743 = vpack.c.b16 %v621, %v620
    %v744 = vpack.c.b16 %v623, %v622
    %v745 = vpack.c.b16 %v625, %v624
    %v746 = vpack.c.b16 %v627, %v626
    %v747 = vpack.c.b16 %v629, %v628
    %v748 = vpack.c.b16 %v631, %v630
    %v749 = vpack.c.b16 %v633, %v632
    %v750 = vpack.c.b16 %v635, %v634
    %v751 = vpack.c.b16 %v637, %v636
    %v752 = vpack.c.b16 %v639, %v638
    %v753 = vpack.c.b16 %v641, %v640
    %v754 = vpack.c.b16 %v643, %v642
    %v755 = vpack.c.b16 %v645, %v644
    %v756 = vpack.c.b16 %v647, %v646
    %v757 = vpack.c.b16 %v649, %v648
    %v758 = vpack.c.b16 %v651, %v650
    %v759 = vpack.c.b16 %v653, %v652
    %v760 = vpack.c.b16 %v655, %v654
    %v761 = vpack.c.b16 %v657, %v656
    %v762 = vpack.c.b16 %v659, %v658
    %v763 = vpack.c.b16 %v661, %v660
    %v764 = vpack.c.b16 %v663, %v662
    %v765 = vpack.c.b16 %v665, %v664
    %v766 = vpack.c.b16 %v667, %v666
    %v767 = vpack.c.b16 %v669, %v668
    %vm866 = vcmask 261120
    %v867 = vsel %vm866, %v265, 0
    %869 = vmatpush.bf16.msra.mxu0 %v677
    %870 = vmatpush.bf16.msra.mxu0 %v676
    %871 = vmatpush.bf16.msra.mxu0 %v675
    %872 = vmatpush.bf16.msra.mxu0 %v674
    %873 = vmatpush.bf16.msra.mxu0 %v673
    %874 = vmatpush.bf16.msra.mxu0 %v672
    %875 = vmatpush.bf16.msra.mxu0 %v671
    %876 = vmatpush.bf16.msra.mxu0 %v670
    %877 = vmatmul.bf16.gmra.mxu0 %v251
    %v878 = vpop.f32.mrf.mxu0
    %v879 = vadd.f32 %v247, %v878
    %v880 = vpop.f32.mrf.mxu0
    %881 = vdwg.mxu0
    %882 = vmatpush.bf16.msra.mxu0 %v685
    %883 = vmatpush.bf16.msra.mxu0 %v684
    %884 = vmatpush.bf16.msra.mxu0 %v683
    %885 = vmatpush.bf16.msra.mxu0 %v682
    %886 = vmatpush.bf16.msra.mxu0 %v681
    %887 = vmatpush.bf16.msra.mxu0 %v680
    %888 = vmatpush.bf16.msra.mxu0 %v679
    %889 = vmatpush.bf16.msra.mxu0 %v678
    %890 = vmatmul.bf16.gmra.mxu0 %v252
    %v891 = vpop.f32.mrf.mxu0
    %v892 = vadd.f32 %v879, %v891
    %v893 = vpop.f32.mrf.mxu0
    %894 = vdwg.mxu0
    %895 = vmatpush.bf16.msra.mxu0 %v693
    %896 = vmatpush.bf16.msra.mxu0 %v692
    %897 = vmatpush.bf16.msra.mxu0 %v691
    %898 = vmatpush.bf16.msra.mxu0 %v690
    %899 = vmatpush.bf16.msra.mxu0 %v689
    %900 = vmatpush.bf16.msra.mxu0 %v688
    %901 = vmatpush.bf16.msra.mxu0 %v687
    %902 = vmatpush.bf16.msra.mxu0 %v686
    %903 = vmatmul.bf16.gmra.mxu0 %v253
    %v904 = vpop.f32.mrf.mxu0
    %v905 = vadd.f32 %v892, %v904
    %v906 = vpop.f32.mrf.mxu0
    %907 = vdwg.mxu0
    %908 = vmatpush.bf16.msra.mxu0 %v701
    %909 = vmatpush.bf16.msra.mxu0 %v700
    %910 = vmatpush.bf16.msra.mxu0 %v699
    %911 = vmatpush.bf16.msra.mxu0 %v698
    %912 = vmatpush.bf16.msra.mxu0 %v697
    %913 = vmatpush.bf16.msra.mxu0 %v696
    %914 = vmatpush.bf16.msra.mxu0 %v695
    %915 = vmatpush.bf16.msra.mxu0 %v694
    %916 = vmatmul.bf16.gmra.mxu0 %v254
    %v917 = vpop.f32.mrf.mxu0
    %v918 = vadd.f32 %v905, %v917
    %v919 = vpop.f32.mrf.mxu0
    %920 = vdwg.mxu0
    %921 = vmatpush.bf16.msra.mxu0 %v709
    %922 = vmatpush.bf16.msra.mxu0 %v708
    %923 = vmatpush.bf16.msra.mxu0 %v707
    %924 = vmatpush.bf16.msra.mxu0 %v706
    %925 = vmatpush.bf16.msra.mxu0 %v705
    %926 = vmatpush.bf16.msra.mxu0 %v704
    %927 = vmatpush.bf16.msra.mxu0 %v703
    %928 = vmatpush.bf16.msra.mxu0 %v702
    %929 = vmatmul.bf16.gmra.mxu0 %v255
    %v930 = vpop.f32.mrf.mxu0
    %v931 = vadd.f32 %v918, %v930
    %v932 = vpop.f32.mrf.mxu0
    %933 = vdwg.mxu0
    %934 = vmatpush.bf16.msra.mxu0 %v717
    %935 = vmatpush.bf16.msra.mxu0 %v716
    %936 = vmatpush.bf16.msra.mxu0 %v715
    %937 = vmatpush.bf16.msra.mxu0 %v714
    %938 = vmatpush.bf16.msra.mxu0 %v713
    %939 = vmatpush.bf16.msra.mxu0 %v712
    %940 = vmatpush.bf16.msra.mxu0 %v711
    %941 = vmatpush.bf16.msra.mxu0 %v710
    %942 = vmatmul.bf16.gmra.mxu0 %v256
    %v943 = vpop.f32.mrf.mxu0
    %v944 = vadd.f32 %v931, %v943
    %v945 = vpop.f32.mrf.mxu0
    %946 = vdwg.mxu0
    %947 = vmatpush.bf16.msra.mxu0 %v725
    %948 = vmatpush.bf16.msra.mxu0 %v724
    %949 = vmatpush.bf16.msra.mxu0 %v723
    %950 = vmatpush.bf16.msra.mxu0 %v722
    %951 = vmatpush.bf16.msra.mxu0 %v721
    %952 = vmatpush.bf16.msra.mxu0 %v720
    %953 = vmatpush.bf16.msra.mxu0 %v719
    %954 = vmatpush.bf16.msra.mxu0 %v718
    %955 = vmatmul.bf16.gmra.mxu0 %v257
    %v956 = vpop.f32.mrf.mxu0
    %v957 = vadd.f32 %v944, %v956
    %v958 = vpop.f32.mrf.mxu0
    %959 = vdwg.mxu0
    %960 = vmatpush.bf16.msra.mxu0 %v733
    %961 = vmatpush.bf16.msra.mxu0 %v732
    %962 = vmatpush.bf16.msra.mxu0 %v731
    %963 = vmatpush.bf16.msra.mxu0 %v730
    %964 = vmatpush.bf16.msra.mxu0 %v729
    %965 = vmatpush.bf16.msra.mxu0 %v728
    %966 = vmatpush.bf16.msra.mxu0 %v727
    %967 = vmatpush.bf16.msra.mxu0 %v726
    %968 = vmatmul.bf16.gmra.mxu0 %v258
    %v969 = vpop.f32.mrf.mxu0
    %v970 = vadd.f32 %v957, %v969
    %v971 = vpop.f32.mrf.mxu0
    %972 = vdwg.mxu0
    %973 = vmatpush.bf16.msra.mxu0 %v741
    %974 = vmatpush.bf16.msra.mxu0 %v740
    %975 = vmatpush.bf16.msra.mxu0 %v739
    %976 = vmatpush.bf16.msra.mxu0 %v738
    %977 = vmatpush.bf16.msra.mxu0 %v737
    %978 = vmatpush.bf16.msra.mxu0 %v736
    %979 = vmatpush.bf16.msra.mxu0 %v735
    %980 = vmatpush.bf16.msra.mxu0 %v734
    %981 = vmatmul.bf16.gmra.mxu0 %v261
    %v982 = vpop.f32.mrf.mxu0
    %v983 = vadd.f32 %v970, %v982
    %v984 = vpop.f32.mrf.mxu0
    %985 = vdwg.mxu0
    %986 = vmatpush.bf16.msra.mxu0 %v749
    %987 = vmatpush.bf16.msra.mxu0 %v748
    %988 = vmatpush.bf16.msra.mxu0 %v747
    %989 = vmatpush.bf16.msra.mxu0 %v746
    %990 = vmatpush.bf16.msra.mxu0 %v745
    %991 = vmatpush.bf16.msra.mxu0 %v744
    %992 = vmatpush.bf16.msra.mxu0 %v743
    %993 = vmatpush.bf16.msra.mxu0 %v742
    %994 = vmatmul.bf16.gmra.mxu0 %v262
    %v995 = vpop.f32.mrf.mxu0
    %v996 = vadd.f32 %v983, %v995
    %v997 = vpop.f32.mrf.mxu0
    %998 = vdwg.mxu0
    %999 = vmatpush.bf16.msra.mxu0 %v757
    %1000 = vmatpush.bf16.msra.mxu0 %v756
    %1001 = vmatpush.bf16.msra.mxu0 %v755
    %1002 = vmatpush.bf16.msra.mxu0 %v754
    %1003 = vmatpush.bf16.msra.mxu0 %v753
    %1004 = vmatpush.bf16.msra.mxu0 %v752
    %1005 = vmatpush.bf16.msra.mxu0 %v751
    %1006 = vmatpush.bf16.msra.mxu0 %v750
    %1007 = vmatmul.bf16.gmra.mxu0 %v263
    %v1008 = vpop.f32.mrf.mxu0
    %v1009 = vadd.f32 %v996, %v1008
    %v1010 = vpop.f32.mrf.mxu0
    %1011 = vdwg.mxu0
    %1012 = vmatpush.bf16.msra.mxu0 %v765
    %1013 = vmatpush.bf16.msra.mxu0 %v764
    %1014 = vmatpush.bf16.msra.mxu0 %v763
    %1015 = vmatpush.bf16.msra.mxu0 %v762
    %1016 = vmatpush.bf16.msra.mxu0 %v761
    %1017 = vmatpush.bf16.msra.mxu0 %v760
    %1018 = vmatpush.bf16.msra.mxu0 %v759
    %1019 = vmatpush.bf16.msra.mxu0 %v758
    %1020 = vmatmul.bf16.gmra.mxu0 %v264
    %v1021 = vpop.f32.mrf.mxu0
    %v1022 = vadd.f32 %v1009, %v1021
    %v1023 = vpop.f32.mrf.mxu0
    %1024 = vdwg.mxu0
    %1025 = vmatpush.bf16.msra.mxu0 0
    %1026 = vmatpush.bf16.msra.mxu0 0
    %1027 = vmatpush.bf16.msra.mxu0 0
    %1028 = vmatpush.bf16.msra.mxu0 0
    %1029 = vmatpush.bf16.msra.mxu0 0
    %1030 = vmatpush.bf16.msra.mxu0 0
    %1031 = vmatpush.bf16.msra.mxu0 %v767
    %1032 = vmatpush.bf16.msra.mxu0 %v766
    %1033 = vmatmul.bf16.gmra.mxu0 %v867
    %v1034 = vpop.f32.mrf.mxu0
    %v1035 = vadd.f32 %v1022, %v1034
    %v1036 = vpop.f32.mrf.mxu0
    %1037 = vdwg.mxu0
    %vm1038 = vcmp.ge.f32.partialorder %v1035, 0.0
    %v1039 = vmul.f32 %v1035, 0.01
    %v1040 = vsel %vm1038, %v1035, %v1039
    %v1041 = vld [vmem:[%s4] sm:$0xff]
    %v1042 = vld [vmem:[%s4 + $0x8] sm:$0xff]
    %v1043 = vld [vmem:[%s4 + $0x10] sm:$0xff]
    %v1044 = vld [vmem:[%s4 + $0x18] sm:$0xff]
    %v1045 = vld [vmem:[%s4 + $0x20] sm:$0xff]
    %v1046 = vld [vmem:[%s4 + $0x28] sm:$0xff]
    %v1047 = vld [vmem:[%s4 + $0x30] sm:$0xff]
    %v1048 = vld [vmem:[%s4 + $0x38] sm:$0xff]
    %v1049 = vld [vmem:[%s5] sm:$0x1]
    %v1051 = vperm.slane %v1049, 0
    %vm1053 = vcmask 523264
    %v1055 = vsel %vm1053, %v1040, 0
    %1057 = vmatpush.msra.mxu0 0.0
    %1058 = vmatpush.msra.mxu0 0.0
    %1059 = vmatpush.msra.mxu0 0.0
    %1060 = vmatpush.msra.mxu0 0.0
    %1061 = vmatpush.msra.mxu0 0.0
    %1062 = vmatpush.msra.mxu0 0.0
    %1063 = vmatpush.msra.mxu0 0.0
    %1064 = vmatpush.msra.mxu0 0.0
    %1065 = vmatpush.msra.mxu0 %v1048
    %1066 = vmatpush.msra.mxu0 %v1047
    %1067 = vmatpush.msra.mxu0 %v1046
    %1068 = vmatpush.msra.mxu0 %v1045
    %1069 = vmatpush.msra.mxu0 %v1044
    %1070 = vmatpush.msra.mxu0 %v1043
    %1071 = vmatpush.msra.mxu0 %v1042
    %1072 = vmatpush.msra.mxu0 %v1041
    %1073 = vmatmul.f32.gmra.mxu0 %v1055
    %v1074 = vpop.f32.mrf.mxu0
    %v1075 = vadd.f32 %v1051, %v1074
    %1076 = vdwg.mxu0
    %v1077 = vld [vmem:[%s6] sm:$0xff]
    %v1078 = vld [vmem:[%s6 + $0x8] sm:$0xff]
    %v1079 = vld [vmem:[%s6 + $0x10] sm:$0xff]
    %v1080 = vld [vmem:[%s6 + $0x18] sm:$0xff]
    %v1081 = vld [vmem:[%s6 + $0x20] sm:$0xff]
    %v1082 = vld [vmem:[%s6 + $0x28] sm:$0xff]
    %v1083 = vld [vmem:[%s6 + $0x30] sm:$0xff]
    %v1084 = vld [vmem:[%s6 + $0x38] sm:$0xff]
    %v1085 = vld [vmem:[%s6 + $0x40] sm:$0xff]
    %v1086 = vld [vmem:[%s6 + $0x48] sm:$0xff]
    %v1087 = vld [vmem:[%s6 + $0x50] sm:$0xff]
    %v1088 = vld [vmem:[%s6 + $0x58] sm:$0xff]
    %v1089 = vld [vmem:[%s6 + $0x60] sm:$0xff]
    %v1090 = vld [vmem:[%s6 + $0x68] sm:$0xff]
    %v1091 = vld [vmem:[%s6 + $0x70] sm:$0xff]
    %v1092 = vld [vmem:[%s6 + $0x78] sm:$0xff]
    %v1093 = vld [vmem:[%s7] sm:$0x1]
    %v1095 = vperm.slane %v1093, 0
    %1097 = vmatpush.msra.mxu0 %v1092
    %1098 = vmatpush.msra.mxu0 %v1091
    %1099 = vmatpush.msra.mxu0 %v1090
    %1100 = vmatpush.msra.mxu0 %v1089
    %1101 = vmatpush.msra.mxu0 %v1088
    %1102 = vmatpush.msra.mxu0 %v1087
    %1103 = vmatpush.msra.mxu0 %v1086
    %1104 = vmatpush.msra.mxu0 %v1085
    %1105 = vmatpush.msra.mxu0 %v1084
    %1106 = vmatpush.msra.mxu0 %v1083
    %1107 = vmatpush.msra.mxu0 %v1082
    %1108 = vmatpush.msra.mxu0 %v1081
    %1109 = vmatpush.msra.mxu0 %v1080
    %1110 = vmatpush.msra.mxu0 %v1079
    %1111 = vmatpush.msra.mxu0 %v1078
    %1112 = vmatpush.msra.mxu0 %v1077
    %1113 = vmatmul.f32.gmra.mxu0 %v1075
    %v1114 = vpop.f32.mrf.mxu0
    %v1115 = vadd.f32 %v1095, %v1114
    %1116 = vdwg.mxu0
    %v1117 = vmul.f32 %v1115, 0.5
    %v1118 = vmul.f32 %v1117, 1.442695
    %v1119 = vpow.pop %v1118
    %v1120 = vld [vmem:[%s1] sm:$0x3]
    %1122 = vrot.lane.b32.xlu0 %v1119, 64
    %v1123 = vpop.permute.xlu0 %1122
    %v1125 = vmul.f32 %v1120, %v1123
    %v1126 = vadd.f32 %v1115, %v1125
    %v1127 = vld [vmem:[%s8] sm:$0xff]
    %v1128 = vld [vmem:[%s8 + $0x8] sm:$0xff]
    %v1129 = vld [vmem:[%s8 + $0x10] sm:$0xff]
    %v1130 = vld [vmem:[%s8 + $0x18] sm:$0xff]
    %v1131 = vld [vmem:[%s8 + $0x20] sm:$0xff]
    %v1132 = vld [vmem:[%s8 + $0x28] sm:$0xff]
    %v1133 = vld [vmem:[%s8 + $0x30] sm:$0xff]
    %v1134 = vld [vmem:[%s8 + $0x38] sm:$0xff]
    %v1135 = vld [vmem:[%s9] sm:$0x1]
    %v1137 = vperm.slane %v1135, 0
    %v1140 = vsel %vm1053, %v1126, 0
    %1142 = vmatpush.msra.mxu0 0.0
    %1143 = vmatpush.msra.mxu0 0.0
    %1144 = vmatpush.msra.mxu0 0.0
    %1145 = vmatpush.msra.mxu0 0.0
    %1146 = vmatpush.msra.mxu0 0.0
    %1147 = vmatpush.msra.mxu0 0.0
    %1148 = vmatpush.msra.mxu0 0.0
    %1149 = vmatpush.msra.mxu0 0.0
    %1150 = vmatpush.msra.mxu0 %v1134
    %1151 = vmatpush.msra.mxu0 %v1133
    %1152 = vmatpush.msra.mxu0 %v1132
    %1153 = vmatpush.msra.mxu0 %v1131
    %1154 = vmatpush.msra.mxu0 %v1130
    %1155 = vmatpush.msra.mxu0 %v1129
    %1156 = vmatpush.msra.mxu0 %v1128
    %1157 = vmatpush.msra.mxu0 %v1127
    %1158 = vmatmul.f32.gmra.mxu0 %v1140
    %v1159 = vpop.f32.mrf.mxu0
    %v1160 = vadd.f32 %v1137, %v1159
    %1161 = vdwg.mxu0
    %v1162 = vpack.c.bf16 %v1160, %v1160
    %v1163 = vld [vmem:[%s10] sm:$0xff]
    %v1164 = vld [vmem:[%s10 + $0x8] sm:$0xff]
    %v1165 = vld [vmem:[%s10 + $0x10] sm:$0xff]
    %v1166 = vld [vmem:[%s10 + $0x18] sm:$0xff]
    %v1167 = vld [vmem:[%s10 + $0x20] sm:$0xff]
    %v1168 = vld [vmem:[%s10 + $0x28] sm:$0xff]
    %v1169 = vld [vmem:[%s10 + $0x30] sm:$0xf]
    %v1170 = vld [vmem:[%s10 + $0x34] sm:$0xff]
    %v1171 = vld [vmem:[%s10 + $0x3c] sm:$0xff]
    %v1172 = vld [vmem:[%s10 + $0x44] sm:$0xff]
    %v1173 = vld [vmem:[%s10 + $0x4c] sm:$0xff]
    %v1174 = vld [vmem:[%s10 + $0x54] sm:$0xff]
    %v1175 = vld [vmem:[%s10 + $0x5c] sm:$0xff]
    %v1176 = vld [vmem:[%s10 + $0x64] sm:$0xf]
    %v1177 = vld [vmem:[%s10 + $0x68] sm:$0xff]
    %v1178 = vld [vmem:[%s10 + $0x70] sm:$0xff]
    %v1179 = vld [vmem:[%s10 + $0x78] sm:$0xff]
    %v1180 = vld [vmem:[%s10 + $0x80] sm:$0xff]
    %v1181 = vld [vmem:[%s10 + $0x88] sm:$0xff]
    %v1182 = vld [vmem:[%s10 + $0x90] sm:$0xff]
    %v1183 = vld [vmem:[%s10 + $0x98] sm:$0xf]
    %v1184 = vld [vmem:[%s10 + $0x9c] sm:$0xff]
    %v1185 = vld [vmem:[%s10 + $0xa4] sm:$0xff]
    %v1186 = vld [vmem:[%s10 + $0xac] sm:$0xff]
    %v1187 = vld [vmem:[%s10 + $0xb4] sm:$0xff]
    %v1188 = vld [vmem:[%s10 + $0xbc] sm:$0xff]
    %v1189 = vld [vmem:[%s10 + $0xc4] sm:$0xff]
    %v1190 = vld [vmem:[%s10 + $0xcc] sm:$0xf]
    %v1191 = vld [vmem:[%s10 + $0xd0] sm:$0xff]
    %v1192 = vld [vmem:[%s10 + $0xd8] sm:$0xff]
    %v1193 = vld [vmem:[%s10 + $0xe0] sm:$0xff]
    %v1194 = vld [vmem:[%s10 + $0xe8] sm:$0xff]
    %v1195 = vld [vmem:[%s10 + $0xf0] sm:$0xff]
    %v1196 = vld [vmem:[%s10 + $0xf8] sm:$0xff]
    %v1197 = vld [vmem:[%s10 + $0x100] sm:$0xf]
    %v1198 = vld [vmem:[%s10 + $0x104] sm:$0xff]
    %v1199 = vld [vmem:[%s10 + $0x10c] sm:$0xff]
    %v1200 = vld [vmem:[%s10 + $0x114] sm:$0xff]
    %v1201 = vld [vmem:[%s10 + $0x11c] sm:$0xff]
    %v1202 = vld [vmem:[%s10 + $0x124] sm:$0xff]
    %v1203 = vld [vmem:[%s10 + $0x12c] sm:$0xff]
    %v1204 = vld [vmem:[%s10 + $0x134] sm:$0xf]
    %v1205 = vld [vmem:[%s10 + $0x138] sm:$0xff]
    %v1206 = vld [vmem:[%s10 + $0x140] sm:$0xff]
    %v1207 = vld [vmem:[%s10 + $0x148] sm:$0xff]
    %v1208 = vld [vmem:[%s10 + $0x150] sm:$0xff]
    %v1209 = vld [vmem:[%s10 + $0x158] sm:$0xff]
    %v1210 = vld [vmem:[%s10 + $0x160] sm:$0xff]
    %v1211 = vld [vmem:[%s10 + $0x168] sm:$0xf]
    %v1212 = vld [vmem:[%s10 + $0x16c] sm:$0xff]
    %v1213 = vld [vmem:[%s10 + $0x174] sm:$0xff]
    %v1214 = vld [vmem:[%s10 + $0x17c] sm:$0xff]
    %v1215 = vld [vmem:[%s10 + $0x184] sm:$0xff]
    %v1216 = vld [vmem:[%s10 + $0x18c] sm:$0xff]
    %v1217 = vld [vmem:[%s10 + $0x194] sm:$0xff]
    %v1218 = vld [vmem:[%s10 + $0x19c] sm:$0xf]
    %v1219 = vld [vmem:[%s11] sm:$0xff]
    %v1220 = vld [vmem:[%s11 + $0x8] sm:$0x1f]
    %v1223 = vperm.slane %v1219, 0
    %v1224 = vperm.slane %v1219, 1
    %v1225 = vperm.slane %v1219, 2
    %v1226 = vperm.slane %v1219, 3
    %v1227 = vperm.slane %v1219, 4
    %v1228 = vperm.slane %v1219, 5
    %v1229 = vperm.slane %v1219, 6
    %v1230 = vperm.slane %v1219, 7
    %v1231 = vperm.slane %v1220, 0
    %v1232 = vperm.slane %v1220, 1
    %v1233 = vperm.slane %v1220, 2
    %v1234 = vperm.slane %v1220, 3
    %v1235 = vperm.slane %v1220, 4
    %v1305 = vunpack.c.l.b16 %v1163
    %v1306 = vunpack.c.h.b16 %v1163
    %v1307 = vunpack.c.l.b16 %v1164
    %v1308 = vunpack.c.h.b16 %v1164
    %v1309 = vunpack.c.l.b16 %v1165
    %v1310 = vunpack.c.h.b16 %v1165
    %v1311 = vunpack.c.l.b16 %v1166
    %v1312 = vunpack.c.h.b16 %v1166
    %v1313 = vunpack.c.l.b16 %v1167
    %v1314 = vunpack.c.h.b16 %v1167
    %v1315 = vunpack.c.l.b16 %v1168
    %v1316 = vunpack.c.h.b16 %v1168
    %v1317 = vunpack.c.l.b16 %v1169
    %v1318 = vunpack.c.l.b16 %v1170
    %v1319 = vunpack.c.h.b16 %v1170
    %v1320 = vunpack.c.l.b16 %v1171
    %v1321 = vunpack.c.h.b16 %v1171
    %v1322 = vunpack.c.l.b16 %v1172
    %v1323 = vunpack.c.h.b16 %v1172
    %v1324 = vunpack.c.l.b16 %v1173
    %v1325 = vunpack.c.h.b16 %v1173
    %v1326 = vunpack.c.l.b16 %v1174
    %v1327 = vunpack.c.h.b16 %v1174
    %v1328 = vunpack.c.l.b16 %v1175
    %v1329 = vunpack.c.h.b16 %v1175
    %v1330 = vunpack.c.l.b16 %v1176
    %v1331 = vunpack.c.l.b16 %v1177
    %v1332 = vunpack.c.h.b16 %v1177
    %v1333 = vunpack.c.l.b16 %v1178
    %v1334 = vunpack.c.h.b16 %v1178
    %v1335 = vunpack.c.l.b16 %v1179
    %v1336 = vunpack.c.h.b16 %v1179
    %v1337 = vunpack.c.l.b16 %v1180
    %v1338 = vunpack.c.h.b16 %v1180
    %v1339 = vunpack.c.l.b16 %v1181
    %v1340 = vunpack.c.h.b16 %v1181
    %v1341 = vunpack.c.l.b16 %v1182
    %v1342 = vunpack.c.h.b16 %v1182
    %v1343 = vunpack.c.l.b16 %v1183
    %v1344 = vunpack.c.l.b16 %v1184
    %v1345 = vunpack.c.h.b16 %v1184
    %v1346 = vunpack.c.l.b16 %v1185
    %v1347 = vunpack.c.h.b16 %v1185
    %v1348 = vunpack.c.l.b16 %v1186
    %v1349 = vunpack.c.h.b16 %v1186
    %v1350 = vunpack.c.l.b16 %v1187
    %v1351 = vunpack.c.h.b16 %v1187
    %v1352 = vunpack.c.l.b16 %v1188
    %v1353 = vunpack.c.h.b16 %v1188
    %v1354 = vunpack.c.l.b16 %v1189
    %v1355 = vunpack.c.h.b16 %v1189
    %v1356 = vunpack.c.l.b16 %v1190
    %v1357 = vunpack.c.l.b16 %v1191
    %v1358 = vunpack.c.h.b16 %v1191
    %v1359 = vunpack.c.l.b16 %v1192
    %v1360 = vunpack.c.h.b16 %v1192
    %v1361 = vunpack.c.l.b16 %v1193
    %v1362 = vunpack.c.h.b16 %v1193
    %v1363 = vunpack.c.l.b16 %v1194
    %v1364 = vunpack.c.h.b16 %v1194
    %v1365 = vunpack.c.l.b16 %v1195
    %v1366 = vunpack.c.h.b16 %v1195
    %v1367 = vunpack.c.l.b16 %v1196
    %v1368 = vunpack.c.h.b16 %v1196
    %v1369 = vunpack.c.l.b16 %v1197
    %v1370 = vunpack.c.l.b16 %v1198
    %v1371 = vunpack.c.h.b16 %v1198
    %v1372 = vunpack.c.l.b16 %v1199
    %v1373 = vunpack.c.h.b16 %v1199
    %v1374 = vunpack.c.l.b16 %v1200
    %v1375 = vunpack.c.h.b16 %v1200
    %v1376 = vunpack.c.l.b16 %v1201
    %v1377 = vunpack.c.h.b16 %v1201
    %v1378 = vunpack.c.l.b16 %v1202
    %v1379 = vunpack.c.h.b16 %v1202
    %v1380 = vunpack.c.l.b16 %v1203
    %v1381 = vunpack.c.h.b16 %v1203
    %v1382 = vunpack.c.l.b16 %v1204
    %v1383 = vunpack.c.l.b16 %v1205
    %v1384 = vunpack.c.h.b16 %v1205
    %v1385 = vunpack.c.l.b16 %v1206
    %v1386 = vunpack.c.h.b16 %v1206
    %v1387 = vunpack.c.l.b16 %v1207
    %v1388 = vunpack.c.h.b16 %v1207
    %v1389 = vunpack.c.l.b16 %v1208
    %v1390 = vunpack.c.h.b16 %v1208
    %v1391 = vunpack.c.l.b16 %v1209
    %v1392 = vunpack.c.h.b16 %v1209
    %v1393 = vunpack.c.l.b16 %v1210
    %v1394 = vunpack.c.h.b16 %v1210
    %v1395 = vunpack.c.l.b16 %v1211
    %v1396 = vunpack.c.l.b16 %v1212
    %v1397 = vunpack.c.h.b16 %v1212
    %v1398 = vunpack.c.l.b16 %v1213
    %v1399 = vunpack.c.h.b16 %v1213
    %v1400 = vunpack.c.l.b16 %v1214
    %v1401 = vunpack.c.h.b16 %v1214
    %v1402 = vunpack.c.l.b16 %v1215
    %v1403 = vunpack.c.h.b16 %v1215
    %v1404 = vunpack.c.l.b16 %v1216
    %v1405 = vunpack.c.h.b16 %v1216
    %v1406 = vunpack.c.l.b16 %v1217
    %v1407 = vunpack.c.h.b16 %v1217
    %v1408 = vunpack.c.l.b16 %v1218
    %v1409 = vpack.c.b16 %v1318, %v1305
    %v1410 = vpack.c.b16 %v1319, %v1306
    %v1411 = vpack.c.b16 %v1320, %v1307
    %v1412 = vpack.c.b16 %v1321, %v1308
    %v1413 = vpack.c.b16 %v1322, %v1309
    %v1414 = vpack.c.b16 %v1323, %v1310
    %v1415 = vpack.c.b16 %v1324, %v1311
    %v1416 = vpack.c.b16 %v1325, %v1312
    %v1417 = vpack.c.b16 %v1326, %v1313
    %v1418 = vpack.c.b16 %v1327, %v1314
    %v1419 = vpack.c.b16 %v1328, %v1315
    %v1420 = vpack.c.b16 %v1329, %v1316
    %v1421 = vpack.c.b16 %v1330, %v1317
    %v1422 = vpack.c.b16 %v1344, %v1331
    %v1423 = vpack.c.b16 %v1345, %v1332
    %v1424 = vpack.c.b16 %v1346, %v1333
    %v1425 = vpack.c.b16 %v1347, %v1334
    %v1426 = vpack.c.b16 %v1348, %v1335
    %v1427 = vpack.c.b16 %v1349, %v1336
    %v1428 = vpack.c.b16 %v1350, %v1337
    %v1429 = vpack.c.b16 %v1351, %v1338
    %v1430 = vpack.c.b16 %v1352, %v1339
    %v1431 = vpack.c.b16 %v1353, %v1340
    %v1432 = vpack.c.b16 %v1354, %v1341
    %v1433 = vpack.c.b16 %v1355, %v1342
    %v1434 = vpack.c.b16 %v1356, %v1343
    %v1435 = vpack.c.b16 %v1370, %v1357
    %v1436 = vpack.c.b16 %v1371, %v1358
    %v1437 = vpack.c.b16 %v1372, %v1359
    %v1438 = vpack.c.b16 %v1373, %v1360
    %v1439 = vpack.c.b16 %v1374, %v1361
    %v1440 = vpack.c.b16 %v1375, %v1362
    %v1441 = vpack.c.b16 %v1376, %v1363
    %v1442 = vpack.c.b16 %v1377, %v1364
    %v1443 = vpack.c.b16 %v1378, %v1365
    %v1444 = vpack.c.b16 %v1379, %v1366
    %v1445 = vpack.c.b16 %v1380, %v1367
    %v1446 = vpack.c.b16 %v1381, %v1368
    %v1447 = vpack.c.b16 %v1382, %v1369
    %v1448 = vpack.c.b16 %v1396, %v1383
    %v1449 = vpack.c.b16 %v1397, %v1384
    %v1450 = vpack.c.b16 %v1398, %v1385
    %v1451 = vpack.c.b16 %v1399, %v1386
    %v1452 = vpack.c.b16 %v1400, %v1387
    %v1453 = vpack.c.b16 %v1401, %v1388
    %v1454 = vpack.c.b16 %v1402, %v1389
    %v1455 = vpack.c.b16 %v1403, %v1390
    %v1456 = vpack.c.b16 %v1404, %v1391
    %v1457 = vpack.c.b16 %v1405, %v1392
    %v1458 = vpack.c.b16 %v1406, %v1393
    %v1459 = vpack.c.b16 %v1407, %v1394
    %v1460 = vpack.c.b16 %v1408, %v1395
    %v1514 = vsel %vm1053, %v1162, 0
    %1516 = vmatpush.bf16.msra.mxu0 0
    %1517 = vmatpush.bf16.msra.mxu0 0
    %1518 = vmatpush.bf16.msra.mxu0 0
    %1519 = vmatpush.bf16.msra.mxu0 0
    %1520 = vmatpush.bf16.msra.mxu0 %v1448
    %1521 = vmatpush.bf16.msra.mxu0 %v1435
    %1522 = vmatpush.bf16.msra.mxu0 %v1422
    %1523 = vmatpush.bf16.msra.mxu0 %v1409
    %1524 = vmatmul.bf16.gmra.mxu0 %v1514
    %v1525 = vpop.f32.mrf.mxu0
    %v1526 = vadd.f32 %v1223, %v1525
    %v1527 = vpop.f32.mrf.mxu0
    %1528 = vdwg.mxu0
    %1529 = vmatpush.bf16.msra.mxu0 0
    %1530 = vmatpush.bf16.msra.mxu0 0
    %1531 = vmatpush.bf16.msra.mxu0 0
    %1532 = vmatpush.bf16.msra.mxu0 0
    %1533 = vmatpush.bf16.msra.mxu0 %v1449
    %1534 = vmatpush.bf16.msra.mxu0 %v1436
    %1535 = vmatpush.bf16.msra.mxu0 %v1423
    %1536 = vmatpush.bf16.msra.mxu0 %v1410
    %1537 = vmatmul.bf16.gmra.mxu0 %v1514
    %v1538 = vpop.f32.mrf.mxu0
    %v1539 = vadd.f32 %v1224, %v1538
    %v1540 = vpop.f32.mrf.mxu0
    %1541 = vdwg.mxu0
    %1542 = vmatpush.bf16.msra.mxu0 0
    %1543 = vmatpush.bf16.msra.mxu0 0
    %1544 = vmatpush.bf16.msra.mxu0 0
    %1545 = vmatpush.bf16.msra.mxu0 0
    %1546 = vmatpush.bf16.msra.mxu0 %v1450
    %1547 = vmatpush.bf16.msra.mxu0 %v1437
    %1548 = vmatpush.bf16.msra.mxu0 %v1424
    %1549 = vmatpush.bf16.msra.mxu0 %v1411
    %1550 = vmatmul.bf16.gmra.mxu0 %v1514
    %v1551 = vpop.f32.mrf.mxu0
    %v1552 = vadd.f32 %v1225, %v1551
    %v1553 = vpop.f32.mrf.mxu0
    %1554 = vdwg.mxu0
    %1555 = vmatpush.bf16.msra.mxu0 0
    %1556 = vmatpush.bf16.msra.mxu0 0
    %1557 = vmatpush.bf16.msra.mxu0 0
    %1558 = vmatpush.bf16.msra.mxu0 0
    %1559 = vmatpush.bf16.msra.mxu0 %v1451
    %1560 = vmatpush.bf16.msra.mxu0 %v1438
    %1561 = vmatpush.bf16.msra.mxu0 %v1425
    %1562 = vmatpush.bf16.msra.mxu0 %v1412
    %1563 = vmatmul.bf16.gmra.mxu0 %v1514
    %v1564 = vpop.f32.mrf.mxu0
    %v1565 = vadd.f32 %v1226, %v1564
    %v1566 = vpop.f32.mrf.mxu0
    %1567 = vdwg.mxu0
    %1568 = vmatpush.bf16.msra.mxu0 0
    %1569 = vmatpush.bf16.msra.mxu0 0
    %1570 = vmatpush.bf16.msra.mxu0 0
    %1571 = vmatpush.bf16.msra.mxu0 0
    %1572 = vmatpush.bf16.msra.mxu0 %v1452
    %1573 = vmatpush.bf16.msra.mxu0 %v1439
    %1574 = vmatpush.bf16.msra.mxu0 %v1426
    %1575 = vmatpush.bf16.msra.mxu0 %v1413
    %1576 = vmatmul.bf16.gmra.mxu0 %v1514
    %v1577 = vpop.f32.mrf.mxu0
    %v1578 = vadd.f32 %v1227, %v1577
    %v1579 = vpop.f32.mrf.mxu0
    %1580 = vdwg.mxu0
    %1581 = vmatpush.bf16.msra.mxu0 0
    %1582 = vmatpush.bf16.msra.mxu0 0
    %1583 = vmatpush.bf16.msra.mxu0 0
    %1584 = vmatpush.bf16.msra.mxu0 0
    %1585 = vmatpush.bf16.msra.mxu0 %v1453
    %1586 = vmatpush.bf16.msra.mxu0 %v1440
    %1587 = vmatpush.bf16.msra.mxu0 %v1427
    %1588 = vmatpush.bf16.msra.mxu0 %v1414
    %1589 = vmatmul.bf16.gmra.mxu0 %v1514
    %v1590 = vpop.f32.mrf.mxu0
    %v1591 = vadd.f32 %v1228, %v1590
    %v1592 = vpop.f32.mrf.mxu0
    %1593 = vdwg.mxu0
    %1594 = vmatpush.bf16.msra.mxu0 0
    %1595 = vmatpush.bf16.msra.mxu0 0
    %1596 = vmatpush.bf16.msra.mxu0 0
    %1597 = vmatpush.bf16.msra.mxu0 0
    %1598 = vmatpush.bf16.msra.mxu0 %v1454
    %1599 = vmatpush.bf16.msra.mxu0 %v1441
    %1600 = vmatpush.bf16.msra.mxu0 %v1428
    %1601 = vmatpush.bf16.msra.mxu0 %v1415
    %1602 = vmatmul.bf16.gmra.mxu0 %v1514
    %v1603 = vpop.f32.mrf.mxu0
    %v1604 = vadd.f32 %v1229, %v1603
    %v1605 = vpop.f32.mrf.mxu0
    %1606 = vdwg.mxu0
    %1607 = vmatpush.bf16.msra.mxu0 0
    %1608 = vmatpush.bf16.msra.mxu0 0
    %1609 = vmatpush.bf16.msra.mxu0 0
    %1610 = vmatpush.bf16.msra.mxu0 0
    %1611 = vmatpush.bf16.msra.mxu0 %v1455
    %1612 = vmatpush.bf16.msra.mxu0 %v1442
    %1613 = vmatpush.bf16.msra.mxu0 %v1429
    %1614 = vmatpush.bf16.msra.mxu0 %v1416
    %1615 = vmatmul.bf16.gmra.mxu0 %v1514
    %v1616 = vpop.f32.mrf.mxu0
    %v1617 = vadd.f32 %v1230, %v1616
    %v1618 = vpop.f32.mrf.mxu0
    %1619 = vdwg.mxu0
    %1620 = vmatpush.bf16.msra.mxu0 0
    %1621 = vmatpush.bf16.msra.mxu0 0
    %1622 = vmatpush.bf16.msra.mxu0 0
    %1623 = vmatpush.bf16.msra.mxu0 0
    %1624 = vmatpush.bf16.msra.mxu0 %v1456
    %1625 = vmatpush.bf16.msra.mxu0 %v1443
    %1626 = vmatpush.bf16.msra.mxu0 %v1430
    %1627 = vmatpush.bf16.msra.mxu0 %v1417
    %1628 = vmatmul.bf16.gmra.mxu0 %v1514
    %v1629 = vpop.f32.mrf.mxu0
    %v1630 = vadd.f32 %v1231, %v1629
    %v1631 = vpop.f32.mrf.mxu0
    %1632 = vdwg.mxu0
    %1633 = vmatpush.bf16.msra.mxu0 0
    %1634 = vmatpush.bf16.msra.mxu0 0
    %1635 = vmatpush.bf16.msra.mxu0 0
    %1636 = vmatpush.bf16.msra.mxu0 0
    %1637 = vmatpush.bf16.msra.mxu0 %v1457
    %1638 = vmatpush.bf16.msra.mxu0 %v1444
    %1639 = vmatpush.bf16.msra.mxu0 %v1431
    %1640 = vmatpush.bf16.msra.mxu0 %v1418
    %1641 = vmatmul.bf16.gmra.mxu0 %v1514
    %v1642 = vpop.f32.mrf.mxu0
    %v1643 = vadd.f32 %v1232, %v1642
    %v1644 = vpop.f32.mrf.mxu0
    %1645 = vdwg.mxu0
    %1646 = vmatpush.bf16.msra.mxu0 0
    %1647 = vmatpush.bf16.msra.mxu0 0
    %1648 = vmatpush.bf16.msra.mxu0 0
    %1649 = vmatpush.bf16.msra.mxu0 0
    %1650 = vmatpush.bf16.msra.mxu0 %v1458
    %1651 = vmatpush.bf16.msra.mxu0 %v1445
    %1652 = vmatpush.bf16.msra.mxu0 %v1432
    %1653 = vmatpush.bf16.msra.mxu0 %v1419
    %1654 = vmatmul.bf16.gmra.mxu0 %v1514
    %v1655 = vpop.f32.mrf.mxu0
    %v1656 = vadd.f32 %v1233, %v1655
    %v1657 = vpop.f32.mrf.mxu0
    %1658 = vdwg.mxu0
    %1659 = vmatpush.bf16.msra.mxu0 0
    %1660 = vmatpush.bf16.msra.mxu0 0
    %1661 = vmatpush.bf16.msra.mxu0 0
    %1662 = vmatpush.bf16.msra.mxu0 0
    %1663 = vmatpush.bf16.msra.mxu0 %v1459
    %1664 = vmatpush.bf16.msra.mxu0 %v1446
    %1665 = vmatpush.bf16.msra.mxu0 %v1433
    %1666 = vmatpush.bf16.msra.mxu0 %v1420
    %1667 = vmatmul.bf16.gmra.mxu0 %v1514
    %v1668 = vpop.f32.mrf.mxu0
    %v1669 = vadd.f32 %v1234, %v1668
    %v1670 = vpop.f32.mrf.mxu0
    %1671 = vdwg.mxu0
    %1672 = vmatpush.bf16.msra.mxu0 0
    %1673 = vmatpush.bf16.msra.mxu0 0
    %1674 = vmatpush.bf16.msra.mxu0 0
    %1675 = vmatpush.bf16.msra.mxu0 0
    %1676 = vmatpush.bf16.msra.mxu0 %v1460
    %1677 = vmatpush.bf16.msra.mxu0 %v1447
    %1678 = vmatpush.bf16.msra.mxu0 %v1434
    %1679 = vmatpush.bf16.msra.mxu0 %v1421
    %1680 = vmatmul.bf16.gmra.mxu0 %v1514
    %v1681 = vpop.f32.mrf.mxu0
    %v1682 = vadd.f32 %v1235, %v1681
    %v1683 = vpop.f32.mrf.mxu0
    %1684 = vdwg.mxu0
    %vm1685 = vcmp.ge.f32.partialorder %v1526, 0.0
    %vm1686 = vcmp.ge.f32.partialorder %v1539, 0.0
    %vm1687 = vcmp.ge.f32.partialorder %v1552, 0.0
    %vm1688 = vcmp.ge.f32.partialorder %v1565, 0.0
    %vm1689 = vcmp.ge.f32.partialorder %v1578, 0.0
    %vm1690 = vcmp.ge.f32.partialorder %v1591, 0.0
    %vm1691 = vcmp.ge.f32.partialorder %v1604, 0.0
    %vm1692 = vcmp.ge.f32.partialorder %v1617, 0.0
    %vm1693 = vcmp.ge.f32.partialorder %v1630, 0.0
    %vm1694 = vcmp.ge.f32.partialorder %v1643, 0.0
    %vm1695 = vcmp.ge.f32.partialorder %v1656, 0.0
    %vm1696 = vcmp.ge.f32.partialorder %v1669, 0.0
    %vm1697 = vcmp.ge.f32.partialorder %v1682, 0.0
    %v1698 = vmul.f32 %v1526, 0.01
    %v1699 = vmul.f32 %v1539, 0.01
    %v1700 = vmul.f32 %v1552, 0.01
    %v1701 = vmul.f32 %v1565, 0.01
    %v1702 = vmul.f32 %v1578, 0.01
    %v1703 = vmul.f32 %v1591, 0.01
    %v1704 = vmul.f32 %v1604, 0.01
    %v1705 = vmul.f32 %v1617, 0.01
    %v1706 = vmul.f32 %v1630, 0.01
    %v1707 = vmul.f32 %v1643, 0.01
    %v1708 = vmul.f32 %v1656, 0.01
    %v1709 = vmul.f32 %v1669, 0.01
    %v1710 = vmul.f32 %v1682, 0.01
    %v1711 = vsel %vm1685, %v1526, %v1698
    %v1712 = vsel %vm1686, %v1539, %v1699
    %v1713 = vsel %vm1687, %v1552, %v1700
    %v1714 = vsel %vm1688, %v1565, %v1701
    %v1715 = vsel %vm1689, %v1578, %v1702
    %v1716 = vsel %vm1690, %v1591, %v1703
    %v1717 = vsel %vm1691, %v1604, %v1704
    %v1718 = vsel %vm1692, %v1617, %v1705
    %v1719 = vsel %vm1693, %v1630, %v1706
    %v1720 = vsel %vm1694, %v1643, %v1707
    %v1721 = vsel %vm1695, %v1656, %v1708
    %v1722 = vsel %vm1696, %v1669, %v1709
    %v1723 = vsel %vm1697, %v1682, %v1710
    %vm1724 = vcmask 517120
    %1725 = vst.msk [vmem:[#allocation2] sm:$0x3] %vm1724, %v1115
    %1727 = vrot.lane.b32.xlu0 %v1115, 64
    %v1728 = vpop.permute.xlu0 %1727
    %1730 = vst.msk [vmem:[#allocation4] sm:$0x3] %vm1724, %v1728
    %v1731 = vpack.c.bf16 %v1712, %v1711
    %v1732 = vpack.c.bf16 %v1714, %v1713
    %v1733 = vpack.c.bf16 %v1716, %v1715
    %v1734 = vpack.c.bf16 %v1718, %v1717
    %v1735 = vpack.c.bf16 %v1720, %v1719
    %v1736 = vpack.c.bf16 %v1722, %v1721
    %v1737 = vpack.c.bf16 %v1723, %v1723
    %v1745 = vrot.slane %v1731, 3
    %v1746 = vrot.slane %v1732, 6
    %v1747 = vrot.slane %v1732, 1
    %v1748 = vrot.slane %v1733, 4
    %v1749 = vrot.slane %v1733, 7
    %v1750 = vrot.slane %v1734, 2
    %v1751 = vrot.slane %v1734, 5
    %v1752 = vrot.slane %v1735, 3
    %v1753 = vrot.slane %v1736, 6
    %v1754 = vrot.slane %v1736, 1
    %v1755 = vrot.slane %v1737, 4
    %v1756 = vrot.slane %v1737, 7
    %vm1757 = vcmask 1040384
    %v1760 = vsel %vm1757, %v1731, %v1745
    %vm1761 = vcmask 1042434
    %v1764 = vsel %vm1761, %v1746, %v1747
    %vm1765 = vcmask 1041408
    %v1766 = vsel %vm1765, %v1760, %v1764
    %vm1767 = vcmask 1044484
    %v1770 = vsel %vm1767, %v1748, %v1749
    %vm1771 = vcmask 1046534
    %v1774 = vsel %vm1771, %v1750, %v1751
    %vm1775 = vcmask 1045508
    %v1776 = vsel %vm1775, %v1770, %v1774
    %vm1777 = vcmask 1043456
    %v1778 = vsel %vm1777, %v1766, %v1776
    %v1781 = vsel %vm1757, %v1735, %v1752
    %v1783 = vsel %vm1765, %v1781, %v1753
    %vm1784 = vcmask 1043459
    %v1787 = vsel %vm1784, %v1754, %v1755
    %vm1788 = vcmask 1044483
    %v1790 = vsel %vm1788, %v1787, %v1756
    %vm1791 = vcmask 1042432
    %v1792 = vsel %vm1791, %v1783, %v1790
    %1795 = vst [vmem:[%s14] sm:$0xff] %v1778
    %vm1796 = vcmask 1041409
    %vm1797 = vmor %vm1796, %vm1757
    %vm1798 = vmor %vm1761, %vm1797
    %vm1799 = vmor %vm1784, %vm1798
    %vm1800 = vcmask 258052
    %vm1801 = vmor %vm1800, %vm1799
    %1802 = vst.msk [vmem:[%s14 + $0x8] sm:$0x1f] %vm1801, %v1792
    // Predicated region
    $region50: #{landsat_cvae_forward.9} parent=1 // pred_check
      _
    $region51: #{landsat_cvae_forward.9} parent=1 // pred_check_branch
      %1804 = sbr.rel (0) target = $region53
    $region52: #{landsat_cvae_forward.9} parent=1 // pred_region
      %1806 = vsyncadd [#allocation3], 0
      %s1808 = sshll.u32 [#allocation2], 4
      %s1809 = int_to_ptr.vmem [resolvable:$true] %s1808
      %s1810 = sshll.u32 %s12, 4
      %s1811 = int_to_ptr.hbm [resolvable:$true] %s1810
      %1813 = dma.vmem_to_hbm [thread:$0]  %s1809, 32, %s1811, [#allocation3]
    $region53: #{landsat_cvae_forward.9} parent=1 // pred_fallthru
      _
    // Predicated region
    $region54: #{landsat_cvae_forward.9} parent=1 // pred_check
      _
    $region55: #{landsat_cvae_forward.9} parent=1 // pred_check_branch
      %1815 = sbr.rel (0) target = $region57
    $region56: #{landsat_cvae_forward.9} parent=1 // pred_region
      %1817 = vsyncadd [#allocation5], 0
      %s1819 = sshll.u32 [#allocation4], 4
      %s1820 = int_to_ptr.vmem [resolvable:$true] %s1819
      %s1821 = sshll.u32 %s13, 4
      %s1822 = int_to_ptr.hbm [resolvable:$true] %s1821
      %1824 = dma.vmem_to_hbm [thread:$0]  %s1820, 32, %s1822, [#allocation5]
    $region57: #{landsat_cvae_forward.9} parent=1 // pred_fallthru
      _
    // Predicated region
    $region58: #{landsat_cvae_forward.9} parent=1 // pred_check
      _
    $region59: #{landsat_cvae_forward.9} parent=1 // pred_check_branch
      %1826 = sbr.rel (0) target = $region61
    $region60: #{landsat_cvae_forward.9} parent=1 // pred_region
      _
    $region61: #{landsat_cvae_forward.9} parent=1 // pred_fallthru
      _
    // Predicated region
    $region62: #{landsat_cvae_forward.9} parent=1 // pred_check
      _
    $region63: #{landsat_cvae_forward.9} parent=1 // pred_check_branch
      %1828 = sbr.rel (0) target = $region65
    $region64: #{landsat_cvae_forward.9} parent=1 // pred_region
      %1830 = dma.done [#allocation3], 32
    $region65: #{landsat_cvae_forward.9} parent=1 // pred_fallthru
      _
    // Predicated region
    $region66: #{landsat_cvae_forward.9} parent=1 // pred_check
      _
    $region67: #{landsat_cvae_forward.9} parent=1 // pred_check_branch
      %1832 = sbr.rel (0) target = $region69
    $region68: #{landsat_cvae_forward.9} parent=1 // pred_region
      %1834 = dma.done [#allocation5], 32
    $region69: #{landsat_cvae_forward.9} parent=1 // pred_fallthru
      _
    // Predicated region
    $region70: #{landsat_cvae_forward.9} parent=1 // pred_check
      _
    $region71: #{landsat_cvae_forward.9} parent=1 // pred_check_branch
      %1836 = sbr.rel (0) target = $region73
    $region72: #{landsat_cvae_forward.9} parent=1 // pred_region
      _
    $region73: #{landsat_cvae_forward.9} parent=1 // pred_fallthru
      _
    %1837 = vsyncpa [#allocation3], 1
    %1838 = vsyncpa [#allocation5], 1

// kernel: tile.13
$region0: #{tile.13}
  #allocation0 [shape = 's32[1]{0}', space=sflag, size = 0x4, scoped, tag = 'scoped memory for tile.13']
  %s0 = inlined_call_operand.vmem [shape: f32[16], index: 0, kind: input, shape index: {}]
  %s1 = inlined_call_operand.vmem [shape: f32[4,16], index: 1, kind: output, shape index: {}]
  // Predicated region
  $region2: #{tile.13} parent=0 // pred_check
    _
  $region3: #{tile.13} parent=0 // pred_check_branch
    %3 = sbr.rel (0) target = $region5
  $region4: #{tile.13} parent=0 // pred_region
    _
  $region5: #{tile.13} parent=0 // pred_fallthru
    _
  %v4 = vld [vmem:[%s0] ss:$0 sm:$0xff]
  %5 = vst [vmem:[%s1] sm:$0xf] %v4

// kernel: tile.0
$region0: #{tile.0}
  %s0 = inlined_call_operand.vmem [shape: f32[4,16], index: 0, kind: input, shape index: {}]
  %s1 = inlined_call_operand.vmem [shape: f32[64,1], index: 1, kind: output, shape index: {}]
  $region1: #{tile.0} parent=0
    #allocation0 [shape = 'u8[4096]{0}', space=vmem, size = 0x1000, scoped, tag = 'scoped mem for input reshape']
    %s3 = ssub.s32 16, 1
    %v4 = vld [vmem:[%s0] sm:%s3]
    %5 = vst [vmem:[#allocation0] sm:%s3] %v4
    %v6 = vld [vmem:[#allocation0] sm:$0xf]
    %vm7 = vcmask 7168
    %8 = vst.msk [vmem:[%s1] ss:$16 sm:$0x3] %vm7, %v6
    %9 = vst.msk [vmem:[%s1] ss:$16 sm:$0xc] %vm7, %v6
    %v10 = vld [vmem:[#allocation0] sm:$0xf]
    %11 = vrot.lane.b32.xlu0 %v10, 127
    %v12 = vpop.permute.xlu0 %11
    %vm13 = vcmask 7168
    %s14 = scalar_lea.vmem %s1, 1
    %15 = vst.msk [vmem:[%s14] ss:$16 sm:$0x3] %vm13, %v12
    %s16 = scalar_lea.vmem %s1, 1
    %17 = vst.msk [vmem:[%s16] ss:$16 sm:$0xc] %vm13, %v12
    %v18 = vld [vmem:[#allocation0] sm:$0xf]
    %19 = vrot.lane.b32.xlu0 %v18, 126
    %v20 = vpop.permute.xlu0 %19
    %vm21 = vcmask 7168
    %s22 = scalar_lea.vmem %s1, 2
    %23 = vst.msk [vmem:[%s22] ss:$16 sm:$0x3] %vm21, %v20
    %s24 = scalar_lea.vmem %s1, 2
    %25 = vst.msk [vmem:[%s24] ss:$16 sm:$0xc] %vm21, %v20
    %v26 = vld [vmem:[#allocation0] sm:$0xf]
    %27 = vrot.lane.b32.xlu0 %v26, 125
    %v28 = vpop.permute.xlu0 %27
    %vm29 = vcmask 7168
    %s30 = scalar_lea.vmem %s1, 3
    %31 = vst.msk [vmem:[%s30] ss:$16 sm:$0x3] %vm29, %v28
    %s32 = scalar_lea.vmem %s1, 3
    %33 = vst.msk [vmem:[%s32] ss:$16 sm:$0xc] %vm29, %v28
    %v34 = vld [vmem:[#allocation0] sm:$0xf]
    %35 = vrot.lane.b32.xlu0 %v34, 124
    %v36 = vpop.permute.xlu0 %35
    %vm37 = vcmask 7168
    %s38 = scalar_lea.vmem %s1, 4
    %39 = vst.msk [vmem:[%s38] ss:$16 sm:$0x3] %vm37, %v36
    %s40 = scalar_lea.vmem %s1, 4
    %41 = vst.msk [vmem:[%s40] ss:$16 sm:$0xc] %vm37, %v36
    %v42 = vld [vmem:[#allocation0] sm:$0xf]
    %43 = vrot.lane.b32.xlu0 %v42, 123
    %v44 = vpop.permute.xlu0 %43
    %vm45 = vcmask 7168
    %s46 = scalar_lea.vmem %s1, 5
    %47 = vst.msk [vmem:[%s46] ss:$16 sm:$0x3] %vm45, %v44
    %s48 = scalar_lea.vmem %s1, 5
    %49 = vst.msk [vmem:[%s48] ss:$16 sm:$0xc] %vm45, %v44
    %v50 = vld [vmem:[#allocation0] sm:$0xf]
    %51 = vrot.lane.b32.xlu0 %v50, 122
    %v52 = vpop.permute.xlu0 %51
    %vm53 = vcmask 7168
    %s54 = scalar_lea.vmem %s1, 6
    %55 = vst.msk [vmem:[%s54] ss:$16 sm:$0x3] %vm53, %v52
    %s56 = scalar_lea.vmem %s1, 6
    %57 = vst.msk [vmem:[%s56] ss:$16 sm:$0xc] %vm53, %v52
    %v58 = vld [vmem:[#allocation0] sm:$0xf]
    %59 = vrot.lane.b32.xlu0 %v58, 121
    %v60 = vpop.permute.xlu0 %59
    %vm61 = vcmask 7168
    %s62 = scalar_lea.vmem %s1, 7
    %63 = vst.msk [vmem:[%s62] ss:$16 sm:$0x3] %vm61, %v60
    %s64 = scalar_lea.vmem %s1, 7
    %65 = vst.msk [vmem:[%s64] ss:$16 sm:$0xc] %vm61, %v60
    %v66 = vld [vmem:[#allocation0] sm:$0xf]
    %67 = vrot.lane.b32.xlu0 %v66, 120
    %v68 = vpop.permute.xlu0 %67
    %vm69 = vcmask 7168
    %s70 = scalar_lea.vmem %s1, 8
    %71 = vst.msk [vmem:[%s70] ss:$16 sm:$0x3] %vm69, %v68
    %s72 = scalar_lea.vmem %s1, 8
    %73 = vst.msk [vmem:[%s72] ss:$16 sm:$0xc] %vm69, %v68
    %v74 = vld [vmem:[#allocation0] sm:$0xf]
    %75 = vrot.lane.b32.xlu0 %v74, 119
    %v76 = vpop.permute.xlu0 %75
    %vm77 = vcmask 7168
    %s78 = scalar_lea.vmem %s1, 9
    %79 = vst.msk [vmem:[%s78] ss:$16 sm:$0x3] %vm77, %v76
    %s80 = scalar_lea.vmem %s1, 9
    %81 = vst.msk [vmem:[%s80] ss:$16 sm:$0xc] %vm77, %v76
    %v82 = vld [vmem:[#allocation0] sm:$0xf]
    %83 = vrot.lane.b32.xlu0 %v82, 118
    %v84 = vpop.permute.xlu0 %83
    %vm85 = vcmask 7168
    %s86 = scalar_lea.vmem %s1, 10
    %87 = vst.msk [vmem:[%s86] ss:$16 sm:$0x3] %vm85, %v84
    %s88 = scalar_lea.vmem %s1, 10
    %89 = vst.msk [vmem:[%s88] ss:$16 sm:$0xc] %vm85, %v84
    %v90 = vld [vmem:[#allocation0] sm:$0xf]
    %91 = vrot.lane.b32.xlu0 %v90, 117
    %v92 = vpop.permute.xlu0 %91
    %vm93 = vcmask 7168
    %s94 = scalar_lea.vmem %s1, 11
    %95 = vst.msk [vmem:[%s94] ss:$16 sm:$0x3] %vm93, %v92
    %s96 = scalar_lea.vmem %s1, 11
    %97 = vst.msk [vmem:[%s96] ss:$16 sm:$0xc] %vm93, %v92
    %v98 = vld [vmem:[#allocation0] sm:$0xf]
    %99 = vrot.lane.b32.xlu0 %v98, 116
    %v100 = vpop.permute.xlu0 %99
    %vm101 = vcmask 7168
    %s102 = scalar_lea.vmem %s1, 12
    %103 = vst.msk [vmem:[%s102] ss:$16 sm:$0x3] %vm101, %v100
    %s104 = scalar_lea.vmem %s1, 12
    %105 = vst.msk [vmem:[%s104] ss:$16 sm:$0xc] %vm101, %v100
    %v106 = vld [vmem:[#allocation0] sm:$0xf]
    %107 = vrot.lane.b32.xlu0 %v106, 115
    %v108 = vpop.permute.xlu0 %107
    %vm109 = vcmask 7168
    %s110 = scalar_lea.vmem %s1, 13
    %111 = vst.msk [vmem:[%s110] ss:$16 sm:$0x3] %vm109, %v108
    %s112 = scalar_lea.vmem %s1, 13
    %113 = vst.msk [vmem:[%s112] ss:$16 sm:$0xc] %vm109, %v108
    %v114 = vld [vmem:[#allocation0] sm:$0xf]
    %115 = vrot.lane.b32.xlu0 %v114, 114
    %v116 = vpop.permute.xlu0 %115
    %vm117 = vcmask 7168
    %s118 = scalar_lea.vmem %s1, 14
    %119 = vst.msk [vmem:[%s118] ss:$16 sm:$0x3] %vm117, %v116
    %s120 = scalar_lea.vmem %s1, 14
    %121 = vst.msk [vmem:[%s120] ss:$16 sm:$0xc] %vm117, %v116
    %v122 = vld [vmem:[#allocation0] sm:$0xf]
    %123 = vrot.lane.b32.xlu0 %v122, 113
    %v124 = vpop.permute.xlu0 %123
    %vm125 = vcmask 7168
    %s126 = scalar_lea.vmem %s1, 15
    %127 = vst.msk [vmem:[%s126] ss:$16 sm:$0x3] %vm125, %v124
    %s128 = scalar_lea.vmem %s1, 15
    %129 = vst.msk [vmem:[%s128] ss:$16 sm:$0xc] %vm125, %v124

// kernel: landsat_cvae_forward.10
$region0: #{landsat_cvae_forward.10}
  #allocation0 [shape = 'u32[]', space=smem, size = 0x4, offset = 0x4, fixed_abs, tag = 'smem constant byte address 0x4 - core index']
  #allocation1 [shape = 'u32[72,128]{1,0:T(1,128)}', space=vmem, size = 0x9000, scoped, tag = 'internal scratch']
  %s0 = inlined_call_operand.vmem [shape: bf16[2,128,128], index: 0, kind: input, shape index: {}]
  %s1 = inlined_call_operand.vmem [shape: bf16[64,128], index: 1, kind: input, shape index: {}]
  %s2 = inlined_call_operand.vmem [shape: f32[64,1], index: 2, kind: input, shape index: {}]
  %s3 = inlined_call_operand.vmem [shape: bf16[2,64,128], index: 3, kind: output, shape index: {}]
  %s4 = sld [smem:[#allocation0]]
  $region45: #{landsat_cvae_forward.10} parent=0
    _
  %s6 = ssub.s32 1, %s4
  %s7 = scalar_select 0, %s6, %s4
  loop: start=0, step=1, limit=4
  $region2: #{landsat_cvae_forward.10} parent=0 // loop_pre_header
    _
  $region3: #{landsat_cvae_forward.10} parent=0 // loop_header
    %s9 = sphi 0, %s13
    %p10 = scmp.ge.s32.totalorder %s9, 4
    %s16 = sphi 0, %s28
    %s17 = sphi 0, %s24
    %s18 = sphi 0, %s16
    %s19 = sphi 0, %s17
    %s20 = sphi 0, %s18
    %s21 = sphi 0, %s19
    %s33 = sphi 0, %s35
    %s36 = sphi 0, %s33
    %s37 = sphi 0, %s36
    %s53 = sphi 0, %s37
    %s57 = sphi 0, %s57
    %s59 = sphi 0, %s57
    %s60 = sphi 0, %s59
    %s74 = sphi 0, %s60
    %s78 = sphi 0, %s78
    %s80 = sphi 0, %s78
    %s81 = sphi 0, %s80
    %s95 = sphi 0, %s81
    %s103 = sphi 0, %s105
    %s106 = sphi 0, %s103
    %s107 = sphi 0, %s106
    %s123 = sphi 0, %s107
  $region4: #{landsat_cvae_forward.10} parent=0 // loop_header_branch
    %12 = sbr.rel (%p10) target = $region8
  $region5: #{landsat_cvae_forward.10} parent=0 // loop_body
    %s14 = ssub.s32 %s9, 1
    %s15 = ssub.s32 %s9, 2
    %s22 = sadd.s32 1, %s17
    %p23 = scmp.ge.s32.totalorder %s22, 1
    %s24 = scalar_select %p23, 0, %s22
    %s25 = sadd.s32 1, %s16
    %s26 = scalar_select %p23, %s25, %s16
    %p27 = scmp.ge.s32.totalorder %s26, 2
    %s28 = scalar_select %p27, 0, %s26
    %s29 = ssub.s32 %s16, %s28
    %s30 = ssub.s32 %s17, %s24
    %s31 = sor.u32 %s29, %s30
    %p32 = scmp.eq.s32.totalorder %s31, 0
    %s34 = sadd.s32 %s33, 1
    %s35 = scalar_select %p32, %s33, %s34
    %p38 = pneg %p32
    %p39 = scmp.eq.s32.totalorder %s9, 1
    %p40 = por %p38, %p39
    %p41 = scmp.ne.s32.totalorder %s33, %s36
    %p42 = scmp.eq.s32.totalorder %s9, 0
    %p43 = por %p41, %p42
    %p44 = scmp.ne.s32.totalorder %s33, %s36
    %p45 = scmp.eq.s32.totalorder %s14, 1
    %p46 = por %p44, %p45
    %p47 = scmp.ne.s32.totalorder %s36, %s37
    %p48 = scmp.eq.s32.totalorder %s14, 0
    %p49 = por %p47, %p48
    %p50 = scmp.ne.s32.totalorder %s36, %s37
    %p51 = scmp.eq.s32.totalorder %s15, 1
    %p52 = por %p50, %p51
    %p54 = scmp.ne.s32.totalorder %s37, %s53
    %p55 = scmp.eq.s32.totalorder %s15, 0
    %p56 = por %p54, %p55
    %s58 = sadd.s32 %s57, 1
    %p61 = scmp.eq.s32.totalorder %s9, 1
    %p62 = scmp.ne.s32.totalorder %s57, %s59
    %p63 = scmp.eq.s32.totalorder %s9, 0
    %p64 = por %p62, %p63
    %p65 = scmp.ne.s32.totalorder %s57, %s59
    %p66 = scmp.eq.s32.totalorder %s14, 1
    %p67 = por %p65, %p66
    %p68 = scmp.ne.s32.totalorder %s59, %s60
    %p69 = scmp.eq.s32.totalorder %s14, 0
    %p70 = por %p68, %p69
    %p71 = scmp.ne.s32.totalorder %s59, %s60
    %p72 = scmp.eq.s32.totalorder %s15, 1
    %p73 = por %p71, %p72
    %p75 = scmp.ne.s32.totalorder %s60, %s74
    %p76 = scmp.eq.s32.totalorder %s15, 0
    %p77 = por %p75, %p76
    %s79 = sadd.s32 %s78, 1
    %p82 = scmp.eq.s32.totalorder %s9, 1
    %p83 = scmp.ne.s32.totalorder %s78, %s80
    %p84 = scmp.eq.s32.totalorder %s9, 0
    %p85 = por %p83, %p84
    %p86 = scmp.ne.s32.totalorder %s78, %s80
    %p87 = scmp.eq.s32.totalorder %s14, 1
    %p88 = por %p86, %p87
    %p89 = scmp.ne.s32.totalorder %s80, %s81
    %p90 = scmp.eq.s32.totalorder %s14, 0
    %p91 = por %p89, %p90
    %p92 = scmp.ne.s32.totalorder %s80, %s81
    %p93 = scmp.eq.s32.totalorder %s15, 1
    %p94 = por %p92, %p93
    %p96 = scmp.ne.s32.totalorder %s81, %s95
    %p97 = scmp.eq.s32.totalorder %s15, 0
    %p98 = por %p96, %p97
    %s99 = ssub.s32 %s16, %s28
    %s100 = ssub.s32 %s17, %s24
    %s101 = sor.u32 %s99, %s100
    %p102 = scmp.eq.s32.totalorder %s101, 0
    %s104 = sadd.s32 %s103, 1
    %s105 = scalar_select %p102, %s103, %s104
    %p108 = pneg %p102
    %p109 = scmp.eq.s32.totalorder %s9, 1
    %p110 = por %p108, %p109
    %p111 = scmp.ne.s32.totalorder %s103, %s106
    %p112 = scmp.eq.s32.totalorder %s9, 0
    %p113 = por %p111, %p112
    %p114 = scmp.ne.s32.totalorder %s103, %s106
    %p115 = scmp.eq.s32.totalorder %s14, 1
    %p116 = por %p114, %p115
    %p117 = scmp.ne.s32.totalorder %s106, %s107
    %p118 = scmp.eq.s32.totalorder %s14, 0
    %p119 = por %p117, %p118
    %p120 = scmp.ne.s32.totalorder %s106, %s107
    %p121 = scmp.eq.s32.totalorder %s15, 1
    %p122 = por %p120, %p121
    %p124 = scmp.ne.s32.totalorder %s107, %s123
    %p125 = scmp.eq.s32.totalorder %s15, 0
    %p126 = por %p124, %p125
    %p127 = scmp.le.s32.totalorder 1, %s9
    %p128 = scmp.lt.s32.totalorder %s9, 3
    %p129 = pnand %p127, %p128
    %p130 = pneg %p129
    // Predicated region
    $region9: #{landsat_cvae_forward.10} parent=5 // pred_check
      _
    $region10: #{landsat_cvae_forward.10} parent=5 // pred_check_branch
      %132 = sbr.rel (%p129) target = $region12
    $region11: #{landsat_cvae_forward.10} parent=5 // pred_region
      %s133 = ssub.s32 %s9, 1
      // Predicated region
      $region13: #{landsat_cvae_forward.10} parent=11 // pred_check
        %p134 = pneg %p70
      $region14: #{landsat_cvae_forward.10} parent=11 // pred_check_branch
        %136 = sbr.rel (%p134) target = $region16
      $region15: #{landsat_cvae_forward.10} parent=11 // pred_region
        _
      $region16: #{landsat_cvae_forward.10} parent=11 // pred_fallthru
        _
      // Predicated region
      $region17: #{landsat_cvae_forward.10} parent=11 // pred_check
        %p137 = pneg %p91
      $region18: #{landsat_cvae_forward.10} parent=11 // pred_check_branch
        %139 = sbr.rel (%p137) target = $region20
      $region19: #{landsat_cvae_forward.10} parent=11 // pred_region
        _
      $region20: #{landsat_cvae_forward.10} parent=11 // pred_fallthru
        _
    $region12: #{landsat_cvae_forward.10} parent=5 // pred_fallthru
      _
    %p140 = scmp.lt.s32.totalorder %s9, 2
    // Predicated region
    $region21: #{landsat_cvae_forward.10} parent=5 // pred_check
      %p141 = pneg %p140
    $region22: #{landsat_cvae_forward.10} parent=5 // pred_check_branch
      %143 = sbr.rel (%p141) target = $region24
    $region23: #{landsat_cvae_forward.10} parent=5 // pred_region
      // Predicated region
      $region25: #{landsat_cvae_forward.10} parent=23 // pred_check
        %p144 = pneg %p43
      $region26: #{landsat_cvae_forward.10} parent=23 // pred_check_branch
        %146 = sbr.rel (%p144) target = $region28
      $region27: #{landsat_cvae_forward.10} parent=23 // pred_region
        %p147 = scmp.lt.s32.totalorder %s16, 1
        %s148 = scalar_select %p147, %s16, 1
        %p149 = scmp.lt.s32.totalorder %s17, 0
        %s150 = scalar_select %p149, %s17, 0
        %s151 = smul.addr %s148, 16
        %s152 = sadd.s32 %s150, %s151
        %s153 = smul.addr %s152, 4
        %s154 = scalar_lea.vmem %s0, %s153
      $region28: #{landsat_cvae_forward.10} parent=23 // pred_fallthru
        _
    $region24: #{landsat_cvae_forward.10} parent=5 // pred_fallthru
      _
    %p155 = scmp.le.s32.totalorder 1, %s9
    %p156 = scmp.lt.s32.totalorder %s9, 3
    %p157 = pnand %p155, %p156
    %p158 = pneg %p157
    // Predicated region
    $region29: #{landsat_cvae_forward.10} parent=5 // pred_check
      _
    $region30: #{landsat_cvae_forward.10} parent=5 // pred_check_branch
      %160 = sbr.rel (%p157) target = $region32
    $region31: #{landsat_cvae_forward.10} parent=5 // pred_region
      %s161 = ssub.s32 %s9, 1
      %p162 = scmp.lt.s32.totalorder %s18, 1
      %s163 = scalar_select %p162, %s18, 1
      %p164 = scmp.lt.s32.totalorder %s19, 0
      %s165 = scalar_select %p164, %s19, 0
      %s166 = smul.addr %s163, 16
      %s167 = sadd.s32 %s165, %s166
      %s168 = smul.addr %s167, 4
      %s169 = scalar_lea.vmem %s0, %s168
      %p170 = pneg %p49
      %p171 = pneg %p46
      %p172 = pneg %p70
      %p173 = pneg %p67
      %p174 = pneg %p91
      %p175 = pneg %p88
      %p176 = pneg %p119
      %p177 = pneg %p116
      %p178 = scmp.lt.s32.totalorder %s18, 1
      %s179 = scalar_select %p178, %s18, 1
      %p180 = scmp.lt.s32.totalorder %s19, 0
      %s181 = scalar_select %p180, %s19, 0
      %s182 = smul.addr %s179, 8
      %s183 = sadd.s32 %s181, %s182
      %s184 = smul.addr %s183, 4
      %s185 = scalar_lea.vmem %s3, %s184
      %p186 = scmp.lt.s32.totalorder %s18, 1
      %s187 = scalar_select %p186, %s18, 1
      %p188 = scmp.lt.s32.totalorder %s19, 0
      %s189 = scalar_select %p188, %s19, 0
      %s190 = smul.addr %s187, 16
      %s191 = sadd.s32 %s189, %s190
      %s192 = smul.addr %s191, 4
      %s193 = scalar_lea.vmem %s0, %s192
      %p194 = scmp.lt.s32.totalorder %s18, 1
      %s195 = scalar_select %p194, %s18, 1
      %p196 = scmp.lt.s32.totalorder %s19, 0
      %s197 = scalar_select %p196, %s19, 0
      %s198 = smul.addr %s195, 8
      %s199 = sadd.s32 %s197, %s198
      %s200 = smul.addr %s199, 4
      %s201 = scalar_lea.vmem %s3, %s200
      %v202 = vld [vmem:[%s1] sm:$0xf]
      %v203 = vld [vmem:[%s1 + $0x4] sm:$0xf]
      %v204 = vld [vmem:[%s1 + $0x8] sm:$0xf]
      %v205 = vld [vmem:[%s1 + $0xc] sm:$0xf]
      %v206 = vld [vmem:[%s1 + $0x10] sm:$0xf]
      %v207 = vld [vmem:[%s1 + $0x14] sm:$0xf]
      %v208 = vld [vmem:[%s1 + $0x18] sm:$0xf]
      %v209 = vld [vmem:[%s1 + $0x1c] sm:$0xf]
      %v210 = vld [vmem:[%s193] sm:$0xf]
      %v211 = vld [vmem:[%s193 + $0x4] sm:$0xf]
      %v212 = vld [vmem:[%s193 + $0x8] sm:$0xf]
      %v213 = vld [vmem:[%s193 + $0xc] sm:$0xf]
      %v214 = vld [vmem:[%s193 + $0x10] sm:$0xf]
      %v215 = vld [vmem:[%s193 + $0x14] sm:$0xf]
      %v216 = vld [vmem:[%s193 + $0x18] sm:$0xf]
      %v217 = vld [vmem:[%s193 + $0x1c] sm:$0xf]
      %v218 = vld [vmem:[%s193 + $0x20] sm:$0xf]
      %v219 = vld [vmem:[%s193 + $0x24] sm:$0xf]
      %v220 = vld [vmem:[%s193 + $0x28] sm:$0xf]
      %v221 = vld [vmem:[%s193 + $0x2c] sm:$0xf]
      %v222 = vld [vmem:[%s193 + $0x30] sm:$0xf]
      %v223 = vld [vmem:[%s193 + $0x34] sm:$0xf]
      %v224 = vld [vmem:[%s193 + $0x38] sm:$0xf]
      %v225 = vld [vmem:[%s193 + $0x3c] sm:$0xf]
      %v226 = vld [vmem:[%s2] sm:$0xff]
      %v227 = vld [vmem:[%s2 + $0x8] sm:$0xff]
      %v228 = vld [vmem:[%s2 + $0x10] sm:$0xff]
      %v229 = vld [vmem:[%s2 + $0x18] sm:$0xff]
      %v230 = vld [vmem:[%s2 + $0x20] sm:$0xff]
      %v231 = vld [vmem:[%s2 + $0x28] sm:$0xff]
      %v232 = vld [vmem:[%s2 + $0x30] sm:$0xff]
      %v233 = vld [vmem:[%s2 + $0x38] sm:$0xff]
      %235 = vset.pattern.permute.xlu0 0
      %236 = vperm.xlu0 %235, %v226
      %v237 = vpop.permute.xlu0 %236
      %240 = vset.pattern.permute.xlu0 0
      %241 = vperm.xlu0 %240, %v227
      %v242 = vpop.permute.xlu0 %241
      %245 = vset.pattern.permute.xlu0 0
      %246 = vperm.xlu0 %245, %v228
      %v247 = vpop.permute.xlu0 %246
      %250 = vset.pattern.permute.xlu0 0
      %251 = vperm.xlu0 %250, %v229
      %v252 = vpop.permute.xlu0 %251
      %255 = vset.pattern.permute.xlu0 0
      %256 = vperm.xlu0 %255, %v230
      %v257 = vpop.permute.xlu0 %256
      %260 = vset.pattern.permute.xlu0 0
      %261 = vperm.xlu0 %260, %v231
      %v262 = vpop.permute.xlu0 %261
      %265 = vset.pattern.permute.xlu0 0
      %266 = vperm.xlu0 %265, %v232
      %v267 = vpop.permute.xlu0 %266
      %270 = vset.pattern.permute.xlu0 0
      %271 = vperm.xlu0 %270, %v233
      %v272 = vpop.permute.xlu0 %271
      %v282 = vunpack.c.l.b16 %v202
      %v283 = vunpack.c.l.b16 %v203
      %v284 = vunpack.c.l.b16 %v204
      %v285 = vunpack.c.l.b16 %v205
      %v286 = vunpack.c.l.b16 %v206
      %v287 = vunpack.c.l.b16 %v207
      %v288 = vunpack.c.l.b16 %v208
      %v289 = vunpack.c.l.b16 %v209
      %v290 = vpack.c.b16 %v283, %v282
      %v291 = vpack.c.b16 %v285, %v284
      %v292 = vpack.c.b16 %v287, %v286
      %v293 = vpack.c.b16 %v289, %v288
      %v314 = vunpack.c.l.b16 %v210
      %v315 = vunpack.c.l.b16 %v211
      %v316 = vunpack.c.l.b16 %v212
      %v317 = vunpack.c.l.b16 %v213
      %v318 = vunpack.c.l.b16 %v214
      %v319 = vunpack.c.l.b16 %v215
      %v320 = vunpack.c.l.b16 %v216
      %v321 = vunpack.c.l.b16 %v217
      %v322 = vunpack.c.l.b16 %v218
      %v323 = vunpack.c.l.b16 %v219
      %v324 = vunpack.c.l.b16 %v220
      %v325 = vunpack.c.l.b16 %v221
      %v326 = vunpack.c.l.b16 %v222
      %v327 = vunpack.c.l.b16 %v223
      %v328 = vunpack.c.l.b16 %v224
      %v329 = vunpack.c.l.b16 %v225
      %v330 = vpack.c.b16 %v315, %v314
      %v331 = vpack.c.b16 %v317, %v316
      %v332 = vpack.c.b16 %v319, %v318
      %v333 = vpack.c.b16 %v321, %v320
      %v334 = vpack.c.b16 %v323, %v322
      %v335 = vpack.c.b16 %v325, %v324
      %v336 = vpack.c.b16 %v327, %v326
      %v337 = vpack.c.b16 %v329, %v328
      %346 = vmatpush.bf16.msra.mxu0 %v337
      %347 = vmatpush.bf16.msra.mxu0 %v336
      %348 = vmatpush.bf16.msra.mxu0 %v335
      %349 = vmatpush.bf16.msra.mxu0 %v334
      %350 = vmatpush.bf16.msra.mxu0 %v333
      %351 = vmatpush.bf16.msra.mxu0 %v332
      %352 = vmatpush.bf16.msra.mxu0 %v331
      %353 = vmatpush.bf16.msra.mxu0 %v330
      %354 = vmatmul.bf16.gmra.mxu0 %v290
      %v355 = vpop.f32.mrf.mxu0
      %v356 = vadd.f32 %v237, %v355
      %v357 = vpop.f32.mrf.mxu0
      %v358 = vadd.f32 %v242, %v357
      %359 = vmatmul.bf16.gmra.mxu0 %v291
      %v360 = vpop.f32.mrf.mxu0
      %v361 = vadd.f32 %v247, %v360
      %v362 = vpop.f32.mrf.mxu0
      %v363 = vadd.f32 %v252, %v362
      %364 = vmatmul.bf16.gmra.mxu0 %v292
      %v365 = vpop.f32.mrf.mxu0
      %v366 = vadd.f32 %v257, %v365
      %v367 = vpop.f32.mrf.mxu0
      %v368 = vadd.f32 %v262, %v367
      %369 = vmatmul.bf16.gmra.mxu0 %v293
      %v370 = vpop.f32.mrf.mxu0
      %v371 = vadd.f32 %v267, %v370
      %v372 = vpop.f32.mrf.mxu0
      %v373 = vadd.f32 %v272, %v372
      %374 = vdwg.mxu0
      %vm375 = vcmp.ge.f32.partialorder %v356, 0.0
      %vm376 = vcmp.ge.f32.partialorder %v358, 0.0
      %vm377 = vcmp.ge.f32.partialorder %v361, 0.0
      %vm378 = vcmp.ge.f32.partialorder %v363, 0.0
      %vm379 = vcmp.ge.f32.partialorder %v366, 0.0
      %vm380 = vcmp.ge.f32.partialorder %v368, 0.0
      %vm381 = vcmp.ge.f32.partialorder %v371, 0.0
      %vm382 = vcmp.ge.f32.partialorder %v373, 0.0
      %v383 = vmul.f32 %v356, 0.01
      %v384 = vmul.f32 %v358, 0.01
      %v385 = vmul.f32 %v361, 0.01
      %v386 = vmul.f32 %v363, 0.01
      %v387 = vmul.f32 %v366, 0.01
      %v388 = vmul.f32 %v368, 0.01
      %v389 = vmul.f32 %v371, 0.01
      %v390 = vmul.f32 %v373, 0.01
      %v391 = vsel %vm375, %v356, %v383
      %v392 = vsel %vm376, %v358, %v384
      %v393 = vsel %vm377, %v361, %v385
      %v394 = vsel %vm378, %v363, %v386
      %v395 = vsel %vm379, %v366, %v387
      %v396 = vsel %vm380, %v368, %v388
      %v397 = vsel %vm381, %v371, %v389
      %v398 = vsel %vm382, %v373, %v390
      %v399 = vpack.c.bf16 %v391, %v391
      %v400 = vpack.c.bf16 %v392, %v392
      %v401 = vpack.c.bf16 %v393, %v393
      %v402 = vpack.c.bf16 %v394, %v394
      %v403 = vpack.c.bf16 %v395, %v395
      %v404 = vpack.c.bf16 %v396, %v396
      %v405 = vpack.c.bf16 %v397, %v397
      %v406 = vpack.c.bf16 %v398, %v398
      %407 = vst [vmem:[%s201] sm:$0xf] %v399
      %408 = vst [vmem:[%s201 + $0x4] sm:$0xf] %v400
      %409 = vst [vmem:[%s201 + $0x8] sm:$0xf] %v401
      %410 = vst [vmem:[%s201 + $0xc] sm:$0xf] %v402
      %411 = vst [vmem:[%s201 + $0x10] sm:$0xf] %v403
      %412 = vst [vmem:[%s201 + $0x14] sm:$0xf] %v404
      %413 = vst [vmem:[%s201 + $0x18] sm:$0xf] %v405
      %414 = vst [vmem:[%s201 + $0x1c] sm:$0xf] %v406
      %p415 = scmp.lt.s32.totalorder %s18, 1
      %s416 = scalar_select %p415, %s18, 1
      %p417 = scmp.lt.s32.totalorder %s19, 0
      %s418 = scalar_select %p417, %s19, 0
      %s419 = smul.addr %s416, 8
      %s420 = sadd.s32 %s418, %s419
      %s421 = smul.addr %s420, 4
      %s422 = scalar_lea.vmem %s3, %s421
      // Predicated region
      $region33: #{landsat_cvae_forward.10} parent=31 // pred_check
        %p423 = pneg %p116
      $region34: #{landsat_cvae_forward.10} parent=31 // pred_check_branch
        %425 = sbr.rel (%p423) target = $region36
      $region35: #{landsat_cvae_forward.10} parent=31 // pred_region
        _
      $region36: #{landsat_cvae_forward.10} parent=31 // pred_fallthru
        _
    $region32: #{landsat_cvae_forward.10} parent=5 // pred_fallthru
      _
    %p426 = scmp.le.s32.totalorder 2, %s9
    // Predicated region
    $region37: #{landsat_cvae_forward.10} parent=5 // pred_check
      %p427 = pneg %p426
    $region38: #{landsat_cvae_forward.10} parent=5 // pred_check_branch
      %429 = sbr.rel (%p427) target = $region40
    $region39: #{landsat_cvae_forward.10} parent=5 // pred_region
      %s430 = ssub.s32 %s9, 2
      // Predicated region
      $region41: #{landsat_cvae_forward.10} parent=39 // pred_check
        %p431 = pneg %p122
      $region42: #{landsat_cvae_forward.10} parent=39 // pred_check_branch
        %433 = sbr.rel (%p431) target = $region44
      $region43: #{landsat_cvae_forward.10} parent=39 // pred_region
        %p434 = scmp.lt.s32.totalorder %s20, 1
        %s435 = scalar_select %p434, %s20, 1
        %p436 = scmp.lt.s32.totalorder %s21, 0
        %s437 = scalar_select %p436, %s21, 0
        %s438 = smul.addr %s435, 8
        %s439 = sadd.s32 %s437, %s438
        %s440 = smul.addr %s439, 4
        %s441 = scalar_lea.vmem %s3, %s440
      $region44: #{landsat_cvae_forward.10} parent=39 // pred_fallthru
        _
    $region40: #{landsat_cvae_forward.10} parent=5 // pred_fallthru
      _
  $region6: #{landsat_cvae_forward.10} parent=0 // loop_footer
    %s13 = sadd.s32 1, %s9
  $region7: #{landsat_cvae_forward.10} parent=0 // loop_footer_branch
    %8 = sbr.rel target = $region3
  $region8: #{landsat_cvae_forward.10} parent=0 // loop_exit
    _

// kernel: tile.18
$region0: #{tile.18}
  #allocation0 [shape = 's32[1]{0}', space=sflag, size = 0x4, scoped, tag = 'scoped memory for tile.18']
  %s0 = inlined_call_operand.vmem [shape: f32[3], index: 0, kind: input, shape index: {}]
  %s1 = inlined_call_operand.vmem [shape: f32[9,3], index: 1, kind: output, shape index: {}]
  // Predicated region
  $region2: #{tile.18} parent=0 // pred_check
    _
  $region3: #{tile.18} parent=0 // pred_check_branch
    %3 = sbr.rel (0) target = $region5
  $region4: #{tile.18} parent=0 // pred_region
    _
  $region5: #{tile.18} parent=0 // pred_fallthru
    _
  %v4 = vld [vmem:[%s0] ss:$0 sm:$0xff]
  %5 = vst [vmem:[%s1] sm:$0xff] %v4
  %s6 = scalar_lea.vmem %s1, 8
  %7 = vst [vmem:[%s6] sm:$0xff] %v4

// kernel: tile.1
$region0: #{tile.1}
  %s0 = inlined_call_operand.vmem [shape: f32[9,3], index: 0, kind: input, shape index: {}]
  %s1 = inlined_call_operand.vmem [shape: f32[27,1], index: 1, kind: output, shape index: {}]
  %v2 = vld [vmem:[%s0] sm:$0xff]
  %vm3 = vcmask 7168
  %4 = vst.msk [vmem:[%s1] ss:$3 sm:$0xff] %vm3, %v2
  %s5 = scalar_lea.vmem %s0, 8
  %v6 = vld [vmem:[%s5] sm:$0x1]
  %vm7 = vcmask 7168
  %s8 = scalar_lea.vmem %s1, 24
  %9 = vst.msk [vmem:[%s8] sm:$0x1] %vm7, %v6
  %v10 = vld [vmem:[%s0] sm:$0xff]
  %11 = vrot.lane.b32.xlu0 %v10, 127
  %v12 = vpop.permute.xlu0 %11
  %vm13 = vcmask 7168
  %s14 = scalar_lea.vmem %s1, 1
  %15 = vst.msk [vmem:[%s14] ss:$3 sm:$0xff] %vm13, %v12
  %s16 = scalar_lea.vmem %s0, 8
  %v17 = vld [vmem:[%s16] sm:$0x1]
  %18 = vrot.lane.b32.xlu0 %v17, 127
  %v19 = vpop.permute.xlu0 %18
  %vm20 = vcmask 7168
  %s21 = scalar_lea.vmem %s1, 25
  %22 = vst.msk [vmem:[%s21] sm:$0x1] %vm20, %v19
  %v23 = vld [vmem:[%s0] sm:$0xff]
  %24 = vrot.lane.b32.xlu0 %v23, 126
  %v25 = vpop.permute.xlu0 %24
  %vm26 = vcmask 7168
  %s27 = scalar_lea.vmem %s1, 2
  %28 = vst.msk [vmem:[%s27] ss:$3 sm:$0xff] %vm26, %v25
  %s29 = scalar_lea.vmem %s0, 8
  %v30 = vld [vmem:[%s29] sm:$0x1]
  %31 = vrot.lane.b32.xlu0 %v30, 126
  %v32 = vpop.permute.xlu0 %31
  %vm33 = vcmask 7168
  %s34 = scalar_lea.vmem %s1, 26
  %35 = vst.msk [vmem:[%s34] sm:$0x1] %vm33, %v32

// kernel: landsat_cvae_forward.11
$region0: #{landsat_cvae_forward.11}
  #allocation0 [shape = 'u32[]', space=smem, size = 0x4, offset = 0x4, fixed_abs, tag = 'smem constant byte address 0x4 - core index']
  #allocation1 [shape = 'u32[72,128]{1,0:T(1,128)}', space=vmem, size = 0x9000, scoped, tag = 'internal scratch']
  %s0 = inlined_call_operand.vmem [shape: bf16[2,144,384], index: 0, kind: input, shape index: {}]
  %s1 = inlined_call_operand.vmem [shape: bf16[27,144], index: 1, kind: input, shape index: {}]
  %s2 = inlined_call_operand.vmem [shape: f32[27,1], index: 2, kind: input, shape index: {}]
  %s3 = inlined_call_operand.vmem [shape: f32[2,27,384], index: 3, kind: output, shape index: {}]
  %s4 = sld [smem:[#allocation0]]
  $region45: #{landsat_cvae_forward.11} parent=0
    _
  %s6 = ssub.s32 1, %s4
  %s7 = scalar_select 0, %s6, %s4
  loop: start=0, step=1, limit=4
  $region2: #{landsat_cvae_forward.11} parent=0 // loop_pre_header
    _
  $region3: #{landsat_cvae_forward.11} parent=0 // loop_header
    %s9 = sphi 0, %s13
    %p10 = scmp.ge.s32.totalorder %s9, 4
    %s16 = sphi 0, %s28
    %s17 = sphi 0, %s24
    %s18 = sphi 0, %s16
    %s19 = sphi 0, %s17
    %s20 = sphi 0, %s18
    %s21 = sphi 0, %s19
    %s33 = sphi 0, %s35
    %s36 = sphi 0, %s33
    %s37 = sphi 0, %s36
    %s53 = sphi 0, %s37
    %s57 = sphi 0, %s57
    %s59 = sphi 0, %s57
    %s60 = sphi 0, %s59
    %s74 = sphi 0, %s60
    %s78 = sphi 0, %s78
    %s80 = sphi 0, %s78
    %s81 = sphi 0, %s80
    %s95 = sphi 0, %s81
    %s103 = sphi 0, %s105
    %s106 = sphi 0, %s103
    %s107 = sphi 0, %s106
    %s123 = sphi 0, %s107
  $region4: #{landsat_cvae_forward.11} parent=0 // loop_header_branch
    %12 = sbr.rel (%p10) target = $region8
  $region5: #{landsat_cvae_forward.11} parent=0 // loop_body
    %s14 = ssub.s32 %s9, 1
    %s15 = ssub.s32 %s9, 2
    %s22 = sadd.s32 1, %s17
    %p23 = scmp.ge.s32.totalorder %s22, 1
    %s24 = scalar_select %p23, 0, %s22
    %s25 = sadd.s32 1, %s16
    %s26 = scalar_select %p23, %s25, %s16
    %p27 = scmp.ge.s32.totalorder %s26, 2
    %s28 = scalar_select %p27, 0, %s26
    %s29 = ssub.s32 %s16, %s28
    %s30 = ssub.s32 %s17, %s24
    %s31 = sor.u32 %s29, %s30
    %p32 = scmp.eq.s32.totalorder %s31, 0
    %s34 = sadd.s32 %s33, 1
    %s35 = scalar_select %p32, %s33, %s34
    %p38 = pneg %p32
    %p39 = scmp.eq.s32.totalorder %s9, 1
    %p40 = por %p38, %p39
    %p41 = scmp.ne.s32.totalorder %s33, %s36
    %p42 = scmp.eq.s32.totalorder %s9, 0
    %p43 = por %p41, %p42
    %p44 = scmp.ne.s32.totalorder %s33, %s36
    %p45 = scmp.eq.s32.totalorder %s14, 1
    %p46 = por %p44, %p45
    %p47 = scmp.ne.s32.totalorder %s36, %s37
    %p48 = scmp.eq.s32.totalorder %s14, 0
    %p49 = por %p47, %p48
    %p50 = scmp.ne.s32.totalorder %s36, %s37
    %p51 = scmp.eq.s32.totalorder %s15, 1
    %p52 = por %p50, %p51
    %p54 = scmp.ne.s32.totalorder %s37, %s53
    %p55 = scmp.eq.s32.totalorder %s15, 0
    %p56 = por %p54, %p55
    %s58 = sadd.s32 %s57, 1
    %p61 = scmp.eq.s32.totalorder %s9, 1
    %p62 = scmp.ne.s32.totalorder %s57, %s59
    %p63 = scmp.eq.s32.totalorder %s9, 0
    %p64 = por %p62, %p63
    %p65 = scmp.ne.s32.totalorder %s57, %s59
    %p66 = scmp.eq.s32.totalorder %s14, 1
    %p67 = por %p65, %p66
    %p68 = scmp.ne.s32.totalorder %s59, %s60
    %p69 = scmp.eq.s32.totalorder %s14, 0
    %p70 = por %p68, %p69
    %p71 = scmp.ne.s32.totalorder %s59, %s60
    %p72 = scmp.eq.s32.totalorder %s15, 1
    %p73 = por %p71, %p72
    %p75 = scmp.ne.s32.totalorder %s60, %s74
    %p76 = scmp.eq.s32.totalorder %s15, 0
    %p77 = por %p75, %p76
    %s79 = sadd.s32 %s78, 1
    %p82 = scmp.eq.s32.totalorder %s9, 1
    %p83 = scmp.ne.s32.totalorder %s78, %s80
    %p84 = scmp.eq.s32.totalorder %s9, 0
    %p85 = por %p83, %p84
    %p86 = scmp.ne.s32.totalorder %s78, %s80
    %p87 = scmp.eq.s32.totalorder %s14, 1
    %p88 = por %p86, %p87
    %p89 = scmp.ne.s32.totalorder %s80, %s81
    %p90 = scmp.eq.s32.totalorder %s14, 0
    %p91 = por %p89, %p90
    %p92 = scmp.ne.s32.totalorder %s80, %s81
    %p93 = scmp.eq.s32.totalorder %s15, 1
    %p94 = por %p92, %p93
    %p96 = scmp.ne.s32.totalorder %s81, %s95
    %p97 = scmp.eq.s32.totalorder %s15, 0
    %p98 = por %p96, %p97
    %s99 = ssub.s32 %s16, %s28
    %s100 = ssub.s32 %s17, %s24
    %s101 = sor.u32 %s99, %s100
    %p102 = scmp.eq.s32.totalorder %s101, 0
    %s104 = sadd.s32 %s103, 1
    %s105 = scalar_select %p102, %s103, %s104
    %p108 = pneg %p102
    %p109 = scmp.eq.s32.totalorder %s9, 1
    %p110 = por %p108, %p109
    %p111 = scmp.ne.s32.totalorder %s103, %s106
    %p112 = scmp.eq.s32.totalorder %s9, 0
    %p113 = por %p111, %p112
    %p114 = scmp.ne.s32.totalorder %s103, %s106
    %p115 = scmp.eq.s32.totalorder %s14, 1
    %p116 = por %p114, %p115
    %p117 = scmp.ne.s32.totalorder %s106, %s107
    %p118 = scmp.eq.s32.totalorder %s14, 0
    %p119 = por %p117, %p118
    %p120 = scmp.ne.s32.totalorder %s106, %s107
    %p121 = scmp.eq.s32.totalorder %s15, 1
    %p122 = por %p120, %p121
    %p124 = scmp.ne.s32.totalorder %s107, %s123
    %p125 = scmp.eq.s32.totalorder %s15, 0
    %p126 = por %p124, %p125
    %p127 = scmp.le.s32.totalorder 1, %s9
    %p128 = scmp.lt.s32.totalorder %s9, 3
    %p129 = pnand %p127, %p128
    %p130 = pneg %p129
    // Predicated region
    $region9: #{landsat_cvae_forward.11} parent=5 // pred_check
      _
    $region10: #{landsat_cvae_forward.11} parent=5 // pred_check_branch
      %132 = sbr.rel (%p129) target = $region12
    $region11: #{landsat_cvae_forward.11} parent=5 // pred_region
      %s133 = ssub.s32 %s9, 1
      // Predicated region
      $region13: #{landsat_cvae_forward.11} parent=11 // pred_check
        %p134 = pneg %p70
      $region14: #{landsat_cvae_forward.11} parent=11 // pred_check_branch
        %136 = sbr.rel (%p134) target = $region16
      $region15: #{landsat_cvae_forward.11} parent=11 // pred_region
        _
      $region16: #{landsat_cvae_forward.11} parent=11 // pred_fallthru
        _
      // Predicated region
      $region17: #{landsat_cvae_forward.11} parent=11 // pred_check
        %p137 = pneg %p91
      $region18: #{landsat_cvae_forward.11} parent=11 // pred_check_branch
        %139 = sbr.rel (%p137) target = $region20
      $region19: #{landsat_cvae_forward.11} parent=11 // pred_region
        _
      $region20: #{landsat_cvae_forward.11} parent=11 // pred_fallthru
        _
    $region12: #{landsat_cvae_forward.11} parent=5 // pred_fallthru
      _
    %p140 = scmp.lt.s32.totalorder %s9, 2
    // Predicated region
    $region21: #{landsat_cvae_forward.11} parent=5 // pred_check
      %p141 = pneg %p140
    $region22: #{landsat_cvae_forward.11} parent=5 // pred_check_branch
      %143 = sbr.rel (%p141) target = $region24
    $region23: #{landsat_cvae_forward.11} parent=5 // pred_region
      // Predicated region
      $region25: #{landsat_cvae_forward.11} parent=23 // pred_check
        %p144 = pneg %p43
      $region26: #{landsat_cvae_forward.11} parent=23 // pred_check_branch
        %146 = sbr.rel (%p144) target = $region28
      $region27: #{landsat_cvae_forward.11} parent=23 // pred_region
        %s147 = smul.u32 3, %s17
        %p148 = scmp.lt.s32.totalorder %s16, 1
        %s149 = scalar_select %p148, %s16, 1
        %p150 = scmp.lt.s32.totalorder %s147, 2
        %s151 = scalar_select %p150, %s147, 2
        %s152 = smul.addr %s149, 54
        %s153 = sadd.s32 %s151, %s152
        %s154 = smul.addr %s153, 4
        %s155 = scalar_lea.vmem %s0, %s154
        %s156 = smul.u32 3, %s17
      $region28: #{landsat_cvae_forward.11} parent=23 // pred_fallthru
        _
    $region24: #{landsat_cvae_forward.11} parent=5 // pred_fallthru
      _
    %p157 = scmp.le.s32.totalorder 1, %s9
    %p158 = scmp.lt.s32.totalorder %s9, 3
    %p159 = pnand %p157, %p158
    %p160 = pneg %p159
    // Predicated region
    $region29: #{landsat_cvae_forward.11} parent=5 // pred_check
      _
    $region30: #{landsat_cvae_forward.11} parent=5 // pred_check_branch
      %162 = sbr.rel (%p159) target = $region32
    $region31: #{landsat_cvae_forward.11} parent=5 // pred_region
      %s163 = ssub.s32 %s9, 1
      %s164 = smul.u32 3, %s19
      %p165 = scmp.lt.s32.totalorder %s18, 1
      %s166 = scalar_select %p165, %s18, 1
      %p167 = scmp.lt.s32.totalorder %s164, 2
      %s168 = scalar_select %p167, %s164, 2
      %s169 = smul.addr %s166, 54
      %s170 = sadd.s32 %s168, %s169
      %s171 = smul.addr %s170, 4
      %s172 = scalar_lea.vmem %s0, %s171
      %p173 = pneg %p49
      %p174 = pneg %p46
      %p175 = pneg %p70
      %p176 = pneg %p67
      %p177 = pneg %p91
      %p178 = pneg %p88
      %p179 = pneg %p119
      %p180 = pneg %p116
      %s181 = smul.u32 3, %s19
      %p182 = scmp.lt.s32.totalorder %s18, 1
      %s183 = scalar_select %p182, %s18, 1
      %p184 = scmp.lt.s32.totalorder %s181, 2
      %s185 = scalar_select %p184, %s181, 2
      %s186 = smul.addr %s183, 12
      %s187 = sadd.s32 %s185, %s186
      %s188 = smul.addr %s187, 8
      %s189 = scalar_lea.vmem %s3, %s188
      %s190 = smul.u32 3, %s19
      %p191 = scmp.lt.s32.totalorder %s18, 1
      %s192 = scalar_select %p191, %s18, 1
      %p193 = scmp.lt.s32.totalorder %s190, 2
      %s194 = scalar_select %p193, %s190, 2
      %s195 = smul.addr %s192, 54
      %s196 = sadd.s32 %s194, %s195
      %s197 = smul.addr %s196, 4
      %s198 = scalar_lea.vmem %s0, %s197
      %s199 = smul.u32 3, %s19
      %s200 = smul.u32 3, %s19
      %p201 = scmp.lt.s32.totalorder %s18, 1
      %s202 = scalar_select %p201, %s18, 1
      %p203 = scmp.lt.s32.totalorder %s200, 2
      %s204 = scalar_select %p203, %s200, 2
      %s205 = smul.addr %s202, 12
      %s206 = sadd.s32 %s204, %s205
      %s207 = smul.addr %s206, 8
      %s208 = scalar_lea.vmem %s3, %s207
      %s209 = smul.u32 3, %s19
      %v211 = vld [vmem:[%s1] sm:$0xff]
      %v212 = vld [vmem:[%s1 + $0x8] sm:$0xff]
      %v213 = vld [vmem:[%s1 + $0x10] sm:$0xff]
      %v214 = vld [vmem:[%s1 + $0x18] sm:$0x33]
      %v215 = vld [vmem:[%s198] sm:$0xff]
      %v216 = vld [vmem:[%s198 + $0x8] sm:$0xf]
      %v217 = vld [vmem:[%s198 + $0xc] sm:$0xff]
      %v218 = vld [vmem:[%s198 + $0x14] sm:$0xf]
      %v219 = vld [vmem:[%s198 + $0x18] sm:$0xff]
      %v220 = vld [vmem:[%s198 + $0x20] sm:$0xf]
      %v221 = vld [vmem:[%s198 + $0x24] sm:$0xff]
      %v222 = vld [vmem:[%s198 + $0x2c] sm:$0xf]
      %v223 = vld [vmem:[%s198 + $0x30] sm:$0xff]
      %v224 = vld [vmem:[%s198 + $0x38] sm:$0xf]
      %v225 = vld [vmem:[%s198 + $0x3c] sm:$0xff]
      %v226 = vld [vmem:[%s198 + $0x44] sm:$0xf]
      %v227 = vld [vmem:[%s198 + $0x48] sm:$0xff]
      %v228 = vld [vmem:[%s198 + $0x50] sm:$0xf]
      %v229 = vld [vmem:[%s198 + $0x54] sm:$0xff]
      %v230 = vld [vmem:[%s198 + $0x5c] sm:$0xf]
      %v231 = vld [vmem:[%s198 + $0x60] sm:$0xff]
      %v232 = vld [vmem:[%s198 + $0x68] sm:$0xf]
      %v233 = vld [vmem:[%s198 + $0x6c] sm:$0xff]
      %v234 = vld [vmem:[%s198 + $0x74] sm:$0xf]
      %v235 = vld [vmem:[%s198 + $0x78] sm:$0xff]
      %v236 = vld [vmem:[%s198 + $0x80] sm:$0xf]
      %v237 = vld [vmem:[%s198 + $0x84] sm:$0xff]
      %v238 = vld [vmem:[%s198 + $0x8c] sm:$0xf]
      %v239 = vld [vmem:[%s198 + $0x90] sm:$0xff]
      %v240 = vld [vmem:[%s198 + $0x98] sm:$0xf]
      %v241 = vld [vmem:[%s198 + $0x9c] sm:$0xff]
      %v242 = vld [vmem:[%s198 + $0xa4] sm:$0xf]
      %v243 = vld [vmem:[%s198 + $0xa8] sm:$0xff]
      %v244 = vld [vmem:[%s198 + $0xb0] sm:$0xf]
      %v245 = vld [vmem:[%s198 + $0xb4] sm:$0xff]
      %v246 = vld [vmem:[%s198 + $0xbc] sm:$0xf]
      %v247 = vld [vmem:[%s198 + $0xc0] sm:$0xff]
      %v248 = vld [vmem:[%s198 + $0xc8] sm:$0xf]
      %v249 = vld [vmem:[%s198 + $0xcc] sm:$0xff]
      %v250 = vld [vmem:[%s198 + $0xd4] sm:$0xf]
      %v251 = vld [vmem:[%s2] sm:$0xff]
      %v252 = vld [vmem:[%s2 + $0x8] sm:$0xff]
      %v253 = vld [vmem:[%s2 + $0x10] sm:$0xff]
      %v254 = vld [vmem:[%s2 + $0x18] sm:$0x7]
      %256 = vset.pattern.permute.xlu0 0
      %257 = vperm.xlu0 %256, %v251
      %v258 = vpop.permute.xlu0 %257
      %261 = vset.pattern.permute.xlu0 0
      %262 = vperm.xlu0 %261, %v252
      %v263 = vpop.permute.xlu0 %262
      %266 = vset.pattern.permute.xlu0 0
      %267 = vperm.xlu0 %266, %v253
      %v268 = vpop.permute.xlu0 %267
      %271 = vset.pattern.permute.xlu0 0
      %272 = vperm.xlu0 %271, %v254
      %v273 = vpop.permute.xlu0 %272
      %v279 = vunpack.c.l.b16 %v211
      %v280 = vunpack.c.h.b16 %v211
      %v281 = vunpack.c.l.b16 %v212
      %v282 = vunpack.c.h.b16 %v212
      %v283 = vunpack.c.l.b16 %v213
      %v284 = vunpack.c.h.b16 %v213
      %v285 = vunpack.c.l.b16 %v214
      %v286 = vunpack.c.h.b16 %v214
      %v287 = vpack.c.b16 %v281, %v279
      %v288 = vpack.c.b16 %v282, %v280
      %v289 = vpack.c.b16 %v285, %v283
      %v290 = vpack.c.b16 %v286, %v284
      %v329 = vunpack.c.l.b16 %v215
      %v330 = vunpack.c.h.b16 %v215
      %v331 = vunpack.c.l.b16 %v216
      %v332 = vunpack.c.l.b16 %v217
      %v333 = vunpack.c.h.b16 %v217
      %v334 = vunpack.c.l.b16 %v218
      %v335 = vunpack.c.l.b16 %v219
      %v336 = vunpack.c.h.b16 %v219
      %v337 = vunpack.c.l.b16 %v220
      %v338 = vunpack.c.l.b16 %v221
      %v339 = vunpack.c.h.b16 %v221
      %v340 = vunpack.c.l.b16 %v222
      %v341 = vunpack.c.l.b16 %v223
      %v342 = vunpack.c.h.b16 %v223
      %v343 = vunpack.c.l.b16 %v224
      %v344 = vunpack.c.l.b16 %v225
      %v345 = vunpack.c.h.b16 %v225
      %v346 = vunpack.c.l.b16 %v226
      %v347 = vunpack.c.l.b16 %v227
      %v348 = vunpack.c.h.b16 %v227
      %v349 = vunpack.c.l.b16 %v228
      %v350 = vunpack.c.l.b16 %v229
      %v351 = vunpack.c.h.b16 %v229
      %v352 = vunpack.c.l.b16 %v230
      %v353 = vunpack.c.l.b16 %v231
      %v354 = vunpack.c.h.b16 %v231
      %v355 = vunpack.c.l.b16 %v232
      %v356 = vunpack.c.l.b16 %v233
      %v357 = vunpack.c.h.b16 %v233
      %v358 = vunpack.c.l.b16 %v234
      %v359 = vunpack.c.l.b16 %v235
      %v360 = vunpack.c.h.b16 %v235
      %v361 = vunpack.c.l.b16 %v236
      %v362 = vunpack.c.l.b16 %v237
      %v363 = vunpack.c.h.b16 %v237
      %v364 = vunpack.c.l.b16 %v238
      %v365 = vunpack.c.l.b16 %v239
      %v366 = vunpack.c.h.b16 %v239
      %v367 = vunpack.c.l.b16 %v240
      %v368 = vunpack.c.l.b16 %v241
      %v369 = vunpack.c.h.b16 %v241
      %v370 = vunpack.c.l.b16 %v242
      %v371 = vunpack.c.l.b16 %v243
      %v372 = vunpack.c.h.b16 %v243
      %v373 = vunpack.c.l.b16 %v244
      %v374 = vunpack.c.l.b16 %v245
      %v375 = vunpack.c.h.b16 %v245
      %v376 = vunpack.c.l.b16 %v246
      %v377 = vunpack.c.l.b16 %v247
      %v378 = vunpack.c.h.b16 %v247
      %v379 = vunpack.c.l.b16 %v248
      %v380 = vunpack.c.l.b16 %v249
      %v381 = vunpack.c.h.b16 %v249
      %v382 = vunpack.c.l.b16 %v250
      %v383 = vpack.c.b16 %v332, %v329
      %v384 = vpack.c.b16 %v333, %v330
      %v385 = vpack.c.b16 %v334, %v331
      %v386 = vpack.c.b16 %v338, %v335
      %v387 = vpack.c.b16 %v339, %v336
      %v388 = vpack.c.b16 %v340, %v337
      %v389 = vpack.c.b16 %v344, %v341
      %v390 = vpack.c.b16 %v345, %v342
      %v391 = vpack.c.b16 %v346, %v343
      %v392 = vpack.c.b16 %v350, %v347
      %v393 = vpack.c.b16 %v351, %v348
      %v394 = vpack.c.b16 %v352, %v349
      %v395 = vpack.c.b16 %v356, %v353
      %v396 = vpack.c.b16 %v357, %v354
      %v397 = vpack.c.b16 %v358, %v355
      %v398 = vpack.c.b16 %v362, %v359
      %v399 = vpack.c.b16 %v363, %v360
      %v400 = vpack.c.b16 %v364, %v361
      %v401 = vpack.c.b16 %v368, %v365
      %v402 = vpack.c.b16 %v369, %v366
      %v403 = vpack.c.b16 %v370, %v367
      %v404 = vpack.c.b16 %v374, %v371
      %v405 = vpack.c.b16 %v375, %v372
      %v406 = vpack.c.b16 %v376, %v373
      %v407 = vpack.c.b16 %v380, %v377
      %v408 = vpack.c.b16 %v381, %v378
      %v409 = vpack.c.b16 %v382, %v379
      %vm437 = vcmask 130048
      %v439 = vsel %vm437, %v288, 0
      %v442 = vsel %vm437, %v290, 0
      %444 = vmatpush.bf16.msra.mxu0 %v404
      %445 = vmatpush.bf16.msra.mxu0 %v401
      %446 = vmatpush.bf16.msra.mxu0 %v398
      %447 = vmatpush.bf16.msra.mxu0 %v395
      %448 = vmatpush.bf16.msra.mxu0 %v392
      %449 = vmatpush.bf16.msra.mxu0 %v389
      %450 = vmatpush.bf16.msra.mxu0 %v386
      %451 = vmatpush.bf16.msra.mxu0 %v383
      %452 = vmatmul.bf16.gmra.mxu0 %v287
      %v453 = vpop.f32.mrf.mxu0
      %v454 = vadd.f32 %v258, %v453
      %v455 = vpop.f32.mrf.mxu0
      %v456 = vadd.f32 %v263, %v455
      %457 = vmatmul.bf16.gmra.mxu0 %v289
      %v458 = vpop.f32.mrf.mxu0
      %v459 = vadd.f32 %v268, %v458
      %v460 = vpop.f32.mrf.mxu0
      %v461 = vadd.f32 %v273, %v460
      %462 = vdwg.mxu0
      %463 = vmatpush.bf16.msra.mxu0 0
      %464 = vmatpush.bf16.msra.mxu0 0
      %465 = vmatpush.bf16.msra.mxu0 0
      %466 = vmatpush.bf16.msra.mxu0 0
      %467 = vmatpush.bf16.msra.mxu0 0
      %468 = vmatpush.bf16.msra.mxu0 0
      %469 = vmatpush.bf16.msra.mxu0 0
      %470 = vmatpush.bf16.msra.mxu0 %v407
      %471 = vmatmul.bf16.gmra.mxu0 %v439
      %v472 = vpop.f32.mrf.mxu0
      %v473 = vadd.f32 %v454, %v472
      %v474 = vpop.f32.mrf.mxu0
      %v475 = vadd.f32 %v456, %v474
      %476 = vmatmul.bf16.gmra.mxu0 %v442
      %v477 = vpop.f32.mrf.mxu0
      %v478 = vadd.f32 %v459, %v477
      %v479 = vpop.f32.mrf.mxu0
      %v480 = vadd.f32 %v461, %v479
      %481 = vdwg.mxu0
      %482 = vmatpush.bf16.msra.mxu0 %v405
      %483 = vmatpush.bf16.msra.mxu0 %v402
      %484 = vmatpush.bf16.msra.mxu0 %v399
      %485 = vmatpush.bf16.msra.mxu0 %v396
      %486 = vmatpush.bf16.msra.mxu0 %v393
      %487 = vmatpush.bf16.msra.mxu0 %v390
      %488 = vmatpush.bf16.msra.mxu0 %v387
      %489 = vmatpush.bf16.msra.mxu0 %v384
      %490 = vmatmul.bf16.gmra.mxu0 %v287
      %v491 = vpop.f32.mrf.mxu0
      %v492 = vadd.f32 %v258, %v491
      %v493 = vpop.f32.mrf.mxu0
      %v494 = vadd.f32 %v263, %v493
      %495 = vmatmul.bf16.gmra.mxu0 %v289
      %v496 = vpop.f32.mrf.mxu0
      %v497 = vadd.f32 %v268, %v496
      %v498 = vpop.f32.mrf.mxu0
      %v499 = vadd.f32 %v273, %v498
      %500 = vdwg.mxu0
      %501 = vmatpush.bf16.msra.mxu0 0
      %502 = vmatpush.bf16.msra.mxu0 0
      %503 = vmatpush.bf16.msra.mxu0 0
      %504 = vmatpush.bf16.msra.mxu0 0
      %505 = vmatpush.bf16.msra.mxu0 0
      %506 = vmatpush.bf16.msra.mxu0 0
      %507 = vmatpush.bf16.msra.mxu0 0
      %508 = vmatpush.bf16.msra.mxu0 %v408
      %509 = vmatmul.bf16.gmra.mxu0 %v439
      %v510 = vpop.f32.mrf.mxu0
      %v511 = vadd.f32 %v492, %v510
      %v512 = vpop.f32.mrf.mxu0
      %v513 = vadd.f32 %v494, %v512
      %514 = vmatmul.bf16.gmra.mxu0 %v442
      %v515 = vpop.f32.mrf.mxu0
      %v516 = vadd.f32 %v497, %v515
      %v517 = vpop.f32.mrf.mxu0
      %v518 = vadd.f32 %v499, %v517
      %519 = vdwg.mxu0
      %520 = vmatpush.bf16.msra.mxu0 %v406
      %521 = vmatpush.bf16.msra.mxu0 %v403
      %522 = vmatpush.bf16.msra.mxu0 %v400
      %523 = vmatpush.bf16.msra.mxu0 %v397
      %524 = vmatpush.bf16.msra.mxu0 %v394
      %525 = vmatpush.bf16.msra.mxu0 %v391
      %526 = vmatpush.bf16.msra.mxu0 %v388
      %527 = vmatpush.bf16.msra.mxu0 %v385
      %528 = vmatmul.bf16.gmra.mxu0 %v287
      %v529 = vpop.f32.mrf.mxu0
      %v530 = vadd.f32 %v258, %v529
      %v531 = vpop.f32.mrf.mxu0
      %v532 = vadd.f32 %v263, %v531
      %533 = vmatmul.bf16.gmra.mxu0 %v289
      %v534 = vpop.f32.mrf.mxu0
      %v535 = vadd.f32 %v268, %v534
      %v536 = vpop.f32.mrf.mxu0
      %v537 = vadd.f32 %v273, %v536
      %538 = vdwg.mxu0
      %539 = vmatpush.bf16.msra.mxu0 0
      %540 = vmatpush.bf16.msra.mxu0 0
      %541 = vmatpush.bf16.msra.mxu0 0
      %542 = vmatpush.bf16.msra.mxu0 0
      %543 = vmatpush.bf16.msra.mxu0 0
      %544 = vmatpush.bf16.msra.mxu0 0
      %545 = vmatpush.bf16.msra.mxu0 0
      %546 = vmatpush.bf16.msra.mxu0 %v409
      %547 = vmatmul.bf16.gmra.mxu0 %v439
      %v548 = vpop.f32.mrf.mxu0
      %v549 = vadd.f32 %v530, %v548
      %v550 = vpop.f32.mrf.mxu0
      %v551 = vadd.f32 %v532, %v550
      %552 = vmatmul.bf16.gmra.mxu0 %v442
      %v553 = vpop.f32.mrf.mxu0
      %v554 = vadd.f32 %v535, %v553
      %v555 = vpop.f32.mrf.mxu0
      %v556 = vadd.f32 %v537, %v555
      %557 = vdwg.mxu0
      %v558 = vxor.u32 %v473, 2147483648
      %v559 = vxor.u32 %v511, 2147483648
      %v560 = vxor.u32 %v549, 2147483648
      %v561 = vxor.u32 %v475, 2147483648
      %v562 = vxor.u32 %v513, 2147483648
      %v563 = vxor.u32 %v551, 2147483648
      %v564 = vxor.u32 %v478, 2147483648
      %v565 = vxor.u32 %v516, 2147483648
      %v566 = vxor.u32 %v554, 2147483648
      %v567 = vxor.u32 %v480, 2147483648
      %v568 = vxor.u32 %v518, 2147483648
      %v569 = vxor.u32 %v556, 2147483648
      %v570 = vmul.f32 %v558, 1.442695
      %v571 = vpow.pop %v570
      %v572 = vmul.f32 %v559, 1.442695
      %v573 = vpow.pop %v572
      %v574 = vmul.f32 %v560, 1.442695
      %v575 = vpow.pop %v574
      %v576 = vmul.f32 %v561, 1.442695
      %v577 = vpow.pop %v576
      %v578 = vmul.f32 %v562, 1.442695
      %v579 = vpow.pop %v578
      %v580 = vmul.f32 %v563, 1.442695
      %v581 = vpow.pop %v580
      %v582 = vmul.f32 %v564, 1.442695
      %v583 = vpow.pop %v582
      %v584 = vmul.f32 %v565, 1.442695
      %v585 = vpow.pop %v584
      %v586 = vmul.f32 %v566, 1.442695
      %v587 = vpow.pop %v586
      %v588 = vmul.f32 %v567, 1.442695
      %v589 = vpow.pop %v588
      %v590 = vmul.f32 %v568, 1.442695
      %v591 = vpow.pop %v590
      %v592 = vmul.f32 %v569, 1.442695
      %v593 = vpow.pop %v592
      %v594 = vadd.f32 %v571, 1.0
      %v595 = vadd.f32 %v573, 1.0
      %v596 = vadd.f32 %v575, 1.0
      %v597 = vadd.f32 %v577, 1.0
      %v598 = vadd.f32 %v579, 1.0
      %v599 = vadd.f32 %v581, 1.0
      %v600 = vadd.f32 %v583, 1.0
      %v601 = vadd.f32 %v585, 1.0
      %v602 = vadd.f32 %v587, 1.0
      %v603 = vadd.f32 %v589, 1.0
      %v604 = vadd.f32 %v591, 1.0
      %v605 = vadd.f32 %v593, 1.0
      %v606 = vrcp.pop %v594
      %v607 = vmul.f32 %v594, %v606
      %v608 = vsub.f32 1.0, %v607
      %v609 = vmul.f32 %v606, %v608
      %v610 = vadd.f32 %v606, %v609
      %vm611 = vweird.f32 %v594
      %vm612 = vweird.f32 %v606
      %vm613 = vmor %vm611, %vm612
      %v614 = vsel %vm613, %v606, %v610
      %v615 = vand.u32 2147483647, %v594
      %vm616 = vcmp.eq.f32.partialorder %v615, 8.507059e+37
      %v617 = vand.u32 %v594, 2147483648
      %v618 = vor.u32 1.1754944e-38, %v617
      %v619 = vsel %vm616, %v618, %v614
      %v620 = vmul.f32 1.0, %v619
      %v621 = vrcp.pop %v595
      %v622 = vmul.f32 %v595, %v621
      %v623 = vsub.f32 1.0, %v622
      %v624 = vmul.f32 %v621, %v623
      %v625 = vadd.f32 %v621, %v624
      %vm626 = vweird.f32 %v595
      %vm627 = vweird.f32 %v621
      %vm628 = vmor %vm626, %vm627
      %v629 = vsel %vm628, %v621, %v625
      %v630 = vand.u32 2147483647, %v595
      %vm631 = vcmp.eq.f32.partialorder %v630, 8.507059e+37
      %v632 = vand.u32 %v595, 2147483648
      %v633 = vor.u32 1.1754944e-38, %v632
      %v634 = vsel %vm631, %v633, %v629
      %v635 = vmul.f32 1.0, %v634
      %v636 = vrcp.pop %v596
      %v637 = vmul.f32 %v596, %v636
      %v638 = vsub.f32 1.0, %v637
      %v639 = vmul.f32 %v636, %v638
      %v640 = vadd.f32 %v636, %v639
      %vm641 = vweird.f32 %v596
      %vm642 = vweird.f32 %v636
      %vm643 = vmor %vm641, %vm642
      %v644 = vsel %vm643, %v636, %v640
      %v645 = vand.u32 2147483647, %v596
      %vm646 = vcmp.eq.f32.partialorder %v645, 8.507059e+37
      %v647 = vand.u32 %v596, 2147483648
      %v648 = vor.u32 1.1754944e-38, %v647
      %v649 = vsel %vm646, %v648, %v644
      %v650 = vmul.f32 1.0, %v649
      %v651 = vrcp.pop %v597
      %v652 = vmul.f32 %v597, %v651
      %v653 = vsub.f32 1.0, %v652
      %v654 = vmul.f32 %v651, %v653
      %v655 = vadd.f32 %v651, %v654
      %vm656 = vweird.f32 %v597
      %vm657 = vweird.f32 %v651
      %vm658 = vmor %vm656, %vm657
      %v659 = vsel %vm658, %v651, %v655
      %v660 = vand.u32 2147483647, %v597
      %vm661 = vcmp.eq.f32.partialorder %v660, 8.507059e+37
      %v662 = vand.u32 %v597, 2147483648
      %v663 = vor.u32 1.1754944e-38, %v662
      %v664 = vsel %vm661, %v663, %v659
      %v665 = vmul.f32 1.0, %v664
      %v666 = vrcp.pop %v598
      %v667 = vmul.f32 %v598, %v666
      %v668 = vsub.f32 1.0, %v667
      %v669 = vmul.f32 %v666, %v668
      %v670 = vadd.f32 %v666, %v669
      %vm671 = vweird.f32 %v598
      %vm672 = vweird.f32 %v666
      %vm673 = vmor %vm671, %vm672
      %v674 = vsel %vm673, %v666, %v670
      %v675 = vand.u32 2147483647, %v598
      %vm676 = vcmp.eq.f32.partialorder %v675, 8.507059e+37
      %v677 = vand.u32 %v598, 2147483648
      %v678 = vor.u32 1.1754944e-38, %v677
      %v679 = vsel %vm676, %v678, %v674
      %v680 = vmul.f32 1.0, %v679
      %v681 = vrcp.pop %v599
      %v682 = vmul.f32 %v599, %v681
      %v683 = vsub.f32 1.0, %v682
      %v684 = vmul.f32 %v681, %v683
      %v685 = vadd.f32 %v681, %v684
      %vm686 = vweird.f32 %v599
      %vm687 = vweird.f32 %v681
      %vm688 = vmor %vm686, %vm687
      %v689 = vsel %vm688, %v681, %v685
      %v690 = vand.u32 2147483647, %v599
      %vm691 = vcmp.eq.f32.partialorder %v690, 8.507059e+37
      %v692 = vand.u32 %v599, 2147483648
      %v693 = vor.u32 1.1754944e-38, %v692
      %v694 = vsel %vm691, %v693, %v689
      %v695 = vmul.f32 1.0, %v694
      %v696 = vrcp.pop %v600
      %v697 = vmul.f32 %v600, %v696
      %v698 = vsub.f32 1.0, %v697
      %v699 = vmul.f32 %v696, %v698
      %v700 = vadd.f32 %v696, %v699
      %vm701 = vweird.f32 %v600
      %vm702 = vweird.f32 %v696
      %vm703 = vmor %vm701, %vm702
      %v704 = vsel %vm703, %v696, %v700
      %v705 = vand.u32 2147483647, %v600
      %vm706 = vcmp.eq.f32.partialorder %v705, 8.507059e+37
      %v707 = vand.u32 %v600, 2147483648
      %v708 = vor.u32 1.1754944e-38, %v707
      %v709 = vsel %vm706, %v708, %v704
      %v710 = vmul.f32 1.0, %v709
      %v711 = vrcp.pop %v601
      %v712 = vmul.f32 %v601, %v711
      %v713 = vsub.f32 1.0, %v712
      %v714 = vmul.f32 %v711, %v713
      %v715 = vadd.f32 %v711, %v714
      %vm716 = vweird.f32 %v601
      %vm717 = vweird.f32 %v711
      %vm718 = vmor %vm716, %vm717
      %v719 = vsel %vm718, %v711, %v715
      %v720 = vand.u32 2147483647, %v601
      %vm721 = vcmp.eq.f32.partialorder %v720, 8.507059e+37
      %v722 = vand.u32 %v601, 2147483648
      %v723 = vor.u32 1.1754944e-38, %v722
      %v724 = vsel %vm721, %v723, %v719
      %v725 = vmul.f32 1.0, %v724
      %v726 = vrcp.pop %v602
      %v727 = vmul.f32 %v602, %v726
      %v728 = vsub.f32 1.0, %v727
      %v729 = vmul.f32 %v726, %v728
      %v730 = vadd.f32 %v726, %v729
      %vm731 = vweird.f32 %v602
      %vm732 = vweird.f32 %v726
      %vm733 = vmor %vm731, %vm732
      %v734 = vsel %vm733, %v726, %v730
      %v735 = vand.u32 2147483647, %v602
      %vm736 = vcmp.eq.f32.partialorder %v735, 8.507059e+37
      %v737 = vand.u32 %v602, 2147483648
      %v738 = vor.u32 1.1754944e-38, %v737
      %v739 = vsel %vm736, %v738, %v734
      %v740 = vmul.f32 1.0, %v739
      %v741 = vrcp.pop %v603
      %v742 = vmul.f32 %v603, %v741
      %v743 = vsub.f32 1.0, %v742
      %v744 = vmul.f32 %v741, %v743
      %v745 = vadd.f32 %v741, %v744
      %vm746 = vweird.f32 %v603
      %vm747 = vweird.f32 %v741
      %vm748 = vmor %vm746, %vm747
      %v749 = vsel %vm748, %v741, %v745
      %v750 = vand.u32 2147483647, %v603
      %vm751 = vcmp.eq.f32.partialorder %v750, 8.507059e+37
      %v752 = vand.u32 %v603, 2147483648
      %v753 = vor.u32 1.1754944e-38, %v752
      %v754 = vsel %vm751, %v753, %v749
      %v755 = vmul.f32 1.0, %v754
      %v756 = vrcp.pop %v604
      %v757 = vmul.f32 %v604, %v756
      %v758 = vsub.f32 1.0, %v757
      %v759 = vmul.f32 %v756, %v758
      %v760 = vadd.f32 %v756, %v759
      %vm761 = vweird.f32 %v604
      %vm762 = vweird.f32 %v756
      %vm763 = vmor %vm761, %vm762
      %v764 = vsel %vm763, %v756, %v760
      %v765 = vand.u32 2147483647, %v604
      %vm766 = vcmp.eq.f32.partialorder %v765, 8.507059e+37
      %v767 = vand.u32 %v604, 2147483648
      %v768 = vor.u32 1.1754944e-38, %v767
      %v769 = vsel %vm766, %v768, %v764
      %v770 = vmul.f32 1.0, %v769
      %v771 = vrcp.pop %v605
      %v772 = vmul.f32 %v605, %v771
      %v773 = vsub.f32 1.0, %v772
      %v774 = vmul.f32 %v771, %v773
      %v775 = vadd.f32 %v771, %v774
      %vm776 = vweird.f32 %v605
      %vm777 = vweird.f32 %v771
      %vm778 = vmor %vm776, %vm777
      %v779 = vsel %vm778, %v771, %v775
      %v780 = vand.u32 2147483647, %v605
      %vm781 = vcmp.eq.f32.partialorder %v780, 8.507059e+37
      %v782 = vand.u32 %v605, 2147483648
      %v783 = vor.u32 1.1754944e-38, %v782
      %v784 = vsel %vm781, %v783, %v779
      %v785 = vmul.f32 1.0, %v784
      %786 = vst [vmem:[%s208] sm:$0xff] %v620
      %787 = vst [vmem:[%s208 + $0x8] sm:$0xff] %v635
      %788 = vst [vmem:[%s208 + $0x10] sm:$0xff] %v650
      %789 = vst [vmem:[%s208 + $0x18] sm:$0xff] %v665
      %790 = vst [vmem:[%s208 + $0x20] sm:$0xff] %v680
      %791 = vst [vmem:[%s208 + $0x28] sm:$0xff] %v695
      %792 = vst [vmem:[%s208 + $0x30] sm:$0xff] %v710
      %793 = vst [vmem:[%s208 + $0x38] sm:$0xff] %v725
      %794 = vst [vmem:[%s208 + $0x40] sm:$0xff] %v740
      %795 = vst [vmem:[%s208 + $0x48] sm:$0x7] %v755
      %796 = vst [vmem:[%s208 + $0x50] sm:$0x7] %v770
      %797 = vst [vmem:[%s208 + $0x58] sm:$0x7] %v785
      %s798 = smul.u32 3, %s19
      %p799 = scmp.lt.s32.totalorder %s18, 1
      %s800 = scalar_select %p799, %s18, 1
      %p801 = scmp.lt.s32.totalorder %s798, 2
      %s802 = scalar_select %p801, %s798, 2
      %s803 = smul.addr %s800, 12
      %s804 = sadd.s32 %s802, %s803
      %s805 = smul.addr %s804, 8
      %s806 = scalar_lea.vmem %s3, %s805
      // Predicated region
      $region33: #{landsat_cvae_forward.11} parent=31 // pred_check
        %p807 = pneg %p116
      $region34: #{landsat_cvae_forward.11} parent=31 // pred_check_branch
        %809 = sbr.rel (%p807) target = $region36
      $region35: #{landsat_cvae_forward.11} parent=31 // pred_region
        %s810 = smul.u32 3, %s19
      $region36: #{landsat_cvae_forward.11} parent=31 // pred_fallthru
        _
    $region32: #{landsat_cvae_forward.11} parent=5 // pred_fallthru
      _
    %p811 = scmp.le.s32.totalorder 2, %s9
    // Predicated region
    $region37: #{landsat_cvae_forward.11} parent=5 // pred_check
      %p812 = pneg %p811
    $region38: #{landsat_cvae_forward.11} parent=5 // pred_check_branch
      %814 = sbr.rel (%p812) target = $region40
    $region39: #{landsat_cvae_forward.11} parent=5 // pred_region
      %s815 = ssub.s32 %s9, 2
      // Predicated region
      $region41: #{landsat_cvae_forward.11} parent=39 // pred_check
        %p816 = pneg %p122
      $region42: #{landsat_cvae_forward.11} parent=39 // pred_check_branch
        %818 = sbr.rel (%p816) target = $region44
      $region43: #{landsat_cvae_forward.11} parent=39 // pred_region
        %s819 = smul.u32 3, %s21
        %p820 = scmp.lt.s32.totalorder %s20, 1
        %s821 = scalar_select %p820, %s20, 1
        %p822 = scmp.lt.s32.totalorder %s819, 2
        %s823 = scalar_select %p822, %s819, 2
        %s824 = smul.addr %s821, 12
        %s825 = sadd.s32 %s823, %s824
        %s826 = smul.addr %s825, 8
        %s827 = scalar_lea.vmem %s3, %s826
      $region44: #{landsat_cvae_forward.11} parent=39 // pred_fallthru
        _
    $region40: #{landsat_cvae_forward.11} parent=5 // pred_fallthru
      _
  $region6: #{landsat_cvae_forward.11} parent=0 // loop_footer
    %s13 = sadd.s32 1, %s9
  $region7: #{landsat_cvae_forward.11} parent=0 // loop_footer_branch
    %8 = sbr.rel target = $region3
  $region8: #{landsat_cvae_forward.11} parent=0 // loop_exit
    _

</llo_original>
